<compile_context>
chip_gen: v7x
topology: tpu7x:2x2x1
jax: 0.10.0
libtpu: 0.0.40
codegen_flags: <defaults>
</compile_context>

<pallas_src>
import jax
import jax.numpy as jnp
from jax.experimental import pallas as pl
from jax.experimental.pallas import tpu as pltpu


# -------------------- config (small, consistent with the module) ------------
B = 2            # batch_size
T = 8            # max_len
EMBED_DIM = 28
MASK_DIM = 4
D_IN = EMBED_DIM + MASK_DIM      # 32  (embed_dim + mask_dim)
H = 32                           # l_hidden_size
VOCAB = 50
C1 = 1.0
C2 = 1.0


# -------------------------------- kernel ------------------------------------
def srnn_kernel(lens_ref,                 # (B, 1) int32
                labels_oh_ref,            # (B, 3) f32 one-hot labels
                x_ref,                    # (T*B, D_IN) time-major flat
                w_lstm_ref,               # (D_IN + H, 4H)  [W_ih ; W_hh]
                b_lstm_ref,               # (1, 4H)
                w_tri_ref,                # (H, 2)
                w_lab_ref,                # (H, 3)
                small_ref,                # (8, 4): trans, trans^T, b_tri, b_lab
                out_ref,                  # (1, 2): [cls_loss, norm_pen]
                ctx_scr):                 # VMEM (T*B, H)
    lens_v = lens_ref[...]                # (B,1) int32, each >= 2

    # ----- hoisted input projection: one MXU call for all T steps -----------
    pre = (jnp.dot(x_ref[...], w_lstm_ref[0:D_IN, :],
                   preferred_element_type=jnp.float32)
           + b_lstm_ref[...])             # (T*B, 4H)
    w_hh = w_lstm_ref[D_IN:D_IN + H, :]   # (H, 4H), loop-invariant load

    # ----- LSTM recurrence, batch folded into the carry (B, H) --------------
    h = jnp.zeros((B, H), jnp.float32)
    c = jnp.zeros((B, H), jnp.float32)
    for t in range(T):                    # fully unrolled, static slices
        gates = pre[t * B:(t + 1) * B, :] + jnp.dot(
            h, w_hh, preferred_element_type=jnp.float32)       # (B, 4H)
        i_g = jax.nn.sigmoid(gates[:, 0 * H:1 * H])
        f_g = jax.nn.sigmoid(gates[:, 1 * H:2 * H])
        g_g = jnp.tanh(gates[:, 2 * H:3 * H])
        o_g = jax.nn.sigmoid(gates[:, 3 * H:4 * H])
        c = f_g * c + i_g * g_g
        h = o_g * jnp.tanh(c)
        ctx_scr[t * B:(t + 1) * B, :] = h

    # ----- feat2tri: unary CRF emission scores (one MXU call) ---------------
    tri = (jnp.dot(ctx_scr[...], w_tri_ref[...],
                   preferred_element_type=jnp.float32)
           + small_ref[4:5, 0:2])         # (T*B, 2)

    trans_r0 = small_ref[0:1, 0:2]        # trans[0, :]
    trans_r1 = small_ref[1:2, 0:2]        # trans[1, :]
    trans_t_r0 = small_ref[2:3, 0:2]      # trans[:, 0]
    trans_t_r1 = small_ref[3:4, 0:2]      # trans[:, 1]

    # ----- CRF forward (alpha) recursion, state kept in carries -------------
    alphas = []
    alpha = tri[0:B, :]                   # (B,2)
    alphas.append(alpha)
    zc = jnp.logaddexp(alpha[:, 0:1], alpha[:, 1:2])            # (B,1)
    log_z = jnp.where(lens_v == 1, zc, jnp.zeros((B, 1), jnp.float32))
    for t in range(1, T):
        cand0 = alpha[:, 0:1] + trans_r0  # (B,2)
        cand1 = alpha[:, 1:2] + trans_r1  # (B,2)
        alpha = jnp.logaddexp(cand0, cand1) + tri[t * B:(t + 1) * B, :]
        alphas.append(alpha)
        zc = jnp.logaddexp(alpha[:, 0:1], alpha[:, 1:2])
        log_z = jnp.where(lens_v == (t + 1), zc, log_z)

    # ----- CRF backward (beta) recursion, state kept in carries -------------
    betas = [None] * T
    beta = jnp.zeros((B, 2), jnp.float32)
    betas[T - 1] = beta
    for t in range(T - 2, -1, -1):
        nxt = tri[(t + 1) * B:(t + 2) * B, :] + beta            # (B,2)
        val = jnp.logaddexp(nxt[:, 0:1] + trans_t_r0,
                            nxt[:, 1:2] + trans_t_r1)           # (B,2)
        beta = jnp.where(t >= lens_v - 1,
                         jnp.zeros((B, 2), jnp.float32), val)
        betas[t] = beta

    # ----- marginals, masked polarity-weighted pooling -----------------------
    sent_v = jnp.zeros((B, H), jnp.float32)
    snorm = jnp.zeros((B, 1), jnp.float32)
    for t in range(T):
        m_t = jnp.exp(alphas[t] + betas[t] - log_z)             # (B,2)
        sp_t = jnp.where(lens_v > t, m_t[:, 1:2], 0.0)          # (B,1)
        sent_v = sent_v + sp_t * ctx_scr[t * B:(t + 1) * B, :]
        snorm = snorm + jnp.abs(sp_t)

    # ----- feat2label + log_softmax + NLL (all in-kernel) --------------------
    scores = (jnp.dot(sent_v, w_lab_ref[...],
                      preferred_element_type=jnp.float32)
              + small_ref[5:6, 0:3])                            # (B,3)
    m = jnp.max(scores, axis=1, keepdims=True)
    lse = m + jnp.log(jnp.sum(jnp.exp(scores - m), axis=1, keepdims=True))
    log_probs = scores - lse                                    # (B,3)
    picked = jnp.sum(labels_oh_ref[...] * log_probs,
                     axis=1, keepdims=True)                     # (B,1)
    cls_loss = -jnp.sum(picked, axis=0, keepdims=True) / B      # (1,1)

    # ----- transition penalty + polarity-L1 penalty --------------------------
    t00 = small_ref[0:1, 0:1]
    t01 = small_ref[0:1, 1:2]
    t10 = small_ref[1:2, 0:1]
    t11 = small_ref[1:2, 1:2]
    pena = jnp.maximum(t10 - t00, 0.0) + jnp.maximum(t01 - t11, 0.0)  # (1,1)
    s_prob_norm = jnp.sum(snorm, axis=0, keepdims=True) / B           # (1,1)
    norm_pen = C1 * pena / B + C2 * s_prob_norm                       # (1,1)

    out_ref[0:1, 0:1] = cls_loss
    out_ref[0:1, 1:2] = norm_pen


# ------------------------------ wrapper -------------------------------------
def _full_spec(shape):
    return pl.BlockSpec(shape, lambda i: (0,) * len(shape))


def pack_params(params):
    """Pack the per-layer params into the kernel's DMA-friendly layout."""
    (w_ih, w_hh, b_lstm, w_tri, b_tri, trans, w_lab, b_lab) = params
    w_lstm = jnp.concatenate([w_ih, w_hh], axis=0)        # (D_IN + H, 4H)
    small = jnp.zeros((8, 4), jnp.float32)
    small = small.at[0:2, 0:2].set(trans)                 # rows 0-1: trans
    small = small.at[2:4, 0:2].set(trans.T)               # rows 2-3: trans^T
    small = small.at[4, 0:2].set(b_tri[0])                # row 4: b_tri
    small = small.at[5, 0:3].set(b_lab[0])                # row 5: b_lab
    return (w_lstm, b_lstm, w_tri, w_lab, small)


@jax.jit
def srnn_forward(sent_ids, masks, labels, lens, word_emb, mask_emb, packed):
    """Full SRNNAspectSent.forward -> (cls_loss, norm_pen)."""
    w_lstm, b_lstm, w_tri, w_lab, small = packed

    # SimpleCat: embedding lookup + mask-embedding concat (gather stays in XLA)
    sents = jnp.concatenate(
        [word_emb[sent_ids], mask_emb[masks]], axis=-1).astype(jnp.float32)
    # time-major flat layout -> one hoisted projection, static (B,.) slices
    x_flat = jnp.transpose(sents, (1, 0, 2)).reshape(T * B, D_IN)
    lens_i = lens.reshape(B, 1).astype(jnp.int32)
    labels_oh = jax.nn.one_hot(labels, 3, dtype=jnp.float32)     # (B,3)

    out = pl.pallas_call(
        srnn_kernel,
        out_shape=jax.ShapeDtypeStruct((1, 2), jnp.float32),
        grid=(1,),
        in_specs=[
            _full_spec((B, 1)),              # lens
            _full_spec((B, 3)),              # one-hot labels
            _full_spec((T * B, D_IN)),       # x_flat
            _full_spec((D_IN + H, 4 * H)),   # [W_ih ; W_hh]
            _full_spec((1, 4 * H)),          # b_lstm
            _full_spec((H, 2)),              # w_tri
            _full_spec((H, 3)),              # w_lab
            _full_spec((8, 4)),              # trans / trans^T / b_tri / b_lab
        ],
        out_specs=_full_spec((1, 2)),
        scratch_shapes=[
            pltpu.VMEM((T * B, H), jnp.float32),   # LSTM context
        ],
        compiler_params=pltpu.CompilerParams(
            dimension_semantics=("arbitrary",)),
    )(lens_i, labels_oh, x_flat, w_lstm, b_lstm, w_tri, w_lab, small)

    return out[0, 0], out[0, 1]


# ------------------------------ params --------------------------------------
def init_params(key):
    ks = jax.random.split(key, 10)
    ortho = jax.nn.initializers.orthogonal()
    # SLSTM (approximated with LSTM), init_ortho on 2-D weights
    w_ih = ortho(ks[0], (D_IN, 4 * H), jnp.float32)
    w_hh = ortho(ks[1], (H, 4 * H), jnp.float32)
    b_lstm = jnp.zeros((1, 4 * H), jnp.float32)
    # feat2tri Linear(H, 2)
    w_tri = jax.random.normal(ks[2], (H, 2), jnp.float32) * 0.1
    b_tri = jax.random.normal(ks[3], (1, 2), jnp.float32) * 0.1
    # LinearCRF transitions (2,2)
    trans = jax.random.normal(ks[4], (2, 2), jnp.float32) * 0.1
    # feat2label Linear(H, 3)
    w_lab = jax.random.normal(ks[5], (H, 3), jnp.float32) * 0.1
    b_lab = jax.random.normal(ks[6], (1, 3), jnp.float32) * 0.1
    # SimpleCat embeddings (load_vector -> synthetic; reset_binary -> 0/1 rows)
    word_emb = jax.random.normal(ks[7], (VOCAB, EMBED_DIM), jnp.float32) * 0.1
    mask_emb = jnp.stack([jnp.zeros((MASK_DIM,), jnp.float32),
                          jnp.ones((MASK_DIM,), jnp.float32)], axis=0)
    params = (w_ih, w_hh, b_lstm, w_tri, b_tri, trans, w_lab, b_lab)
    return params, word_emb, mask_emb


# ------------------------------ main -----------------------------------------
if __name__ == "__main__":
    key = jax.random.PRNGKey(0)
    k_p, k_s, k_m, k_l = jax.random.split(key, 4)

    params, word_emb, mask_emb = init_params(k_p)
    packed = pack_params(params)

    sent_ids = jax.random.randint(k_s, (B, T), 0, VOCAB, dtype=jnp.int32)
    masks = jax.random.randint(k_m, (B, T), 0, 2, dtype=jnp.int32)
    labels = jax.random.randint(k_l, (B,), 0, 3, dtype=jnp.int32)
    lens = jnp.array([T, 5], dtype=jnp.int32)   # all >= 2

    cls_loss, norm_pen = srnn_forward(
        sent_ids, masks, labels, lens, word_emb, mask_emb, packed)
    jax.block_until_ready((cls_loss, norm_pen))
    print("KERNEL_OK")
</pallas_src>

<mosaic_0001>
module attributes {stable_mosaic.version = 11 : i64} {
  func.func @srnn_kernel(%arg0: i32, %arg1: memref<2x1xi32, #tpu.memory_space<vmem>>, %arg2: memref<2x3xf32, #tpu.memory_space<vmem>>, %arg3: memref<16x32xf32, #tpu.memory_space<vmem>>, %arg4: memref<64x128xf32, #tpu.memory_space<vmem>>, %arg5: memref<1x128xf32, #tpu.memory_space<vmem>>, %arg6: memref<32x2xf32, #tpu.memory_space<vmem>>, %arg7: memref<32x3xf32, #tpu.memory_space<vmem>>, %arg8: memref<8x4xf32, #tpu.memory_space<vmem>>, %arg9: memref<1x2xf32, #tpu.memory_space<vmem>>, %arg10: memref<16x32xf32, #tpu.memory_space<vmem>>) attributes {dimension_semantics = [#tpu.dimension_semantics<arbitrary>], iteration_bounds = array<i64: 1>, scalar_prefetch = 0 : i64, scratch_operands = 1 : i64, tpu.core_type = #tpu.core_type<tc>, window_params = [{pipeline_mode = #tpu.pipeline_mode<synchronous>, transform_indices = @transform_0, window_bounds = array<i64: 2, 1>}, {pipeline_mode = #tpu.pipeline_mode<synchronous>, transform_indices = @transform_1, window_bounds = array<i64: 2, 3>}, {pipeline_mode = #tpu.pipeline_mode<synchronous>, transform_indices = @transform_2, window_bounds = array<i64: 16, 32>}, {pipeline_mode = #tpu.pipeline_mode<synchronous>, transform_indices = @transform_3, window_bounds = array<i64: 64, 128>}, {pipeline_mode = #tpu.pipeline_mode<synchronous>, transform_indices = @transform_4, window_bounds = array<i64: 1, 128>}, {pipeline_mode = #tpu.pipeline_mode<synchronous>, transform_indices = @transform_5, window_bounds = array<i64: 32, 2>}, {pipeline_mode = #tpu.pipeline_mode<synchronous>, transform_indices = @transform_6, window_bounds = array<i64: 32, 3>}, {pipeline_mode = #tpu.pipeline_mode<synchronous>, transform_indices = @transform_7, window_bounds = array<i64: 8, 4>}, {pipeline_mode = #tpu.pipeline_mode<synchronous>, transform_indices = @transform_8, window_bounds = array<i64: 1, 2>}]} {
    %c0 = arith.constant 0 : index
    %c0_0 = arith.constant 0 : index
    %0 = vector.load %arg1[%c0, %c0_0] : memref<2x1xi32, #tpu.memory_space<vmem>>, vector<2x1xi32>
    %c0_1 = arith.constant 0 : index
    %c0_2 = arith.constant 0 : index
    %1 = vector.load %arg3[%c0_1, %c0_2] : memref<16x32xf32, #tpu.memory_space<vmem>>, vector<16x32xf32>
    %c0_3 = arith.constant 0 : index
    %c0_4 = arith.constant 0 : index
    %2 = vector.load %arg4[%c0_3, %c0_4] : memref<64x128xf32, #tpu.memory_space<vmem>>, vector<32x128xf32>
    %cst = arith.constant dense<0.000000e+00> : vector<16x128xf32>
    %3 = tpu.matmul %1, %2, %cst {dimension_numbers = #tpu.dot_dimension_numbers<[1], [0], [0], [1], [0, 0, 1, 1], [], []>} : vector<16x32xf32>, vector<32x128xf32>, vector<16x128xf32> -> vector<16x128xf32>
    %c0_5 = arith.constant 0 : index
    %c0_6 = arith.constant 0 : index
    %4 = vector.load %arg5[%c0_5, %c0_6] : memref<1x128xf32, #tpu.memory_space<vmem>>, vector<1x128xf32>
    %5 = vector.broadcast %4 : vector<1x128xf32> to vector<16x128xf32>
    %6 = arith.addf %3, %5 : vector<16x128xf32>
    %c32 = arith.constant 32 : index
    %c0_7 = arith.constant 0 : index
    %7 = vector.load %arg4[%c32, %c0_7] : memref<64x128xf32, #tpu.memory_space<vmem>>, vector<32x128xf32>
    %cst_8 = arith.constant 0.000000e+00 : f32
    %8 = vector.broadcast %cst_8 : f32 to vector<2x32xf32>
    %cst_9 = arith.constant 0.000000e+00 : f32
    %9 = vector.broadcast %cst_9 : f32 to vector<2x32xf32>
    %10 = vector.extract_strided_slice %6 {offsets = [0, 0], sizes = [2, 128], strides = [1, 1]} : vector<16x128xf32> to vector<2x128xf32>
    %cst_10 = arith.constant dense<0.000000e+00> : vector<2x128xf32>
    %11 = tpu.matmul %8, %7, %cst_10 {dimension_numbers = #tpu.dot_dimension_numbers<[1], [0], [0], [1], [0, 0, 1, 1], [], []>} : vector<2x32xf32>, vector<32x128xf32>, vector<2x128xf32> -> vector<2x128xf32>
    %12 = arith.addf %10, %11 : vector<2x128xf32>
    %13 = vector.extract_strided_slice %12 {offsets = [0, 0], sizes = [2, 32], strides = [1, 1]} : vector<2x128xf32> to vector<2x32xf32>
    %14 = arith.negf %13 : vector<2x32xf32>
    %15 = math.exp %14 : vector<2x32xf32>
    %cst_11 = arith.constant 1.000000e+00 : f32
    %16 = vector.broadcast %cst_11 : f32 to vector<2x32xf32>
    %17 = arith.addf %16, %15 : vector<2x32xf32>
    %18 = arith.divf %16, %17 : vector<2x32xf32>
    %19 = vector.extract_strided_slice %12 {offsets = [0, 32], sizes = [2, 32], strides = [1, 1]} : vector<2x128xf32> to vector<2x32xf32>
    %20 = arith.negf %19 : vector<2x32xf32>
    %21 = math.exp %20 : vector<2x32xf32>
    %cst_12 = arith.constant 1.000000e+00 : f32
    %22 = vector.broadcast %cst_12 : f32 to vector<2x32xf32>
    %23 = arith.addf %22, %21 : vector<2x32xf32>
    %24 = arith.divf %22, %23 : vector<2x32xf32>
    %25 = vector.extract_strided_slice %12 {offsets = [0, 64], sizes = [2, 32], strides = [1, 1]} : vector<2x128xf32> to vector<2x32xf32>
    %26 = math.tanh %25 : vector<2x32xf32>
    %27 = vector.extract_strided_slice %12 {offsets = [0, 96], sizes = [2, 32], strides = [1, 1]} : vector<2x128xf32> to vector<2x32xf32>
    %28 = arith.negf %27 : vector<2x32xf32>
    %29 = math.exp %28 : vector<2x32xf32>
    %cst_13 = arith.constant 1.000000e+00 : f32
    %30 = vector.broadcast %cst_13 : f32 to vector<2x32xf32>
    %31 = arith.addf %30, %29 : vector<2x32xf32>
    %32 = arith.divf %30, %31 : vector<2x32xf32>
    %33 = arith.mulf %24, %9 : vector<2x32xf32>
    %34 = arith.mulf %18, %26 : vector<2x32xf32>
    %35 = arith.addf %33, %34 : vector<2x32xf32>
    %36 = math.tanh %35 : vector<2x32xf32>
    %37 = arith.mulf %32, %36 : vector<2x32xf32>
    %c0_14 = arith.constant 0 : index
    %c0_15 = arith.constant 0 : index
    %38 = vector.load %arg10[%c0_14, %c0_15] : memref<16x32xf32, #tpu.memory_space<vmem>>, vector<2x32xf32>
    tpu.vector_store %arg10[%c0_14, %c0_15], %37 {strides = array<i32>} : memref<16x32xf32, #tpu.memory_space<vmem>>, vector<2x32xf32>,
    %39 = vector.extract_strided_slice %6 {offsets = [2, 0], sizes = [2, 128], strides = [1, 1]} : vector<16x128xf32> to vector<2x128xf32>
    %cst_16 = arith.constant dense<0.000000e+00> : vector<2x128xf32>
    %40 = tpu.matmul %37, %7, %cst_16 {dimension_numbers = #tpu.dot_dimension_numbers<[1], [0], [0], [1], [0, 0, 1, 1], [], []>} : vector<2x32xf32>, vector<32x128xf32>, vector<2x128xf32> -> vector<2x128xf32>
    %41 = arith.addf %39, %40 : vector<2x128xf32>
    %42 = vector.extract_strided_slice %41 {offsets = [0, 0], sizes = [2, 32], strides = [1, 1]} : vector<2x128xf32> to vector<2x32xf32>
    %43 = arith.negf %42 : vector<2x32xf32>
    %44 = math.exp %43 : vector<2x32xf32>
    %cst_17 = arith.constant 1.000000e+00 : f32
    %45 = vector.broadcast %cst_17 : f32 to vector<2x32xf32>
    %46 = arith.addf %45, %44 : vector<2x32xf32>
    %47 = arith.divf %45, %46 : vector<2x32xf32>
    %48 = vector.extract_strided_slice %41 {offsets = [0, 32], sizes = [2, 32], strides = [1, 1]} : vector<2x128xf32> to vector<2x32xf32>
    %49 = arith.negf %48 : vector<2x32xf32>
    %50 = math.exp %49 : vector<2x32xf32>
    %cst_18 = arith.constant 1.000000e+00 : f32
    %51 = vector.broadcast %cst_18 : f32 to vector<2x32xf32>
    %52 = arith.addf %51, %50 : vector<2x32xf32>
    %53 = arith.divf %51, %52 : vector<2x32xf32>
    %54 = vector.extract_strided_slice %41 {offsets = [0, 64], sizes = [2, 32], strides = [1, 1]} : vector<2x128xf32> to vector<2x32xf32>
    %55 = math.tanh %54 : vector<2x32xf32>
    %56 = vector.extract_strided_slice %41 {offsets = [0, 96], sizes = [2, 32], strides = [1, 1]} : vector<2x128xf32> to vector<2x32xf32>
    %57 = arith.negf %56 : vector<2x32xf32>
    %58 = math.exp %57 : vector<2x32xf32>
    %cst_19 = arith.constant 1.000000e+00 : f32
    %59 = vector.broadcast %cst_19 : f32 to vector<2x32xf32>
    %60 = arith.addf %59, %58 : vector<2x32xf32>
    %61 = arith.divf %59, %60 : vector<2x32xf32>
    %62 = arith.mulf %53, %35 : vector<2x32xf32>
    %63 = arith.mulf %47, %55 : vector<2x32xf32>
    %64 = arith.addf %62, %63 : vector<2x32xf32>
    %65 = math.tanh %64 : vector<2x32xf32>
    %66 = arith.mulf %61, %65 : vector<2x32xf32>
    %c2 = arith.constant 2 : index
    %c0_20 = arith.constant 0 : index
    %67 = vector.load %arg10[%c2, %c0_20] : memref<16x32xf32, #tpu.memory_space<vmem>>, vector<2x32xf32>
    tpu.vector_store %arg10[%c2, %c0_20], %66 {strides = array<i32>} : memref<16x32xf32, #tpu.memory_space<vmem>>, vector<2x32xf32>,
    %68 = vector.extract_strided_slice %6 {offsets = [4, 0], sizes = [2, 128], strides = [1, 1]} : vector<16x128xf32> to vector<2x128xf32>
    %cst_21 = arith.constant dense<0.000000e+00> : vector<2x128xf32>
    %69 = tpu.matmul %66, %7, %cst_21 {dimension_numbers = #tpu.dot_dimension_numbers<[1], [0], [0], [1], [0, 0, 1, 1], [], []>} : vector<2x32xf32>, vector<32x128xf32>, vector<2x128xf32> -> vector<2x128xf32>
    %70 = arith.addf %68, %69 : vector<2x128xf32>
    %71 = vector.extract_strided_slice %70 {offsets = [0, 0], sizes = [2, 32], strides = [1, 1]} : vector<2x128xf32> to vector<2x32xf32>
    %72 = arith.negf %71 : vector<2x32xf32>
    %73 = math.exp %72 : vector<2x32xf32>
    %cst_22 = arith.constant 1.000000e+00 : f32
    %74 = vector.broadcast %cst_22 : f32 to vector<2x32xf32>
    %75 = arith.addf %74, %73 : vector<2x32xf32>
    %76 = arith.divf %74, %75 : vector<2x32xf32>
    %77 = vector.extract_strided_slice %70 {offsets = [0, 32], sizes = [2, 32], strides = [1, 1]} : vector<2x128xf32> to vector<2x32xf32>
    %78 = arith.negf %77 : vector<2x32xf32>
    %79 = math.exp %78 : vector<2x32xf32>
    %cst_23 = arith.constant 1.000000e+00 : f32
    %80 = vector.broadcast %cst_23 : f32 to vector<2x32xf32>
    %81 = arith.addf %80, %79 : vector<2x32xf32>
    %82 = arith.divf %80, %81 : vector<2x32xf32>
    %83 = vector.extract_strided_slice %70 {offsets = [0, 64], sizes = [2, 32], strides = [1, 1]} : vector<2x128xf32> to vector<2x32xf32>
    %84 = math.tanh %83 : vector<2x32xf32>
    %85 = vector.extract_strided_slice %70 {offsets = [0, 96], sizes = [2, 32], strides = [1, 1]} : vector<2x128xf32> to vector<2x32xf32>
    %86 = arith.negf %85 : vector<2x32xf32>
    %87 = math.exp %86 : vector<2x32xf32>
    %cst_24 = arith.constant 1.000000e+00 : f32
    %88 = vector.broadcast %cst_24 : f32 to vector<2x32xf32>
    %89 = arith.addf %88, %87 : vector<2x32xf32>
    %90 = arith.divf %88, %89 : vector<2x32xf32>
    %91 = arith.mulf %82, %64 : vector<2x32xf32>
    %92 = arith.mulf %76, %84 : vector<2x32xf32>
    %93 = arith.addf %91, %92 : vector<2x32xf32>
    %94 = math.tanh %93 : vector<2x32xf32>
    %95 = arith.mulf %90, %94 : vector<2x32xf32>
    %c4 = arith.constant 4 : index
    %c0_25 = arith.constant 0 : index
    %96 = vector.load %arg10[%c4, %c0_25] : memref<16x32xf32, #tpu.memory_space<vmem>>, vector<2x32xf32>
    tpu.vector_store %arg10[%c4, %c0_25], %95 {strides = array<i32>} : memref<16x32xf32, #tpu.memory_space<vmem>>, vector<2x32xf32>,
    %97 = vector.extract_strided_slice %6 {offsets = [6, 0], sizes = [2, 128], strides = [1, 1]} : vector<16x128xf32> to vector<2x128xf32>
    %cst_26 = arith.constant dense<0.000000e+00> : vector<2x128xf32>
    %98 = tpu.matmul %95, %7, %cst_26 {dimension_numbers = #tpu.dot_dimension_numbers<[1], [0], [0], [1], [0, 0, 1, 1], [], []>} : vector<2x32xf32>, vector<32x128xf32>, vector<2x128xf32> -> vector<2x128xf32>
    %99 = arith.addf %97, %98 : vector<2x128xf32>
    %100 = vector.extract_strided_slice %99 {offsets = [0, 0], sizes = [2, 32], strides = [1, 1]} : vector<2x128xf32> to vector<2x32xf32>
    %101 = arith.negf %100 : vector<2x32xf32>
    %102 = math.exp %101 : vector<2x32xf32>
    %cst_27 = arith.constant 1.000000e+00 : f32
    %103 = vector.broadcast %cst_27 : f32 to vector<2x32xf32>
    %104 = arith.addf %103, %102 : vector<2x32xf32>
    %105 = arith.divf %103, %104 : vector<2x32xf32>
    %106 = vector.extract_strided_slice %99 {offsets = [0, 32], sizes = [2, 32], strides = [1, 1]} : vector<2x128xf32> to vector<2x32xf32>
    %107 = arith.negf %106 : vector<2x32xf32>
    %108 = math.exp %107 : vector<2x32xf32>
    %cst_28 = arith.constant 1.000000e+00 : f32
    %109 = vector.broadcast %cst_28 : f32 to vector<2x32xf32>
    %110 = arith.addf %109, %108 : vector<2x32xf32>
    %111 = arith.divf %109, %110 : vector<2x32xf32>
    %112 = vector.extract_strided_slice %99 {offsets = [0, 64], sizes = [2, 32], strides = [1, 1]} : vector<2x128xf32> to vector<2x32xf32>
    %113 = math.tanh %112 : vector<2x32xf32>
    %114 = vector.extract_strided_slice %99 {offsets = [0, 96], sizes = [2, 32], strides = [1, 1]} : vector<2x128xf32> to vector<2x32xf32>
    %115 = arith.negf %114 : vector<2x32xf32>
    %116 = math.exp %115 : vector<2x32xf32>
    %cst_29 = arith.constant 1.000000e+00 : f32
    %117 = vector.broadcast %cst_29 : f32 to vector<2x32xf32>
    %118 = arith.addf %117, %116 : vector<2x32xf32>
    %119 = arith.divf %117, %118 : vector<2x32xf32>
    %120 = arith.mulf %111, %93 : vector<2x32xf32>
    %121 = arith.mulf %105, %113 : vector<2x32xf32>
    %122 = arith.addf %120, %121 : vector<2x32xf32>
    %123 = math.tanh %122 : vector<2x32xf32>
    %124 = arith.mulf %119, %123 : vector<2x32xf32>
    %c6 = arith.constant 6 : index
    %c0_30 = arith.constant 0 : index
    %125 = vector.load %arg10[%c6, %c0_30] : memref<16x32xf32, #tpu.memory_space<vmem>>, vector<2x32xf32>
    tpu.vector_store %arg10[%c6, %c0_30], %124 {strides = array<i32>} : memref<16x32xf32, #tpu.memory_space<vmem>>, vector<2x32xf32>,
    %126 = vector.extract_strided_slice %6 {offsets = [8, 0], sizes = [2, 128], strides = [1, 1]} : vector<16x128xf32> to vector<2x128xf32>
    %cst_31 = arith.constant dense<0.000000e+00> : vector<2x128xf32>
    %127 = tpu.matmul %124, %7, %cst_31 {dimension_numbers = #tpu.dot_dimension_numbers<[1], [0], [0], [1], [0, 0, 1, 1], [], []>} : vector<2x32xf32>, vector<32x128xf32>, vector<2x128xf32> -> vector<2x128xf32>
    %128 = arith.addf %126, %127 : vector<2x128xf32>
    %129 = vector.extract_strided_slice %128 {offsets = [0, 0], sizes = [2, 32], strides = [1, 1]} : vector<2x128xf32> to vector<2x32xf32>
    %130 = arith.negf %129 : vector<2x32xf32>
    %131 = math.exp %130 : vector<2x32xf32>
    %cst_32 = arith.constant 1.000000e+00 : f32
    %132 = vector.broadcast %cst_32 : f32 to vector<2x32xf32>
    %133 = arith.addf %132, %131 : vector<2x32xf32>
    %134 = arith.divf %132, %133 : vector<2x32xf32>
    %135 = vector.extract_strided_slice %128 {offsets = [0, 32], sizes = [2, 32], strides = [1, 1]} : vector<2x128xf32> to vector<2x32xf32>
    %136 = arith.negf %135 : vector<2x32xf32>
    %137 = math.exp %136 : vector<2x32xf32>
    %cst_33 = arith.constant 1.000000e+00 : f32
    %138 = vector.broadcast %cst_33 : f32 to vector<2x32xf32>
    %139 = arith.addf %138, %137 : vector<2x32xf32>
    %140 = arith.divf %138, %139 : vector<2x32xf32>
    %141 = vector.extract_strided_slice %128 {offsets = [0, 64], sizes = [2, 32], strides = [1, 1]} : vector<2x128xf32> to vector<2x32xf32>
    %142 = math.tanh %141 : vector<2x32xf32>
    %143 = vector.extract_strided_slice %128 {offsets = [0, 96], sizes = [2, 32], strides = [1, 1]} : vector<2x128xf32> to vector<2x32xf32>
    %144 = arith.negf %143 : vector<2x32xf32>
    %145 = math.exp %144 : vector<2x32xf32>
    %cst_34 = arith.constant 1.000000e+00 : f32
    %146 = vector.broadcast %cst_34 : f32 to vector<2x32xf32>
    %147 = arith.addf %146, %145 : vector<2x32xf32>
    %148 = arith.divf %146, %147 : vector<2x32xf32>
    %149 = arith.mulf %140, %122 : vector<2x32xf32>
    %150 = arith.mulf %134, %142 : vector<2x32xf32>
    %151 = arith.addf %149, %150 : vector<2x32xf32>
    %152 = math.tanh %151 : vector<2x32xf32>
    %153 = arith.mulf %148, %152 : vector<2x32xf32>
    %c8 = arith.constant 8 : index
    %c0_35 = arith.constant 0 : index
    %154 = vector.load %arg10[%c8, %c0_35] : memref<16x32xf32, #tpu.memory_space<vmem>>, vector<2x32xf32>
    tpu.vector_store %arg10[%c8, %c0_35], %153 {strides = array<i32>} : memref<16x32xf32, #tpu.memory_space<vmem>>, vector<2x32xf32>,
    %155 = vector.extract_strided_slice %6 {offsets = [10, 0], sizes = [2, 128], strides = [1, 1]} : vector<16x128xf32> to vector<2x128xf32>
    %cst_36 = arith.constant dense<0.000000e+00> : vector<2x128xf32>
    %156 = tpu.matmul %153, %7, %cst_36 {dimension_numbers = #tpu.dot_dimension_numbers<[1], [0], [0], [1], [0, 0, 1, 1], [], []>} : vector<2x32xf32>, vector<32x128xf32>, vector<2x128xf32> -> vector<2x128xf32>
    %157 = arith.addf %155, %156 : vector<2x128xf32>
    %158 = vector.extract_strided_slice %157 {offsets = [0, 0], sizes = [2, 32], strides = [1, 1]} : vector<2x128xf32> to vector<2x32xf32>
    %159 = arith.negf %158 : vector<2x32xf32>
    %160 = math.exp %159 : vector<2x32xf32>
    %cst_37 = arith.constant 1.000000e+00 : f32
    %161 = vector.broadcast %cst_37 : f32 to vector<2x32xf32>
    %162 = arith.addf %161, %160 : vector<2x32xf32>
    %163 = arith.divf %161, %162 : vector<2x32xf32>
    %164 = vector.extract_strided_slice %157 {offsets = [0, 32], sizes = [2, 32], strides = [1, 1]} : vector<2x128xf32> to vector<2x32xf32>
    %165 = arith.negf %164 : vector<2x32xf32>
    %166 = math.exp %165 : vector<2x32xf32>
    %cst_38 = arith.constant 1.000000e+00 : f32
    %167 = vector.broadcast %cst_38 : f32 to vector<2x32xf32>
    %168 = arith.addf %167, %166 : vector<2x32xf32>
    %169 = arith.divf %167, %168 : vector<2x32xf32>
    %170 = vector.extract_strided_slice %157 {offsets = [0, 64], sizes = [2, 32], strides = [1, 1]} : vector<2x128xf32> to vector<2x32xf32>
    %171 = math.tanh %170 : vector<2x32xf32>
    %172 = vector.extract_strided_slice %157 {offsets = [0, 96], sizes = [2, 32], strides = [1, 1]} : vector<2x128xf32> to vector<2x32xf32>
    %173 = arith.negf %172 : vector<2x32xf32>
    %174 = math.exp %173 : vector<2x32xf32>
    %cst_39 = arith.constant 1.000000e+00 : f32
    %175 = vector.broadcast %cst_39 : f32 to vector<2x32xf32>
    %176 = arith.addf %175, %174 : vector<2x32xf32>
    %177 = arith.divf %175, %176 : vector<2x32xf32>
    %178 = arith.mulf %169, %151 : vector<2x32xf32>
    %179 = arith.mulf %163, %171 : vector<2x32xf32>
    %180 = arith.addf %178, %179 : vector<2x32xf32>
    %181 = math.tanh %180 : vector<2x32xf32>
    %182 = arith.mulf %177, %181 : vector<2x32xf32>
    %c10 = arith.constant 10 : index
    %c0_40 = arith.constant 0 : index
    %183 = vector.load %arg10[%c10, %c0_40] : memref<16x32xf32, #tpu.memory_space<vmem>>, vector<2x32xf32>
    tpu.vector_store %arg10[%c10, %c0_40], %182 {strides = array<i32>} : memref<16x32xf32, #tpu.memory_space<vmem>>, vector<2x32xf32>,
    %184 = vector.extract_strided_slice %6 {offsets = [12, 0], sizes = [2, 128], strides = [1, 1]} : vector<16x128xf32> to vector<2x128xf32>
    %cst_41 = arith.constant dense<0.000000e+00> : vector<2x128xf32>
    %185 = tpu.matmul %182, %7, %cst_41 {dimension_numbers = #tpu.dot_dimension_numbers<[1], [0], [0], [1], [0, 0, 1, 1], [], []>} : vector<2x32xf32>, vector<32x128xf32>, vector<2x128xf32> -> vector<2x128xf32>
    %186 = arith.addf %184, %185 : vector<2x128xf32>
    %187 = vector.extract_strided_slice %186 {offsets = [0, 0], sizes = [2, 32], strides = [1, 1]} : vector<2x128xf32> to vector<2x32xf32>
    %188 = arith.negf %187 : vector<2x32xf32>
    %189 = math.exp %188 : vector<2x32xf32>
    %cst_42 = arith.constant 1.000000e+00 : f32
    %190 = vector.broadcast %cst_42 : f32 to vector<2x32xf32>
    %191 = arith.addf %190, %189 : vector<2x32xf32>
    %192 = arith.divf %190, %191 : vector<2x32xf32>
    %193 = vector.extract_strided_slice %186 {offsets = [0, 32], sizes = [2, 32], strides = [1, 1]} : vector<2x128xf32> to vector<2x32xf32>
    %194 = arith.negf %193 : vector<2x32xf32>
    %195 = math.exp %194 : vector<2x32xf32>
    %cst_43 = arith.constant 1.000000e+00 : f32
    %196 = vector.broadcast %cst_43 : f32 to vector<2x32xf32>
    %197 = arith.addf %196, %195 : vector<2x32xf32>
    %198 = arith.divf %196, %197 : vector<2x32xf32>
    %199 = vector.extract_strided_slice %186 {offsets = [0, 64], sizes = [2, 32], strides = [1, 1]} : vector<2x128xf32> to vector<2x32xf32>
    %200 = math.tanh %199 : vector<2x32xf32>
    %201 = vector.extract_strided_slice %186 {offsets = [0, 96], sizes = [2, 32], strides = [1, 1]} : vector<2x128xf32> to vector<2x32xf32>
    %202 = arith.negf %201 : vector<2x32xf32>
    %203 = math.exp %202 : vector<2x32xf32>
    %cst_44 = arith.constant 1.000000e+00 : f32
    %204 = vector.broadcast %cst_44 : f32 to vector<2x32xf32>
    %205 = arith.addf %204, %203 : vector<2x32xf32>
    %206 = arith.divf %204, %205 : vector<2x32xf32>
    %207 = arith.mulf %198, %180 : vector<2x32xf32>
    %208 = arith.mulf %192, %200 : vector<2x32xf32>
    %209 = arith.addf %207, %208 : vector<2x32xf32>
    %210 = math.tanh %209 : vector<2x32xf32>
    %211 = arith.mulf %206, %210 : vector<2x32xf32>
    %c12 = arith.constant 12 : index
    %c0_45 = arith.constant 0 : index
    %212 = vector.load %arg10[%c12, %c0_45] : memref<16x32xf32, #tpu.memory_space<vmem>>, vector<2x32xf32>
    tpu.vector_store %arg10[%c12, %c0_45], %211 {strides = array<i32>} : memref<16x32xf32, #tpu.memory_space<vmem>>, vector<2x32xf32>,
    %213 = vector.extract_strided_slice %6 {offsets = [14, 0], sizes = [2, 128], strides = [1, 1]} : vector<16x128xf32> to vector<2x128xf32>
    %cst_46 = arith.constant dense<0.000000e+00> : vector<2x128xf32>
    %214 = tpu.matmul %211, %7, %cst_46 {dimension_numbers = #tpu.dot_dimension_numbers<[1], [0], [0], [1], [0, 0, 1, 1], [], []>} : vector<2x32xf32>, vector<32x128xf32>, vector<2x128xf32> -> vector<2x128xf32>
    %215 = arith.addf %213, %214 : vector<2x128xf32>
    %216 = vector.extract_strided_slice %215 {offsets = [0, 0], sizes = [2, 32], strides = [1, 1]} : vector<2x128xf32> to vector<2x32xf32>
    %217 = arith.negf %216 : vector<2x32xf32>
    %218 = math.exp %217 : vector<2x32xf32>
    %cst_47 = arith.constant 1.000000e+00 : f32
    %219 = vector.broadcast %cst_47 : f32 to vector<2x32xf32>
    %220 = arith.addf %219, %218 : vector<2x32xf32>
    %221 = arith.divf %219, %220 : vector<2x32xf32>
    %222 = vector.extract_strided_slice %215 {offsets = [0, 32], sizes = [2, 32], strides = [1, 1]} : vector<2x128xf32> to vector<2x32xf32>
    %223 = arith.negf %222 : vector<2x32xf32>
    %224 = math.exp %223 : vector<2x32xf32>
    %cst_48 = arith.constant 1.000000e+00 : f32
    %225 = vector.broadcast %cst_48 : f32 to vector<2x32xf32>
    %226 = arith.addf %225, %224 : vector<2x32xf32>
    %227 = arith.divf %225, %226 : vector<2x32xf32>
    %228 = vector.extract_strided_slice %215 {offsets = [0, 64], sizes = [2, 32], strides = [1, 1]} : vector<2x128xf32> to vector<2x32xf32>
    %229 = math.tanh %228 : vector<2x32xf32>
    %230 = vector.extract_strided_slice %215 {offsets = [0, 96], sizes = [2, 32], strides = [1, 1]} : vector<2x128xf32> to vector<2x32xf32>
    %231 = arith.negf %230 : vector<2x32xf32>
    %232 = math.exp %231 : vector<2x32xf32>
    %cst_49 = arith.constant 1.000000e+00 : f32
    %233 = vector.broadcast %cst_49 : f32 to vector<2x32xf32>
    %234 = arith.addf %233, %232 : vector<2x32xf32>
    %235 = arith.divf %233, %234 : vector<2x32xf32>
    %236 = arith.mulf %227, %209 : vector<2x32xf32>
    %237 = arith.mulf %221, %229 : vector<2x32xf32>
    %238 = arith.addf %236, %237 : vector<2x32xf32>
    %239 = math.tanh %238 : vector<2x32xf32>
    %240 = arith.mulf %235, %239 : vector<2x32xf32>
    %c14 = arith.constant 14 : index
    %c0_50 = arith.constant 0 : index
    %241 = vector.load %arg10[%c14, %c0_50] : memref<16x32xf32, #tpu.memory_space<vmem>>, vector<2x32xf32>
    tpu.vector_store %arg10[%c14, %c0_50], %240 {strides = array<i32>} : memref<16x32xf32, #tpu.memory_space<vmem>>, vector<2x32xf32>,
    %c0_51 = arith.constant 0 : index
    %c0_52 = arith.constant 0 : index
    %242 = vector.load %arg10[%c0_51, %c0_52] : memref<16x32xf32, #tpu.memory_space<vmem>>, vector<16x32xf32>
    %c0_53 = arith.constant 0 : index
    %c0_54 = arith.constant 0 : index
    %243 = vector.load %arg6[%c0_53, %c0_54] : memref<32x2xf32, #tpu.memory_space<vmem>>, vector<32x2xf32>
    %cst_55 = arith.constant dense<0.000000e+00> : vector<16x2xf32>
    %244 = tpu.matmul %242, %243, %cst_55 {dimension_numbers = #tpu.dot_dimension_numbers<[1], [0], [0], [1], [0, 0, 1, 1], [], []>} : vector<16x32xf32>, vector<32x2xf32>, vector<16x2xf32> -> vector<16x2xf32>
    %c4_56 = arith.constant 4 : index
    %c0_57 = arith.constant 0 : index
    %245 = vector.load %arg8[%c4_56, %c0_57] : memref<8x4xf32, #tpu.memory_space<vmem>>, vector<1x2xf32>
    %246 = vector.broadcast %245 : vector<1x2xf32> to vector<16x2xf32>
    %247 = arith.addf %244, %246 : vector<16x2xf32>
    %c0_58 = arith.constant 0 : index
    %c0_59 = arith.constant 0 : index
    %248 = vector.load %arg8[%c0_58, %c0_59] : memref<8x4xf32, #tpu.memory_space<vmem>>, vector<1x2xf32>
    %c1 = arith.constant 1 : index
    %c0_60 = arith.constant 0 : index
    %249 = vector.load %arg8[%c1, %c0_60] : memref<8x4xf32, #tpu.memory_space<vmem>>, vector<1x2xf32>
    %c2_61 = arith.constant 2 : index
    %c0_62 = arith.constant 0 : index
    %250 = vector.load %arg8[%c2_61, %c0_62] : memref<8x4xf32, #tpu.memory_space<vmem>>, vector<1x2xf32>
    %c3 = arith.constant 3 : index
    %c0_63 = arith.constant 0 : index
    %251 = vector.load %arg8[%c3, %c0_63] : memref<8x4xf32, #tpu.memory_space<vmem>>, vector<1x2xf32>
    %252 = vector.extract_strided_slice %247 {offsets = [0, 0], sizes = [2, 2], strides = [1, 1]} : vector<16x2xf32> to vector<2x2xf32>
    %253 = vector.extract_strided_slice %252 {offsets = [0, 0], sizes = [2, 1], strides = [1, 1]} : vector<2x2xf32> to vector<2x1xf32>
    %254 = vector.extract_strided_slice %252 {offsets = [0, 1], sizes = [2, 1], strides = [1, 1]} : vector<2x2xf32> to vector<2x1xf32>
    %255 = arith.maximumf %253, %254 : vector<2x1xf32>
    %256 = arith.subf %253, %254 : vector<2x1xf32>
    %257 = arith.cmpf one, %256, %256 : vector<2x1xf32>
    %258 = arith.addf %253, %254 : vector<2x1xf32>
    %259 = math.absf %256 : vector<2x1xf32>
    %cst_64 = arith.constant 0.000000e+00 : f32
    %260 = vector.broadcast %cst_64 : f32 to vector<2x1xf32>
    %261 = arith.subf %260, %259 : vector<2x1xf32>
    %262 = math.exp %261 : vector<2x1xf32>
    %263 = math.log1p %262 : vector<2x1xf32>
    %264 = arith.addf %255, %263 : vector<2x1xf32>
    %265 = arith.select %257, %258, %264 : vector<2x1xi1>, vector<2x1xf32>
    %c1_i32 = arith.constant 1 : i32
    %266 = vector.broadcast %c1_i32 : i32 to vector<2x1xi32>
    %267 = arith.cmpi eq, %0, %266 : vector<2x1xi32>
    %cst_65 = arith.constant 0.000000e+00 : f32
    %268 = vector.broadcast %cst_65 : f32 to vector<2x1xf32>
    %269 = arith.select %267, %265, %268 : vector<2x1xi1>, vector<2x1xf32>
    %270 = vector.extract_strided_slice %252 {offsets = [0, 0], sizes = [2, 1], strides = [1, 1]} : vector<2x2xf32> to vector<2x1xf32>
    %271 = vector.broadcast %270 : vector<2x1xf32> to vector<2x2xf32>
    %272 = vector.broadcast %248 : vector<1x2xf32> to vector<2x2xf32>
    %273 = arith.addf %271, %272 : vector<2x2xf32>
    %274 = vector.extract_strided_slice %252 {offsets = [0, 1], sizes = [2, 1], strides = [1, 1]} : vector<2x2xf32> to vector<2x1xf32>
    %275 = vector.broadcast %274 : vector<2x1xf32> to vector<2x2xf32>
    %276 = vector.broadcast %249 : vector<1x2xf32> to vector<2x2xf32>
    %277 = arith.addf %275, %276 : vector<2x2xf32>
    %278 = arith.maximumf %273, %277 : vector<2x2xf32>
    %279 = arith.subf %273, %277 : vector<2x2xf32>
    %280 = arith.cmpf one, %279, %279 : vector<2x2xf32>
    %281 = arith.addf %273, %277 : vector<2x2xf32>
    %282 = math.absf %279 : vector<2x2xf32>
    %cst_66 = arith.constant 0.000000e+00 : f32
    %283 = vector.broadcast %cst_66 : f32 to vector<2x2xf32>
    %284 = arith.subf %283, %282 : vector<2x2xf32>
    %285 = math.exp %284 : vector<2x2xf32>
    %286 = math.log1p %285 : vector<2x2xf32>
    %287 = arith.addf %278, %286 : vector<2x2xf32>
    %288 = arith.select %280, %281, %287 : vector<2x2xi1>, vector<2x2xf32>
    %289 = vector.extract_strided_slice %247 {offsets = [2, 0], sizes = [2, 2], strides = [1, 1]} : vector<16x2xf32> to vector<2x2xf32>
    %290 = arith.addf %288, %289 : vector<2x2xf32>
    %291 = vector.extract_strided_slice %290 {offsets = [0, 0], sizes = [2, 1], strides = [1, 1]} : vector<2x2xf32> to vector<2x1xf32>
    %292 = vector.extract_strided_slice %290 {offsets = [0, 1], sizes = [2, 1], strides = [1, 1]} : vector<2x2xf32> to vector<2x1xf32>
    %293 = arith.maximumf %291, %292 : vector<2x1xf32>
    %294 = arith.subf %291, %292 : vector<2x1xf32>
    %295 = arith.cmpf one, %294, %294 : vector<2x1xf32>
    %296 = arith.addf %291, %292 : vector<2x1xf32>
    %297 = math.absf %294 : vector<2x1xf32>
    %cst_67 = arith.constant 0.000000e+00 : f32
    %298 = vector.broadcast %cst_67 : f32 to vector<2x1xf32>
    %299 = arith.subf %298, %297 : vector<2x1xf32>
    %300 = math.exp %299 : vector<2x1xf32>
    %301 = math.log1p %300 : vector<2x1xf32>
    %302 = arith.addf %293, %301 : vector<2x1xf32>
    %303 = arith.select %295, %296, %302 : vector<2x1xi1>, vector<2x1xf32>
    %c2_i32 = arith.constant 2 : i32
    %304 = vector.broadcast %c2_i32 : i32 to vector<2x1xi32>
    %305 = arith.cmpi eq, %0, %304 : vector<2x1xi32>
    %306 = arith.select %305, %303, %269 : vector<2x1xi1>, vector<2x1xf32>
    %307 = vector.extract_strided_slice %290 {offsets = [0, 0], sizes = [2, 1], strides = [1, 1]} : vector<2x2xf32> to vector<2x1xf32>
    %308 = vector.broadcast %307 : vector<2x1xf32> to vector<2x2xf32>
    %309 = vector.broadcast %248 : vector<1x2xf32> to vector<2x2xf32>
    %310 = arith.addf %308, %309 : vector<2x2xf32>
    %311 = vector.extract_strided_slice %290 {offsets = [0, 1], sizes = [2, 1], strides = [1, 1]} : vector<2x2xf32> to vector<2x1xf32>
    %312 = vector.broadcast %311 : vector<2x1xf32> to vector<2x2xf32>
    %313 = vector.broadcast %249 : vector<1x2xf32> to vector<2x2xf32>
    %314 = arith.addf %312, %313 : vector<2x2xf32>
    %315 = arith.maximumf %310, %314 : vector<2x2xf32>
    %316 = arith.subf %310, %314 : vector<2x2xf32>
    %317 = arith.cmpf one, %316, %316 : vector<2x2xf32>
    %318 = arith.addf %310, %314 : vector<2x2xf32>
    %319 = math.absf %316 : vector<2x2xf32>
    %cst_68 = arith.constant 0.000000e+00 : f32
    %320 = vector.broadcast %cst_68 : f32 to vector<2x2xf32>
    %321 = arith.subf %320, %319 : vector<2x2xf32>
    %322 = math.exp %321 : vector<2x2xf32>
    %323 = math.log1p %322 : vector<2x2xf32>
    %324 = arith.addf %315, %323 : vector<2x2xf32>
    %325 = arith.select %317, %318, %324 : vector<2x2xi1>, vector<2x2xf32>
    %326 = vector.extract_strided_slice %247 {offsets = [4, 0], sizes = [2, 2], strides = [1, 1]} : vector<16x2xf32> to vector<2x2xf32>
    %327 = arith.addf %325, %326 : vector<2x2xf32>
    %328 = vector.extract_strided_slice %327 {offsets = [0, 0], sizes = [2, 1], strides = [1, 1]} : vector<2x2xf32> to vector<2x1xf32>
    %329 = vector.extract_strided_slice %327 {offsets = [0, 1], sizes = [2, 1], strides = [1, 1]} : vector<2x2xf32> to vector<2x1xf32>
    %330 = arith.maximumf %328, %329 : vector<2x1xf32>
    %331 = arith.subf %328, %329 : vector<2x1xf32>
    %332 = arith.cmpf one, %331, %331 : vector<2x1xf32>
    %333 = arith.addf %328, %329 : vector<2x1xf32>
    %334 = math.absf %331 : vector<2x1xf32>
    %cst_69 = arith.constant 0.000000e+00 : f32
    %335 = vector.broadcast %cst_69 : f32 to vector<2x1xf32>
    %336 = arith.subf %335, %334 : vector<2x1xf32>
    %337 = math.exp %336 : vector<2x1xf32>
    %338 = math.log1p %337 : vector<2x1xf32>
    %339 = arith.addf %330, %338 : vector<2x1xf32>
    %340 = arith.select %332, %333, %339 : vector<2x1xi1>, vector<2x1xf32>
    %c3_i32 = arith.constant 3 : i32
    %341 = vector.broadcast %c3_i32 : i32 to vector<2x1xi32>
    %342 = arith.cmpi eq, %0, %341 : vector<2x1xi32>
    %343 = arith.select %342, %340, %306 : vector<2x1xi1>, vector<2x1xf32>
    %344 = vector.extract_strided_slice %327 {offsets = [0, 0], sizes = [2, 1], strides = [1, 1]} : vector<2x2xf32> to vector<2x1xf32>
    %345 = vector.broadcast %344 : vector<2x1xf32> to vector<2x2xf32>
    %346 = vector.broadcast %248 : vector<1x2xf32> to vector<2x2xf32>
    %347 = arith.addf %345, %346 : vector<2x2xf32>
    %348 = vector.extract_strided_slice %327 {offsets = [0, 1], sizes = [2, 1], strides = [1, 1]} : vector<2x2xf32> to vector<2x1xf32>
    %349 = vector.broadcast %348 : vector<2x1xf32> to vector<2x2xf32>
    %350 = vector.broadcast %249 : vector<1x2xf32> to vector<2x2xf32>
    %351 = arith.addf %349, %350 : vector<2x2xf32>
    %352 = arith.maximumf %347, %351 : vector<2x2xf32>
    %353 = arith.subf %347, %351 : vector<2x2xf32>
    %354 = arith.cmpf one, %353, %353 : vector<2x2xf32>
    %355 = arith.addf %347, %351 : vector<2x2xf32>
    %356 = math.absf %353 : vector<2x2xf32>
    %cst_70 = arith.constant 0.000000e+00 : f32
    %357 = vector.broadcast %cst_70 : f32 to vector<2x2xf32>
    %358 = arith.subf %357, %356 : vector<2x2xf32>
    %359 = math.exp %358 : vector<2x2xf32>
    %360 = math.log1p %359 : vector<2x2xf32>
    %361 = arith.addf %352, %360 : vector<2x2xf32>
    %362 = arith.select %354, %355, %361 : vector<2x2xi1>, vector<2x2xf32>
    %363 = vector.extract_strided_slice %247 {offsets = [6, 0], sizes = [2, 2], strides = [1, 1]} : vector<16x2xf32> to vector<2x2xf32>
    %364 = arith.addf %362, %363 : vector<2x2xf32>
    %365 = vector.extract_strided_slice %364 {offsets = [0, 0], sizes = [2, 1], strides = [1, 1]} : vector<2x2xf32> to vector<2x1xf32>
    %366 = vector.extract_strided_slice %364 {offsets = [0, 1], sizes = [2, 1], strides = [1, 1]} : vector<2x2xf32> to vector<2x1xf32>
    %367 = arith.maximumf %365, %366 : vector<2x1xf32>
    %368 = arith.subf %365, %366 : vector<2x1xf32>
    %369 = arith.cmpf one, %368, %368 : vector<2x1xf32>
    %370 = arith.addf %365, %366 : vector<2x1xf32>
    %371 = math.absf %368 : vector<2x1xf32>
    %cst_71 = arith.constant 0.000000e+00 : f32
    %372 = vector.broadcast %cst_71 : f32 to vector<2x1xf32>
    %373 = arith.subf %372, %371 : vector<2x1xf32>
    %374 = math.exp %373 : vector<2x1xf32>
    %375 = math.log1p %374 : vector<2x1xf32>
    %376 = arith.addf %367, %375 : vector<2x1xf32>
    %377 = arith.select %369, %370, %376 : vector<2x1xi1>, vector<2x1xf32>
    %c4_i32 = arith.constant 4 : i32
    %378 = vector.broadcast %c4_i32 : i32 to vector<2x1xi32>
    %379 = arith.cmpi eq, %0, %378 : vector<2x1xi32>
    %380 = arith.select %379, %377, %343 : vector<2x1xi1>, vector<2x1xf32>
    %381 = vector.extract_strided_slice %364 {offsets = [0, 0], sizes = [2, 1], strides = [1, 1]} : vector<2x2xf32> to vector<2x1xf32>
    %382 = vector.broadcast %381 : vector<2x1xf32> to vector<2x2xf32>
    %383 = vector.broadcast %248 : vector<1x2xf32> to vector<2x2xf32>
    %384 = arith.addf %382, %383 : vector<2x2xf32>
    %385 = vector.extract_strided_slice %364 {offsets = [0, 1], sizes = [2, 1], strides = [1, 1]} : vector<2x2xf32> to vector<2x1xf32>
    %386 = vector.broadcast %385 : vector<2x1xf32> to vector<2x2xf32>
    %387 = vector.broadcast %249 : vector<1x2xf32> to vector<2x2xf32>
    %388 = arith.addf %386, %387 : vector<2x2xf32>
    %389 = arith.maximumf %384, %388 : vector<2x2xf32>
    %390 = arith.subf %384, %388 : vector<2x2xf32>
    %391 = arith.cmpf one, %390, %390 : vector<2x2xf32>
    %392 = arith.addf %384, %388 : vector<2x2xf32>
    %393 = math.absf %390 : vector<2x2xf32>
    %cst_72 = arith.constant 0.000000e+00 : f32
    %394 = vector.broadcast %cst_72 : f32 to vector<2x2xf32>
    %395 = arith.subf %394, %393 : vector<2x2xf32>
    %396 = math.exp %395 : vector<2x2xf32>
    %397 = math.log1p %396 : vector<2x2xf32>
    %398 = arith.addf %389, %397 : vector<2x2xf32>
    %399 = arith.select %391, %392, %398 : vector<2x2xi1>, vector<2x2xf32>
    %400 = vector.extract_strided_slice %247 {offsets = [8, 0], sizes = [2, 2], strides = [1, 1]} : vector<16x2xf32> to vector<2x2xf32>
    %401 = arith.addf %399, %400 : vector<2x2xf32>
    %402 = vector.extract_strided_slice %401 {offsets = [0, 0], sizes = [2, 1], strides = [1, 1]} : vector<2x2xf32> to vector<2x1xf32>
    %403 = vector.extract_strided_slice %401 {offsets = [0, 1], sizes = [2, 1], strides = [1, 1]} : vector<2x2xf32> to vector<2x1xf32>
    %404 = arith.maximumf %402, %403 : vector<2x1xf32>
    %405 = arith.subf %402, %403 : vector<2x1xf32>
    %406 = arith.cmpf one, %405, %405 : vector<2x1xf32>
    %407 = arith.addf %402, %403 : vector<2x1xf32>
    %408 = math.absf %405 : vector<2x1xf32>
    %cst_73 = arith.constant 0.000000e+00 : f32
    %409 = vector.broadcast %cst_73 : f32 to vector<2x1xf32>
    %410 = arith.subf %409, %408 : vector<2x1xf32>
    %411 = math.exp %410 : vector<2x1xf32>
    %412 = math.log1p %411 : vector<2x1xf32>
    %413 = arith.addf %404, %412 : vector<2x1xf32>
    %414 = arith.select %406, %407, %413 : vector<2x1xi1>, vector<2x1xf32>
    %c5_i32 = arith.constant 5 : i32
    %415 = vector.broadcast %c5_i32 : i32 to vector<2x1xi32>
    %416 = arith.cmpi eq, %0, %415 : vector<2x1xi32>
    %417 = arith.select %416, %414, %380 : vector<2x1xi1>, vector<2x1xf32>
    %418 = vector.extract_strided_slice %401 {offsets = [0, 0], sizes = [2, 1], strides = [1, 1]} : vector<2x2xf32> to vector<2x1xf32>
    %419 = vector.broadcast %418 : vector<2x1xf32> to vector<2x2xf32>
    %420 = vector.broadcast %248 : vector<1x2xf32> to vector<2x2xf32>
    %421 = arith.addf %419, %420 : vector<2x2xf32>
    %422 = vector.extract_strided_slice %401 {offsets = [0, 1], sizes = [2, 1], strides = [1, 1]} : vector<2x2xf32> to vector<2x1xf32>
    %423 = vector.broadcast %422 : vector<2x1xf32> to vector<2x2xf32>
    %424 = vector.broadcast %249 : vector<1x2xf32> to vector<2x2xf32>
    %425 = arith.addf %423, %424 : vector<2x2xf32>
    %426 = arith.maximumf %421, %425 : vector<2x2xf32>
    %427 = arith.subf %421, %425 : vector<2x2xf32>
    %428 = arith.cmpf one, %427, %427 : vector<2x2xf32>
    %429 = arith.addf %421, %425 : vector<2x2xf32>
    %430 = math.absf %427 : vector<2x2xf32>
    %cst_74 = arith.constant 0.000000e+00 : f32
    %431 = vector.broadcast %cst_74 : f32 to vector<2x2xf32>
    %432 = arith.subf %431, %430 : vector<2x2xf32>
    %433 = math.exp %432 : vector<2x2xf32>
    %434 = math.log1p %433 : vector<2x2xf32>
    %435 = arith.addf %426, %434 : vector<2x2xf32>
    %436 = arith.select %428, %429, %435 : vector<2x2xi1>, vector<2x2xf32>
    %437 = vector.extract_strided_slice %247 {offsets = [10, 0], sizes = [2, 2], strides = [1, 1]} : vector<16x2xf32> to vector<2x2xf32>
    %438 = arith.addf %436, %437 : vector<2x2xf32>
    %439 = vector.extract_strided_slice %438 {offsets = [0, 0], sizes = [2, 1], strides = [1, 1]} : vector<2x2xf32> to vector<2x1xf32>
    %440 = vector.extract_strided_slice %438 {offsets = [0, 1], sizes = [2, 1], strides = [1, 1]} : vector<2x2xf32> to vector<2x1xf32>
    %441 = arith.maximumf %439, %440 : vector<2x1xf32>
    %442 = arith.subf %439, %440 : vector<2x1xf32>
    %443 = arith.cmpf one, %442, %442 : vector<2x1xf32>
    %444 = arith.addf %439, %440 : vector<2x1xf32>
    %445 = math.absf %442 : vector<2x1xf32>
    %cst_75 = arith.constant 0.000000e+00 : f32
    %446 = vector.broadcast %cst_75 : f32 to vector<2x1xf32>
    %447 = arith.subf %446, %445 : vector<2x1xf32>
    %448 = math.exp %447 : vector<2x1xf32>
    %449 = math.log1p %448 : vector<2x1xf32>
    %450 = arith.addf %441, %449 : vector<2x1xf32>
    %451 = arith.select %443, %444, %450 : vector<2x1xi1>, vector<2x1xf32>
    %c6_i32 = arith.constant 6 : i32
    %452 = vector.broadcast %c6_i32 : i32 to vector<2x1xi32>
    %453 = arith.cmpi eq, %0, %452 : vector<2x1xi32>
    %454 = arith.select %453, %451, %417 : vector<2x1xi1>, vector<2x1xf32>
    %455 = vector.extract_strided_slice %438 {offsets = [0, 0], sizes = [2, 1], strides = [1, 1]} : vector<2x2xf32> to vector<2x1xf32>
    %456 = vector.broadcast %455 : vector<2x1xf32> to vector<2x2xf32>
    %457 = vector.broadcast %248 : vector<1x2xf32> to vector<2x2xf32>
    %458 = arith.addf %456, %457 : vector<2x2xf32>
    %459 = vector.extract_strided_slice %438 {offsets = [0, 1], sizes = [2, 1], strides = [1, 1]} : vector<2x2xf32> to vector<2x1xf32>
    %460 = vector.broadcast %459 : vector<2x1xf32> to vector<2x2xf32>
    %461 = vector.broadcast %249 : vector<1x2xf32> to vector<2x2xf32>
    %462 = arith.addf %460, %461 : vector<2x2xf32>
    %463 = arith.maximumf %458, %462 : vector<2x2xf32>
    %464 = arith.subf %458, %462 : vector<2x2xf32>
    %465 = arith.cmpf one, %464, %464 : vector<2x2xf32>
    %466 = arith.addf %458, %462 : vector<2x2xf32>
    %467 = math.absf %464 : vector<2x2xf32>
    %cst_76 = arith.constant 0.000000e+00 : f32
    %468 = vector.broadcast %cst_76 : f32 to vector<2x2xf32>
    %469 = arith.subf %468, %467 : vector<2x2xf32>
    %470 = math.exp %469 : vector<2x2xf32>
    %471 = math.log1p %470 : vector<2x2xf32>
    %472 = arith.addf %463, %471 : vector<2x2xf32>
    %473 = arith.select %465, %466, %472 : vector<2x2xi1>, vector<2x2xf32>
    %474 = vector.extract_strided_slice %247 {offsets = [12, 0], sizes = [2, 2], strides = [1, 1]} : vector<16x2xf32> to vector<2x2xf32>
    %475 = arith.addf %473, %474 : vector<2x2xf32>
    %476 = vector.extract_strided_slice %475 {offsets = [0, 0], sizes = [2, 1], strides = [1, 1]} : vector<2x2xf32> to vector<2x1xf32>
    %477 = vector.extract_strided_slice %475 {offsets = [0, 1], sizes = [2, 1], strides = [1, 1]} : vector<2x2xf32> to vector<2x1xf32>
    %478 = arith.maximumf %476, %477 : vector<2x1xf32>
    %479 = arith.subf %476, %477 : vector<2x1xf32>
    %480 = arith.cmpf one, %479, %479 : vector<2x1xf32>
    %481 = arith.addf %476, %477 : vector<2x1xf32>
    %482 = math.absf %479 : vector<2x1xf32>
    %cst_77 = arith.constant 0.000000e+00 : f32
    %483 = vector.broadcast %cst_77 : f32 to vector<2x1xf32>
    %484 = arith.subf %483, %482 : vector<2x1xf32>
    %485 = math.exp %484 : vector<2x1xf32>
    %486 = math.log1p %485 : vector<2x1xf32>
    %487 = arith.addf %478, %486 : vector<2x1xf32>
    %488 = arith.select %480, %481, %487 : vector<2x1xi1>, vector<2x1xf32>
    %c7_i32 = arith.constant 7 : i32
    %489 = vector.broadcast %c7_i32 : i32 to vector<2x1xi32>
    %490 = arith.cmpi eq, %0, %489 : vector<2x1xi32>
    %491 = arith.select %490, %488, %454 : vector<2x1xi1>, vector<2x1xf32>
    %492 = vector.extract_strided_slice %475 {offsets = [0, 0], sizes = [2, 1], strides = [1, 1]} : vector<2x2xf32> to vector<2x1xf32>
    %493 = vector.broadcast %492 : vector<2x1xf32> to vector<2x2xf32>
    %494 = vector.broadcast %248 : vector<1x2xf32> to vector<2x2xf32>
    %495 = arith.addf %493, %494 : vector<2x2xf32>
    %496 = vector.extract_strided_slice %475 {offsets = [0, 1], sizes = [2, 1], strides = [1, 1]} : vector<2x2xf32> to vector<2x1xf32>
    %497 = vector.broadcast %496 : vector<2x1xf32> to vector<2x2xf32>
    %498 = vector.broadcast %249 : vector<1x2xf32> to vector<2x2xf32>
    %499 = arith.addf %497, %498 : vector<2x2xf32>
    %500 = arith.maximumf %495, %499 : vector<2x2xf32>
    %501 = arith.subf %495, %499 : vector<2x2xf32>
    %502 = arith.cmpf one, %501, %501 : vector<2x2xf32>
    %503 = arith.addf %495, %499 : vector<2x2xf32>
    %504 = math.absf %501 : vector<2x2xf32>
    %cst_78 = arith.constant 0.000000e+00 : f32
    %505 = vector.broadcast %cst_78 : f32 to vector<2x2xf32>
    %506 = arith.subf %505, %504 : vector<2x2xf32>
    %507 = math.exp %506 : vector<2x2xf32>
    %508 = math.log1p %507 : vector<2x2xf32>
    %509 = arith.addf %500, %508 : vector<2x2xf32>
    %510 = arith.select %502, %503, %509 : vector<2x2xi1>, vector<2x2xf32>
    %511 = vector.extract_strided_slice %247 {offsets = [14, 0], sizes = [2, 2], strides = [1, 1]} : vector<16x2xf32> to vector<2x2xf32>
    %512 = arith.addf %510, %511 : vector<2x2xf32>
    %513 = vector.extract_strided_slice %512 {offsets = [0, 0], sizes = [2, 1], strides = [1, 1]} : vector<2x2xf32> to vector<2x1xf32>
    %514 = vector.extract_strided_slice %512 {offsets = [0, 1], sizes = [2, 1], strides = [1, 1]} : vector<2x2xf32> to vector<2x1xf32>
    %515 = arith.maximumf %513, %514 : vector<2x1xf32>
    %516 = arith.subf %513, %514 : vector<2x1xf32>
    %517 = arith.cmpf one, %516, %516 : vector<2x1xf32>
    %518 = arith.addf %513, %514 : vector<2x1xf32>
    %519 = math.absf %516 : vector<2x1xf32>
    %cst_79 = arith.constant 0.000000e+00 : f32
    %520 = vector.broadcast %cst_79 : f32 to vector<2x1xf32>
    %521 = arith.subf %520, %519 : vector<2x1xf32>
    %522 = math.exp %521 : vector<2x1xf32>
    %523 = math.log1p %522 : vector<2x1xf32>
    %524 = arith.addf %515, %523 : vector<2x1xf32>
    %525 = arith.select %517, %518, %524 : vector<2x1xi1>, vector<2x1xf32>
    %c8_i32 = arith.constant 8 : i32
    %526 = vector.broadcast %c8_i32 : i32 to vector<2x1xi32>
    %527 = arith.cmpi eq, %0, %526 : vector<2x1xi32>
    %528 = arith.select %527, %525, %491 : vector<2x1xi1>, vector<2x1xf32>
    %cst_80 = arith.constant 0.000000e+00 : f32
    %529 = vector.broadcast %cst_80 : f32 to vector<2x2xf32>
    %530 = vector.extract_strided_slice %247 {offsets = [14, 0], sizes = [2, 2], strides = [1, 1]} : vector<16x2xf32> to vector<2x2xf32>
    %531 = arith.addf %530, %529 : vector<2x2xf32>
    %532 = vector.extract_strided_slice %531 {offsets = [0, 0], sizes = [2, 1], strides = [1, 1]} : vector<2x2xf32> to vector<2x1xf32>
    %533 = vector.broadcast %532 : vector<2x1xf32> to vector<2x2xf32>
    %534 = vector.broadcast %250 : vector<1x2xf32> to vector<2x2xf32>
    %535 = arith.addf %533, %534 : vector<2x2xf32>
    %536 = vector.extract_strided_slice %531 {offsets = [0, 1], sizes = [2, 1], strides = [1, 1]} : vector<2x2xf32> to vector<2x1xf32>
    %537 = vector.broadcast %536 : vector<2x1xf32> to vector<2x2xf32>
    %538 = vector.broadcast %251 : vector<1x2xf32> to vector<2x2xf32>
    %539 = arith.addf %537, %538 : vector<2x2xf32>
    %540 = arith.maximumf %535, %539 : vector<2x2xf32>
    %541 = arith.subf %535, %539 : vector<2x2xf32>
    %542 = arith.cmpf one, %541, %541 : vector<2x2xf32>
    %543 = arith.addf %535, %539 : vector<2x2xf32>
    %544 = math.absf %541 : vector<2x2xf32>
    %cst_81 = arith.constant 0.000000e+00 : f32
    %545 = vector.broadcast %cst_81 : f32 to vector<2x2xf32>
    %546 = arith.subf %545, %544 : vector<2x2xf32>
    %547 = math.exp %546 : vector<2x2xf32>
    %548 = math.log1p %547 : vector<2x2xf32>
    %549 = arith.addf %540, %548 : vector<2x2xf32>
    %550 = arith.select %542, %543, %549 : vector<2x2xi1>, vector<2x2xf32>
    %c1_i32_82 = arith.constant 1 : i32
    %551 = vector.broadcast %c1_i32_82 : i32 to vector<2x1xi32>
    %552 = arith.subi %0, %551 : vector<2x1xi32>
    %c6_i32_83 = arith.constant 6 : i32
    %553 = vector.broadcast %c6_i32_83 : i32 to vector<2x1xi32>
    %554 = arith.cmpi sle, %552, %553 : vector<2x1xi32>
    %cst_84 = arith.constant 0.000000e+00 : f32
    %555 = vector.broadcast %cst_84 : f32 to vector<2x2xf32>
    %556 = vector.shape_cast %554 : vector<2x1xi1> to vector<2x1xi1>
    %557 = vector.broadcast %556 : vector<2x1xi1> to vector<2x2xi1>
    %558 = arith.select %557, %555, %550 : vector<2x2xi1>, vector<2x2xf32>
    %559 = vector.extract_strided_slice %247 {offsets = [12, 0], sizes = [2, 2], strides = [1, 1]} : vector<16x2xf32> to vector<2x2xf32>
    %560 = arith.addf %559, %558 : vector<2x2xf32>
    %561 = vector.extract_strided_slice %560 {offsets = [0, 0], sizes = [2, 1], strides = [1, 1]} : vector<2x2xf32> to vector<2x1xf32>
    %562 = vector.broadcast %561 : vector<2x1xf32> to vector<2x2xf32>
    %563 = vector.broadcast %250 : vector<1x2xf32> to vector<2x2xf32>
    %564 = arith.addf %562, %563 : vector<2x2xf32>
    %565 = vector.extract_strided_slice %560 {offsets = [0, 1], sizes = [2, 1], strides = [1, 1]} : vector<2x2xf32> to vector<2x1xf32>
    %566 = vector.broadcast %565 : vector<2x1xf32> to vector<2x2xf32>
    %567 = vector.broadcast %251 : vector<1x2xf32> to vector<2x2xf32>
    %568 = arith.addf %566, %567 : vector<2x2xf32>
    %569 = arith.maximumf %564, %568 : vector<2x2xf32>
    %570 = arith.subf %564, %568 : vector<2x2xf32>
    %571 = arith.cmpf one, %570, %570 : vector<2x2xf32>
    %572 = arith.addf %564, %568 : vector<2x2xf32>
    %573 = math.absf %570 : vector<2x2xf32>
    %cst_85 = arith.constant 0.000000e+00 : f32
    %574 = vector.broadcast %cst_85 : f32 to vector<2x2xf32>
    %575 = arith.subf %574, %573 : vector<2x2xf32>
    %576 = math.exp %575 : vector<2x2xf32>
    %577 = math.log1p %576 : vector<2x2xf32>
    %578 = arith.addf %569, %577 : vector<2x2xf32>
    %579 = arith.select %571, %572, %578 : vector<2x2xi1>, vector<2x2xf32>
    %c1_i32_86 = arith.constant 1 : i32
    %580 = vector.broadcast %c1_i32_86 : i32 to vector<2x1xi32>
    %581 = arith.subi %0, %580 : vector<2x1xi32>
    %c5_i32_87 = arith.constant 5 : i32
    %582 = vector.broadcast %c5_i32_87 : i32 to vector<2x1xi32>
    %583 = arith.cmpi sle, %581, %582 : vector<2x1xi32>
    %cst_88 = arith.constant 0.000000e+00 : f32
    %584 = vector.broadcast %cst_88 : f32 to vector<2x2xf32>
    %585 = vector.shape_cast %583 : vector<2x1xi1> to vector<2x1xi1>
    %586 = vector.broadcast %585 : vector<2x1xi1> to vector<2x2xi1>
    %587 = arith.select %586, %584, %579 : vector<2x2xi1>, vector<2x2xf32>
    %588 = vector.extract_strided_slice %247 {offsets = [10, 0], sizes = [2, 2], strides = [1, 1]} : vector<16x2xf32> to vector<2x2xf32>
    %589 = arith.addf %588, %587 : vector<2x2xf32>
    %590 = vector.extract_strided_slice %589 {offsets = [0, 0], sizes = [2, 1], strides = [1, 1]} : vector<2x2xf32> to vector<2x1xf32>
    %591 = vector.broadcast %590 : vector<2x1xf32> to vector<2x2xf32>
    %592 = vector.broadcast %250 : vector<1x2xf32> to vector<2x2xf32>
    %593 = arith.addf %591, %592 : vector<2x2xf32>
    %594 = vector.extract_strided_slice %589 {offsets = [0, 1], sizes = [2, 1], strides = [1, 1]} : vector<2x2xf32> to vector<2x1xf32>
    %595 = vector.broadcast %594 : vector<2x1xf32> to vector<2x2xf32>
    %596 = vector.broadcast %251 : vector<1x2xf32> to vector<2x2xf32>
    %597 = arith.addf %595, %596 : vector<2x2xf32>
    %598 = arith.maximumf %593, %597 : vector<2x2xf32>
    %599 = arith.subf %593, %597 : vector<2x2xf32>
    %600 = arith.cmpf one, %599, %599 : vector<2x2xf32>
    %601 = arith.addf %593, %597 : vector<2x2xf32>
    %602 = math.absf %599 : vector<2x2xf32>
    %cst_89 = arith.constant 0.000000e+00 : f32
    %603 = vector.broadcast %cst_89 : f32 to vector<2x2xf32>
    %604 = arith.subf %603, %602 : vector<2x2xf32>
    %605 = math.exp %604 : vector<2x2xf32>
    %606 = math.log1p %605 : vector<2x2xf32>
    %607 = arith.addf %598, %606 : vector<2x2xf32>
    %608 = arith.select %600, %601, %607 : vector<2x2xi1>, vector<2x2xf32>
    %c1_i32_90 = arith.constant 1 : i32
    %609 = vector.broadcast %c1_i32_90 : i32 to vector<2x1xi32>
    %610 = arith.subi %0, %609 : vector<2x1xi32>
    %c4_i32_91 = arith.constant 4 : i32
    %611 = vector.broadcast %c4_i32_91 : i32 to vector<2x1xi32>
    %612 = arith.cmpi sle, %610, %611 : vector<2x1xi32>
    %cst_92 = arith.constant 0.000000e+00 : f32
    %613 = vector.broadcast %cst_92 : f32 to vector<2x2xf32>
    %614 = vector.shape_cast %612 : vector<2x1xi1> to vector<2x1xi1>
    %615 = vector.broadcast %614 : vector<2x1xi1> to vector<2x2xi1>
    %616 = arith.select %615, %613, %608 : vector<2x2xi1>, vector<2x2xf32>
    %617 = vector.extract_strided_slice %247 {offsets = [8, 0], sizes = [2, 2], strides = [1, 1]} : vector<16x2xf32> to vector<2x2xf32>
    %618 = arith.addf %617, %616 : vector<2x2xf32>
    %619 = vector.extract_strided_slice %618 {offsets = [0, 0], sizes = [2, 1], strides = [1, 1]} : vector<2x2xf32> to vector<2x1xf32>
    %620 = vector.broadcast %619 : vector<2x1xf32> to vector<2x2xf32>
    %621 = vector.broadcast %250 : vector<1x2xf32> to vector<2x2xf32>
    %622 = arith.addf %620, %621 : vector<2x2xf32>
    %623 = vector.extract_strided_slice %618 {offsets = [0, 1], sizes = [2, 1], strides = [1, 1]} : vector<2x2xf32> to vector<2x1xf32>
    %624 = vector.broadcast %623 : vector<2x1xf32> to vector<2x2xf32>
    %625 = vector.broadcast %251 : vector<1x2xf32> to vector<2x2xf32>
    %626 = arith.addf %624, %625 : vector<2x2xf32>
    %627 = arith.maximumf %622, %626 : vector<2x2xf32>
    %628 = arith.subf %622, %626 : vector<2x2xf32>
    %629 = arith.cmpf one, %628, %628 : vector<2x2xf32>
    %630 = arith.addf %622, %626 : vector<2x2xf32>
    %631 = math.absf %628 : vector<2x2xf32>
    %cst_93 = arith.constant 0.000000e+00 : f32
    %632 = vector.broadcast %cst_93 : f32 to vector<2x2xf32>
    %633 = arith.subf %632, %631 : vector<2x2xf32>
    %634 = math.exp %633 : vector<2x2xf32>
    %635 = math.log1p %634 : vector<2x2xf32>
    %636 = arith.addf %627, %635 : vector<2x2xf32>
    %637 = arith.select %629, %630, %636 : vector<2x2xi1>, vector<2x2xf32>
    %c1_i32_94 = arith.constant 1 : i32
    %638 = vector.broadcast %c1_i32_94 : i32 to vector<2x1xi32>
    %639 = arith.subi %0, %638 : vector<2x1xi32>
    %c3_i32_95 = arith.constant 3 : i32
    %640 = vector.broadcast %c3_i32_95 : i32 to vector<2x1xi32>
    %641 = arith.cmpi sle, %639, %640 : vector<2x1xi32>
    %cst_96 = arith.constant 0.000000e+00 : f32
    %642 = vector.broadcast %cst_96 : f32 to vector<2x2xf32>
    %643 = vector.shape_cast %641 : vector<2x1xi1> to vector<2x1xi1>
    %644 = vector.broadcast %643 : vector<2x1xi1> to vector<2x2xi1>
    %645 = arith.select %644, %642, %637 : vector<2x2xi1>, vector<2x2xf32>
    %646 = vector.extract_strided_slice %247 {offsets = [6, 0], sizes = [2, 2], strides = [1, 1]} : vector<16x2xf32> to vector<2x2xf32>
    %647 = arith.addf %646, %645 : vector<2x2xf32>
    %648 = vector.extract_strided_slice %647 {offsets = [0, 0], sizes = [2, 1], strides = [1, 1]} : vector<2x2xf32> to vector<2x1xf32>
    %649 = vector.broadcast %648 : vector<2x1xf32> to vector<2x2xf32>
    %650 = vector.broadcast %250 : vector<1x2xf32> to vector<2x2xf32>
    %651 = arith.addf %649, %650 : vector<2x2xf32>
    %652 = vector.extract_strided_slice %647 {offsets = [0, 1], sizes = [2, 1], strides = [1, 1]} : vector<2x2xf32> to vector<2x1xf32>
    %653 = vector.broadcast %652 : vector<2x1xf32> to vector<2x2xf32>
    %654 = vector.broadcast %251 : vector<1x2xf32> to vector<2x2xf32>
    %655 = arith.addf %653, %654 : vector<2x2xf32>
    %656 = arith.maximumf %651, %655 : vector<2x2xf32>
    %657 = arith.subf %651, %655 : vector<2x2xf32>
    %658 = arith.cmpf one, %657, %657 : vector<2x2xf32>
    %659 = arith.addf %651, %655 : vector<2x2xf32>
    %660 = math.absf %657 : vector<2x2xf32>
    %cst_97 = arith.constant 0.000000e+00 : f32
    %661 = vector.broadcast %cst_97 : f32 to vector<2x2xf32>
    %662 = arith.subf %661, %660 : vector<2x2xf32>
    %663 = math.exp %662 : vector<2x2xf32>
    %664 = math.log1p %663 : vector<2x2xf32>
    %665 = arith.addf %656, %664 : vector<2x2xf32>
    %666 = arith.select %658, %659, %665 : vector<2x2xi1>, vector<2x2xf32>
    %c1_i32_98 = arith.constant 1 : i32
    %667 = vector.broadcast %c1_i32_98 : i32 to vector<2x1xi32>
    %668 = arith.subi %0, %667 : vector<2x1xi32>
    %c2_i32_99 = arith.constant 2 : i32
    %669 = vector.broadcast %c2_i32_99 : i32 to vector<2x1xi32>
    %670 = arith.cmpi sle, %668, %669 : vector<2x1xi32>
    %cst_100 = arith.constant 0.000000e+00 : f32
    %671 = vector.broadcast %cst_100 : f32 to vector<2x2xf32>
    %672 = vector.shape_cast %670 : vector<2x1xi1> to vector<2x1xi1>
    %673 = vector.broadcast %672 : vector<2x1xi1> to vector<2x2xi1>
    %674 = arith.select %673, %671, %666 : vector<2x2xi1>, vector<2x2xf32>
    %675 = vector.extract_strided_slice %247 {offsets = [4, 0], sizes = [2, 2], strides = [1, 1]} : vector<16x2xf32> to vector<2x2xf32>
    %676 = arith.addf %675, %674 : vector<2x2xf32>
    %677 = vector.extract_strided_slice %676 {offsets = [0, 0], sizes = [2, 1], strides = [1, 1]} : vector<2x2xf32> to vector<2x1xf32>
    %678 = vector.broadcast %677 : vector<2x1xf32> to vector<2x2xf32>
    %679 = vector.broadcast %250 : vector<1x2xf32> to vector<2x2xf32>
    %680 = arith.addf %678, %679 : vector<2x2xf32>
    %681 = vector.extract_strided_slice %676 {offsets = [0, 1], sizes = [2, 1], strides = [1, 1]} : vector<2x2xf32> to vector<2x1xf32>
    %682 = vector.broadcast %681 : vector<2x1xf32> to vector<2x2xf32>
    %683 = vector.broadcast %251 : vector<1x2xf32> to vector<2x2xf32>
    %684 = arith.addf %682, %683 : vector<2x2xf32>
    %685 = arith.maximumf %680, %684 : vector<2x2xf32>
    %686 = arith.subf %680, %684 : vector<2x2xf32>
    %687 = arith.cmpf one, %686, %686 : vector<2x2xf32>
    %688 = arith.addf %680, %684 : vector<2x2xf32>
    %689 = math.absf %686 : vector<2x2xf32>
    %cst_101 = arith.constant 0.000000e+00 : f32
    %690 = vector.broadcast %cst_101 : f32 to vector<2x2xf32>
    %691 = arith.subf %690, %689 : vector<2x2xf32>
    %692 = math.exp %691 : vector<2x2xf32>
    %693 = math.log1p %692 : vector<2x2xf32>
    %694 = arith.addf %685, %693 : vector<2x2xf32>
    %695 = arith.select %687, %688, %694 : vector<2x2xi1>, vector<2x2xf32>
    %c1_i32_102 = arith.constant 1 : i32
    %696 = vector.broadcast %c1_i32_102 : i32 to vector<2x1xi32>
    %697 = arith.subi %0, %696 : vector<2x1xi32>
    %c1_i32_103 = arith.constant 1 : i32
    %698 = vector.broadcast %c1_i32_103 : i32 to vector<2x1xi32>
    %699 = arith.cmpi sle, %697, %698 : vector<2x1xi32>
    %cst_104 = arith.constant 0.000000e+00 : f32
    %700 = vector.broadcast %cst_104 : f32 to vector<2x2xf32>
    %701 = vector.shape_cast %699 : vector<2x1xi1> to vector<2x1xi1>
    %702 = vector.broadcast %701 : vector<2x1xi1> to vector<2x2xi1>
    %703 = arith.select %702, %700, %695 : vector<2x2xi1>, vector<2x2xf32>
    %704 = vector.extract_strided_slice %247 {offsets = [2, 0], sizes = [2, 2], strides = [1, 1]} : vector<16x2xf32> to vector<2x2xf32>
    %705 = arith.addf %704, %703 : vector<2x2xf32>
    %706 = vector.extract_strided_slice %705 {offsets = [0, 0], sizes = [2, 1], strides = [1, 1]} : vector<2x2xf32> to vector<2x1xf32>
    %707 = vector.broadcast %706 : vector<2x1xf32> to vector<2x2xf32>
    %708 = vector.broadcast %250 : vector<1x2xf32> to vector<2x2xf32>
    %709 = arith.addf %707, %708 : vector<2x2xf32>
    %710 = vector.extract_strided_slice %705 {offsets = [0, 1], sizes = [2, 1], strides = [1, 1]} : vector<2x2xf32> to vector<2x1xf32>
    %711 = vector.broadcast %710 : vector<2x1xf32> to vector<2x2xf32>
    %712 = vector.broadcast %251 : vector<1x2xf32> to vector<2x2xf32>
    %713 = arith.addf %711, %712 : vector<2x2xf32>
    %714 = arith.maximumf %709, %713 : vector<2x2xf32>
    %715 = arith.subf %709, %713 : vector<2x2xf32>
    %716 = arith.cmpf one, %715, %715 : vector<2x2xf32>
    %717 = arith.addf %709, %713 : vector<2x2xf32>
    %718 = math.absf %715 : vector<2x2xf32>
    %cst_105 = arith.constant 0.000000e+00 : f32
    %719 = vector.broadcast %cst_105 : f32 to vector<2x2xf32>
    %720 = arith.subf %719, %718 : vector<2x2xf32>
    %721 = math.exp %720 : vector<2x2xf32>
    %722 = math.log1p %721 : vector<2x2xf32>
    %723 = arith.addf %714, %722 : vector<2x2xf32>
    %724 = arith.select %716, %717, %723 : vector<2x2xi1>, vector<2x2xf32>
    %c1_i32_106 = arith.constant 1 : i32
    %725 = vector.broadcast %c1_i32_106 : i32 to vector<2x1xi32>
    %726 = arith.subi %0, %725 : vector<2x1xi32>
    %c0_i32 = arith.constant 0 : i32
    %727 = vector.broadcast %c0_i32 : i32 to vector<2x1xi32>
    %728 = arith.cmpi sle, %726, %727 : vector<2x1xi32>
    %cst_107 = arith.constant 0.000000e+00 : f32
    %729 = vector.broadcast %cst_107 : f32 to vector<2x2xf32>
    %730 = vector.shape_cast %728 : vector<2x1xi1> to vector<2x1xi1>
    %731 = vector.broadcast %730 : vector<2x1xi1> to vector<2x2xi1>
    %732 = arith.select %731, %729, %724 : vector<2x2xi1>, vector<2x2xf32>
    %cst_108 = arith.constant 0.000000e+00 : f32
    %733 = vector.broadcast %cst_108 : f32 to vector<2x32xf32>
    %cst_109 = arith.constant 0.000000e+00 : f32
    %734 = vector.broadcast %cst_109 : f32 to vector<2x1xf32>
    %735 = arith.addf %252, %732 : vector<2x2xf32>
    %736 = vector.broadcast %528 : vector<2x1xf32> to vector<2x2xf32>
    %737 = arith.subf %735, %736 : vector<2x2xf32>
    %738 = math.exp %737 : vector<2x2xf32>
    %c0_i32_110 = arith.constant 0 : i32
    %739 = vector.broadcast %c0_i32_110 : i32 to vector<2x1xi32>
    %740 = arith.cmpi sgt, %0, %739 : vector<2x1xi32>
    %741 = vector.extract_strided_slice %738 {offsets = [0, 1], sizes = [2, 1], strides = [1, 1]} : vector<2x2xf32> to vector<2x1xf32>
    %cst_111 = arith.constant 0.000000e+00 : f32
    %742 = vector.broadcast %cst_111 : f32 to vector<2x1xf32>
    %743 = arith.select %740, %741, %742 : vector<2x1xi1>, vector<2x1xf32>
    %c0_112 = arith.constant 0 : index
    %c0_113 = arith.constant 0 : index
    %744 = vector.load %arg10[%c0_112, %c0_113] : memref<16x32xf32, #tpu.memory_space<vmem>>, vector<2x32xf32>
    %745 = vector.broadcast %743 : vector<2x1xf32> to vector<2x32xf32>
    %746 = arith.mulf %745, %744 : vector<2x32xf32>
    %747 = arith.addf %733, %746 : vector<2x32xf32>
    %748 = math.absf %743 : vector<2x1xf32>
    %749 = arith.addf %734, %748 : vector<2x1xf32>
    %750 = arith.addf %290, %703 : vector<2x2xf32>
    %751 = vector.broadcast %528 : vector<2x1xf32> to vector<2x2xf32>
    %752 = arith.subf %750, %751 : vector<2x2xf32>
    %753 = math.exp %752 : vector<2x2xf32>
    %c1_i32_114 = arith.constant 1 : i32
    %754 = vector.broadcast %c1_i32_114 : i32 to vector<2x1xi32>
    %755 = arith.cmpi sgt, %0, %754 : vector<2x1xi32>
    %756 = vector.extract_strided_slice %753 {offsets = [0, 1], sizes = [2, 1], strides = [1, 1]} : vector<2x2xf32> to vector<2x1xf32>
    %cst_115 = arith.constant 0.000000e+00 : f32
    %757 = vector.broadcast %cst_115 : f32 to vector<2x1xf32>
    %758 = arith.select %755, %756, %757 : vector<2x1xi1>, vector<2x1xf32>
    %c2_116 = arith.constant 2 : index
    %c0_117 = arith.constant 0 : index
    %759 = vector.load %arg10[%c2_116, %c0_117] : memref<16x32xf32, #tpu.memory_space<vmem>>, vector<2x32xf32>
    %760 = vector.broadcast %758 : vector<2x1xf32> to vector<2x32xf32>
    %761 = arith.mulf %760, %759 : vector<2x32xf32>
    %762 = arith.addf %747, %761 : vector<2x32xf32>
    %763 = math.absf %758 : vector<2x1xf32>
    %764 = arith.addf %749, %763 : vector<2x1xf32>
    %765 = arith.addf %327, %674 : vector<2x2xf32>
    %766 = vector.broadcast %528 : vector<2x1xf32> to vector<2x2xf32>
    %767 = arith.subf %765, %766 : vector<2x2xf32>
    %768 = math.exp %767 : vector<2x2xf32>
    %c2_i32_118 = arith.constant 2 : i32
    %769 = vector.broadcast %c2_i32_118 : i32 to vector<2x1xi32>
    %770 = arith.cmpi sgt, %0, %769 : vector<2x1xi32>
    %771 = vector.extract_strided_slice %768 {offsets = [0, 1], sizes = [2, 1], strides = [1, 1]} : vector<2x2xf32> to vector<2x1xf32>
    %cst_119 = arith.constant 0.000000e+00 : f32
    %772 = vector.broadcast %cst_119 : f32 to vector<2x1xf32>
    %773 = arith.select %770, %771, %772 : vector<2x1xi1>, vector<2x1xf32>
    %c4_120 = arith.constant 4 : index
    %c0_121 = arith.constant 0 : index
    %774 = vector.load %arg10[%c4_120, %c0_121] : memref<16x32xf32, #tpu.memory_space<vmem>>, vector<2x32xf32>
    %775 = vector.broadcast %773 : vector<2x1xf32> to vector<2x32xf32>
    %776 = arith.mulf %775, %774 : vector<2x32xf32>
    %777 = arith.addf %762, %776 : vector<2x32xf32>
    %778 = math.absf %773 : vector<2x1xf32>
    %779 = arith.addf %764, %778 : vector<2x1xf32>
    %780 = arith.addf %364, %645 : vector<2x2xf32>
    %781 = vector.broadcast %528 : vector<2x1xf32> to vector<2x2xf32>
    %782 = arith.subf %780, %781 : vector<2x2xf32>
    %783 = math.exp %782 : vector<2x2xf32>
    %c3_i32_122 = arith.constant 3 : i32
    %784 = vector.broadcast %c3_i32_122 : i32 to vector<2x1xi32>
    %785 = arith.cmpi sgt, %0, %784 : vector<2x1xi32>
    %786 = vector.extract_strided_slice %783 {offsets = [0, 1], sizes = [2, 1], strides = [1, 1]} : vector<2x2xf32> to vector<2x1xf32>
    %cst_123 = arith.constant 0.000000e+00 : f32
    %787 = vector.broadcast %cst_123 : f32 to vector<2x1xf32>
    %788 = arith.select %785, %786, %787 : vector<2x1xi1>, vector<2x1xf32>
    %c6_124 = arith.constant 6 : index
    %c0_125 = arith.constant 0 : index
    %789 = vector.load %arg10[%c6_124, %c0_125] : memref<16x32xf32, #tpu.memory_space<vmem>>, vector<2x32xf32>
    %790 = vector.broadcast %788 : vector<2x1xf32> to vector<2x32xf32>
    %791 = arith.mulf %790, %789 : vector<2x32xf32>
    %792 = arith.addf %777, %791 : vector<2x32xf32>
    %793 = math.absf %788 : vector<2x1xf32>
    %794 = arith.addf %779, %793 : vector<2x1xf32>
    %795 = arith.addf %401, %616 : vector<2x2xf32>
    %796 = vector.broadcast %528 : vector<2x1xf32> to vector<2x2xf32>
    %797 = arith.subf %795, %796 : vector<2x2xf32>
    %798 = math.exp %797 : vector<2x2xf32>
    %c4_i32_126 = arith.constant 4 : i32
    %799 = vector.broadcast %c4_i32_126 : i32 to vector<2x1xi32>
    %800 = arith.cmpi sgt, %0, %799 : vector<2x1xi32>
    %801 = vector.extract_strided_slice %798 {offsets = [0, 1], sizes = [2, 1], strides = [1, 1]} : vector<2x2xf32> to vector<2x1xf32>
    %cst_127 = arith.constant 0.000000e+00 : f32
    %802 = vector.broadcast %cst_127 : f32 to vector<2x1xf32>
    %803 = arith.select %800, %801, %802 : vector<2x1xi1>, vector<2x1xf32>
    %c8_128 = arith.constant 8 : index
    %c0_129 = arith.constant 0 : index
    %804 = vector.load %arg10[%c8_128, %c0_129] : memref<16x32xf32, #tpu.memory_space<vmem>>, vector<2x32xf32>
    %805 = vector.broadcast %803 : vector<2x1xf32> to vector<2x32xf32>
    %806 = arith.mulf %805, %804 : vector<2x32xf32>
    %807 = arith.addf %792, %806 : vector<2x32xf32>
    %808 = math.absf %803 : vector<2x1xf32>
    %809 = arith.addf %794, %808 : vector<2x1xf32>
    %810 = arith.addf %438, %587 : vector<2x2xf32>
    %811 = vector.broadcast %528 : vector<2x1xf32> to vector<2x2xf32>
    %812 = arith.subf %810, %811 : vector<2x2xf32>
    %813 = math.exp %812 : vector<2x2xf32>
    %c5_i32_130 = arith.constant 5 : i32
    %814 = vector.broadcast %c5_i32_130 : i32 to vector<2x1xi32>
    %815 = arith.cmpi sgt, %0, %814 : vector<2x1xi32>
    %816 = vector.extract_strided_slice %813 {offsets = [0, 1], sizes = [2, 1], strides = [1, 1]} : vector<2x2xf32> to vector<2x1xf32>
    %cst_131 = arith.constant 0.000000e+00 : f32
    %817 = vector.broadcast %cst_131 : f32 to vector<2x1xf32>
    %818 = arith.select %815, %816, %817 : vector<2x1xi1>, vector<2x1xf32>
    %c10_132 = arith.constant 10 : index
    %c0_133 = arith.constant 0 : index
    %819 = vector.load %arg10[%c10_132, %c0_133] : memref<16x32xf32, #tpu.memory_space<vmem>>, vector<2x32xf32>
    %820 = vector.broadcast %818 : vector<2x1xf32> to vector<2x32xf32>
    %821 = arith.mulf %820, %819 : vector<2x32xf32>
    %822 = arith.addf %807, %821 : vector<2x32xf32>
    %823 = math.absf %818 : vector<2x1xf32>
    %824 = arith.addf %809, %823 : vector<2x1xf32>
    %825 = arith.addf %475, %558 : vector<2x2xf32>
    %826 = vector.broadcast %528 : vector<2x1xf32> to vector<2x2xf32>
    %827 = arith.subf %825, %826 : vector<2x2xf32>
    %828 = math.exp %827 : vector<2x2xf32>
    %c6_i32_134 = arith.constant 6 : i32
    %829 = vector.broadcast %c6_i32_134 : i32 to vector<2x1xi32>
    %830 = arith.cmpi sgt, %0, %829 : vector<2x1xi32>
    %831 = vector.extract_strided_slice %828 {offsets = [0, 1], sizes = [2, 1], strides = [1, 1]} : vector<2x2xf32> to vector<2x1xf32>
    %cst_135 = arith.constant 0.000000e+00 : f32
    %832 = vector.broadcast %cst_135 : f32 to vector<2x1xf32>
    %833 = arith.select %830, %831, %832 : vector<2x1xi1>, vector<2x1xf32>
    %c12_136 = arith.constant 12 : index
    %c0_137 = arith.constant 0 : index
    %834 = vector.load %arg10[%c12_136, %c0_137] : memref<16x32xf32, #tpu.memory_space<vmem>>, vector<2x32xf32>
    %835 = vector.broadcast %833 : vector<2x1xf32> to vector<2x32xf32>
    %836 = arith.mulf %835, %834 : vector<2x32xf32>
    %837 = arith.addf %822, %836 : vector<2x32xf32>
    %838 = math.absf %833 : vector<2x1xf32>
    %839 = arith.addf %824, %838 : vector<2x1xf32>
    %840 = arith.addf %512, %529 : vector<2x2xf32>
    %841 = vector.broadcast %528 : vector<2x1xf32> to vector<2x2xf32>
    %842 = arith.subf %840, %841 : vector<2x2xf32>
    %843 = math.exp %842 : vector<2x2xf32>
    %c7_i32_138 = arith.constant 7 : i32
    %844 = vector.broadcast %c7_i32_138 : i32 to vector<2x1xi32>
    %845 = arith.cmpi sgt, %0, %844 : vector<2x1xi32>
    %846 = vector.extract_strided_slice %843 {offsets = [0, 1], sizes = [2, 1], strides = [1, 1]} : vector<2x2xf32> to vector<2x1xf32>
    %cst_139 = arith.constant 0.000000e+00 : f32
    %847 = vector.broadcast %cst_139 : f32 to vector<2x1xf32>
    %848 = arith.select %845, %846, %847 : vector<2x1xi1>, vector<2x1xf32>
    %c14_140 = arith.constant 14 : index
    %c0_141 = arith.constant 0 : index
    %849 = vector.load %arg10[%c14_140, %c0_141] : memref<16x32xf32, #tpu.memory_space<vmem>>, vector<2x32xf32>
    %850 = vector.broadcast %848 : vector<2x1xf32> to vector<2x32xf32>
    %851 = arith.mulf %850, %849 : vector<2x32xf32>
    %852 = arith.addf %837, %851 : vector<2x32xf32>
    %853 = math.absf %848 : vector<2x1xf32>
    %854 = arith.addf %839, %853 : vector<2x1xf32>
    %c0_142 = arith.constant 0 : index
    %c0_143 = arith.constant 0 : index
    %855 = vector.load %arg7[%c0_142, %c0_143] : memref<32x3xf32, #tpu.memory_space<vmem>>, vector<32x3xf32>
    %cst_144 = arith.constant dense<0.000000e+00> : vector<2x3xf32>
    %856 = tpu.matmul %852, %855, %cst_144 {dimension_numbers = #tpu.dot_dimension_numbers<[1], [0], [0], [1], [0, 0, 1, 1], [], []>} : vector<2x32xf32>, vector<32x3xf32>, vector<2x3xf32> -> vector<2x3xf32>
    %c5 = arith.constant 5 : index
    %c0_145 = arith.constant 0 : index
    %857 = vector.load %arg8[%c5, %c0_145] : memref<8x4xf32, #tpu.memory_space<vmem>>, vector<1x3xf32>
    %858 = vector.broadcast %857 : vector<1x3xf32> to vector<2x3xf32>
    %859 = arith.addf %856, %858 : vector<2x3xf32>
    %cst_146 = arith.constant dense<0xFF800000> : vector<2xf32>
    %860 = vector.multi_reduction <maximumf>, %859, %cst_146 [1] : vector<2x3xf32> to vector<2xf32>
    %861 = vector.shape_cast %860 : vector<2xf32> to vector<2x1xf32>
    %862 = vector.broadcast %861 : vector<2x1xf32> to vector<2x3xf32>
    %863 = arith.subf %859, %862 : vector<2x3xf32>
    %864 = math.exp %863 : vector<2x3xf32>
    %cst_147 = arith.constant dense<0.000000e+00> : vector<2xf32>
    %865 = vector.multi_reduction <add>, %864, %cst_147 [1] : vector<2x3xf32> to vector<2xf32>
    %866 = vector.shape_cast %865 : vector<2xf32> to vector<2x1xf32>
    %867 = math.log %866 : vector<2x1xf32>
    %868 = arith.addf %861, %867 : vector<2x1xf32>
    %869 = vector.broadcast %868 : vector<2x1xf32> to vector<2x3xf32>
    %870 = arith.subf %859, %869 : vector<2x3xf32>
    %c0_148 = arith.constant 0 : index
    %c0_149 = arith.constant 0 : index
    %871 = vector.load %arg2[%c0_148, %c0_149] : memref<2x3xf32, #tpu.memory_space<vmem>>, vector<2x3xf32>
    %872 = arith.mulf %871, %870 : vector<2x3xf32>
    %cst_150 = arith.constant dense<0.000000e+00> : vector<2xf32>
    %873 = vector.multi_reduction <add>, %872, %cst_150 [1] : vector<2x3xf32> to vector<2xf32>
    %874 = vector.shape_cast %873 : vector<2xf32> to vector<2x1xf32>
    %cst_151 = arith.constant dense<0.000000e+00> : vector<1xf32>
    %875 = vector.multi_reduction <add>, %874, %cst_151 [0] : vector<2x1xf32> to vector<1xf32>
    %876 = vector.shape_cast %875 : vector<1xf32> to vector<1x1xf32>
    %cst_152 = arith.constant 0.000000e+00 : f32
    %877 = vector.broadcast %cst_152 : f32 to vector<1x1xf32>
    %878 = arith.subf %877, %876 : vector<1x1xf32>
    %cst_153 = arith.constant 2.000000e+00 : f32
    %879 = vector.broadcast %cst_153 : f32 to vector<1x1xf32>
    %880 = arith.divf %878, %879 : vector<1x1xf32>
    %c0_154 = arith.constant 0 : index
    %c0_155 = arith.constant 0 : index
    %881 = vector.load %arg8[%c0_154, %c0_155] : memref<8x4xf32, #tpu.memory_space<vmem>>, vector<1x1xf32>
    %c0_156 = arith.constant 0 : index
    %c1_157 = arith.constant 1 : index
    %882 = vector.load %arg8[%c0_156, %c1_157] : memref<8x4xf32, #tpu.memory_space<vmem>>, vector<1x1xf32>
    %c1_158 = arith.constant 1 : index
    %c0_159 = arith.constant 0 : index
    %883 = vector.load %arg8[%c1_158, %c0_159] : memref<8x4xf32, #tpu.memory_space<vmem>>, vector<1x1xf32>
    %c1_160 = arith.constant 1 : index
    %c1_161 = arith.constant 1 : index
    %884 = vector.load %arg8[%c1_160, %c1_161] : memref<8x4xf32, #tpu.memory_space<vmem>>, vector<1x1xf32>
    %885 = arith.subf %883, %881 : vector<1x1xf32>
    %cst_162 = arith.constant 0.000000e+00 : f32
    %886 = vector.broadcast %cst_162 : f32 to vector<1x1xf32>
    %887 = arith.maximumf %885, %886 : vector<1x1xf32>
    %888 = arith.subf %882, %884 : vector<1x1xf32>
    %cst_163 = arith.constant 0.000000e+00 : f32
    %889 = vector.broadcast %cst_163 : f32 to vector<1x1xf32>
    %890 = arith.maximumf %888, %889 : vector<1x1xf32>
    %891 = arith.addf %887, %890 : vector<1x1xf32>
    %cst_164 = arith.constant dense<0.000000e+00> : vector<1xf32>
    %892 = vector.multi_reduction <add>, %854, %cst_164 [0] : vector<2x1xf32> to vector<1xf32>
    %893 = vector.shape_cast %892 : vector<1xf32> to vector<1x1xf32>
    %cst_165 = arith.constant 2.000000e+00 : f32
    %894 = vector.broadcast %cst_165 : f32 to vector<1x1xf32>
    %895 = arith.divf %893, %894 : vector<1x1xf32>
    %cst_166 = arith.constant 1.000000e+00 : f32
    %896 = vector.broadcast %cst_166 : f32 to vector<1x1xf32>
    %897 = arith.mulf %896, %891 : vector<1x1xf32>
    %cst_167 = arith.constant 2.000000e+00 : f32
    %898 = vector.broadcast %cst_167 : f32 to vector<1x1xf32>
    %899 = arith.divf %897, %898 : vector<1x1xf32>
    %cst_168 = arith.constant 1.000000e+00 : f32
    %900 = vector.broadcast %cst_168 : f32 to vector<1x1xf32>
    %901 = arith.mulf %900, %895 : vector<1x1xf32>
    %902 = arith.addf %899, %901 : vector<1x1xf32>
    %c0_169 = arith.constant 0 : index
    %c0_170 = arith.constant 0 : index
    %903 = vector.load %arg9[%c0_169, %c0_170] : memref<1x2xf32, #tpu.memory_space<vmem>>, vector<1x1xf32>
    tpu.vector_store %arg9[%c0_169, %c0_170], %880 {strides = array<i32>} : memref<1x2xf32, #tpu.memory_space<vmem>>, vector<1x1xf32>,
    %c0_171 = arith.constant 0 : index
    %c1_172 = arith.constant 1 : index
    %904 = vector.load %arg9[%c0_171, %c1_172] : memref<1x2xf32, #tpu.memory_space<vmem>>, vector<1x1xf32>
    tpu.vector_store %arg9[%c0_171, %c1_172], %902 {strides = array<i32>} : memref<1x2xf32, #tpu.memory_space<vmem>>, vector<1x1xf32>,
    return
  }
  func.func @transform_0(%arg0: i32) -> (i32, i32) {
    %c0_i32 = arith.constant 0 : i32
    %c0_i32_0 = arith.constant 0 : i32
    %c0_i32_1 = arith.constant 0 : i32
    return %c0_i32, %c0_i32_0 : i32, i32
  }
  func.func @transform_1(%arg0: i32) -> (i32, i32) {
    %c0_i32 = arith.constant 0 : i32
    %c0_i32_0 = arith.constant 0 : i32
    %c0_i32_1 = arith.constant 0 : i32
    return %c0_i32, %c0_i32_0 : i32, i32
  }
  func.func @transform_2(%arg0: i32) -> (i32, i32) {
    %c0_i32 = arith.constant 0 : i32
    %c0_i32_0 = arith.constant 0 : i32
    %c0_i32_1 = arith.constant 0 : i32
    return %c0_i32, %c0_i32_0 : i32, i32
  }
  func.func @transform_3(%arg0: i32) -> (i32, i32) {
    %c0_i32 = arith.constant 0 : i32
    %c0_i32_0 = arith.constant 0 : i32
    %c0_i32_1 = arith.constant 0 : i32
    return %c0_i32, %c0_i32_0 : i32, i32
  }
  func.func @transform_4(%arg0: i32) -> (i32, i32) {
    %c0_i32 = arith.constant 0 : i32
    %c0_i32_0 = arith.constant 0 : i32
    %c0_i32_1 = arith.constant 0 : i32
    return %c0_i32, %c0_i32_0 : i32, i32
  }
  func.func @transform_5(%arg0: i32) -> (i32, i32) {
    %c0_i32 = arith.constant 0 : i32
    %c0_i32_0 = arith.constant 0 : i32
    %c0_i32_1 = arith.constant 0 : i32
    return %c0_i32, %c0_i32_0 : i32, i32
  }
  func.func @transform_6(%arg0: i32) -> (i32, i32) {
    %c0_i32 = arith.constant 0 : i32
    %c0_i32_0 = arith.constant 0 : i32
    %c0_i32_1 = arith.constant 0 : i32
    return %c0_i32, %c0_i32_0 : i32, i32
  }
  func.func @transform_7(%arg0: i32) -> (i32, i32) {
    %c0_i32 = arith.constant 0 : i32
    %c0_i32_0 = arith.constant 0 : i32
    %c0_i32_1 = arith.constant 0 : i32
    return %c0_i32, %c0_i32_0 : i32, i32
  }
  func.func @transform_8(%arg0: i32) -> (i32, i32) {
    %c0_i32 = arith.constant 0 : i32
    %c0_i32_0 = arith.constant 0 : i32
    %c0_i32_1 = arith.constant 0 : i32
    return %c0_i32, %c0_i32_0 : i32, i32
  }
}

</mosaic_0001>

<llo_original>
// kernel: srnn_forward.1
$region0: #{srnn_forward.1}
  #allocation0 [shape = 'u32[]', space=smem, size = 0x4, offset = 0x4, fixed_abs, tag = 'smem constant byte address 0x4 - core index']
  #allocation1 [shape = 'u32[144,128]{1,0:T(1,128)}', space=vmem, size = 0x12000, scoped, tag = 'internal scratch']
  #allocation2 [shape = 'f32[16,32]{1,0:T(8,128)}', space=vmem, size = 0x2000, scoped, tag = 'scratch operand']
  %s0 = inlined_call_operand.vmem [shape: s32[2,1], index: 0, kind: input, shape index: {}]
  %s1 = inlined_call_operand.vmem [shape: f32[2,3], index: 1, kind: input, shape index: {}]
  %s2 = inlined_call_operand.vmem [shape: f32[16,32], index: 2, kind: input, shape index: {}]
  %s3 = inlined_call_operand.vmem [shape: f32[64,128], index: 3, kind: input, shape index: {}]
  %s4 = inlined_call_operand.vmem [shape: f32[1,128], index: 4, kind: input, shape index: {}]
  %s5 = inlined_call_operand.vmem [shape: f32[32,2], index: 5, kind: input, shape index: {}]
  %s6 = inlined_call_operand.vmem [shape: f32[32,3], index: 6, kind: input, shape index: {}]
  %s7 = inlined_call_operand.vmem [shape: f32[8,4], index: 7, kind: input, shape index: {}]
  %s8 = inlined_call_operand.vmem [shape: f32[1,2], index: 8, kind: output, shape index: {}]
  %s9 = sld [smem:[#allocation0]]
  $region42: #{srnn_forward.1} parent=0
    _
  %s11 = ssub.s32 1, %s9
  %s12 = scalar_select 0, %s11, %s9
  // Predicated region
  $region2: #{srnn_forward.1} parent=0 // pred_check
    _
  $region3: #{srnn_forward.1} parent=0 // pred_check_branch
    %14 = sbr.rel (0) target = $region5
  $region4: #{srnn_forward.1} parent=0 // pred_region
    _
  $region5: #{srnn_forward.1} parent=0 // pred_fallthru
    _
  // Predicated region
  $region6: #{srnn_forward.1} parent=0 // pred_check
    _
  $region7: #{srnn_forward.1} parent=0 // pred_check_branch
    %16 = sbr.rel (0) target = $region9
  $region8: #{srnn_forward.1} parent=0 // pred_region
    _
  $region9: #{srnn_forward.1} parent=0 // pred_fallthru
    _
  // Predicated region
  $region10: #{srnn_forward.1} parent=0 // pred_check
    _
  $region11: #{srnn_forward.1} parent=0 // pred_check_branch
    %18 = sbr.rel (0) target = $region13
  $region12: #{srnn_forward.1} parent=0 // pred_region
    _
  $region13: #{srnn_forward.1} parent=0 // pred_fallthru
    _
  // Predicated region
  $region14: #{srnn_forward.1} parent=0 // pred_check
    _
  $region15: #{srnn_forward.1} parent=0 // pred_check_branch
    %20 = sbr.rel (0) target = $region17
  $region16: #{srnn_forward.1} parent=0 // pred_region
    _
  $region17: #{srnn_forward.1} parent=0 // pred_fallthru
    _
  // Predicated region
  $region18: #{srnn_forward.1} parent=0 // pred_check
    _
  $region19: #{srnn_forward.1} parent=0 // pred_check_branch
    %22 = sbr.rel (0) target = $region21
  $region20: #{srnn_forward.1} parent=0 // pred_region
    _
  $region21: #{srnn_forward.1} parent=0 // pred_fallthru
    _
  // Predicated region
  $region22: #{srnn_forward.1} parent=0 // pred_check
    _
  $region23: #{srnn_forward.1} parent=0 // pred_check_branch
    %24 = sbr.rel (0) target = $region25
  $region24: #{srnn_forward.1} parent=0 // pred_region
    _
  $region25: #{srnn_forward.1} parent=0 // pred_fallthru
    _
  // Predicated region
  $region26: #{srnn_forward.1} parent=0 // pred_check
    _
  $region27: #{srnn_forward.1} parent=0 // pred_check_branch
    %26 = sbr.rel (0) target = $region29
  $region28: #{srnn_forward.1} parent=0 // pred_region
    _
  $region29: #{srnn_forward.1} parent=0 // pred_fallthru
    _
  // Predicated region
  $region30: #{srnn_forward.1} parent=0 // pred_check
    _
  $region31: #{srnn_forward.1} parent=0 // pred_check_branch
    %28 = sbr.rel (0) target = $region33
  $region32: #{srnn_forward.1} parent=0 // pred_region
    _
  $region33: #{srnn_forward.1} parent=0 // pred_fallthru
    _
  %v29 = vld [vmem:[%s0] sm:$0x3]
  %v30 = vld [vmem:[%s2] sm:$0xff]
  %v31 = vld [vmem:[%s2 + $0x8] sm:$0xff]
  %v32 = vld [vmem:[%s3] sm:$0xff]
  %v33 = vld [vmem:[%s3 + $0x8] sm:$0xff]
  %v34 = vld [vmem:[%s3 + $0x10] sm:$0xff]
  %v35 = vld [vmem:[%s3 + $0x18] sm:$0xff]
  %v36 = vld [vmem:[%s4] sm:$0x1]
  %v38 = vlaneseq
  %v39 = vshrl.u32 %v38, 7
  %v40 = vsub.s32 0, %v39
  %v41 = vrot.slane %v36, %v40
  %vm43 = vcmask 261120
  %v45 = vsel %vm43, %v30, 0
  %v48 = vsel %vm43, %v31, 0
  %50 = vmatprep.subr.mxu0 0.0
  %51 = vmatpush1.msra.mxu0 %v32
  %52 = vmatprep.subr.mxu0 0.0
  %53 = vmatpush1.msra.mxu0 %v33
  %54 = vmatprep.subr.mxu0 0.0
  %55 = vmatpush1.msra.mxu0 %v34
  %56 = vmatprep.subr.mxu0 0.0
  %57 = vmatpush1.msra.mxu0 %v35
  %58 = vmatprep.subr.mxu0 0.0
  %59 = vmatpush1.msra.mxu0 0.0
  %60 = vmatprep.subr.mxu0 0.0
  %61 = vmatpush1.msra.mxu0 0.0
  %62 = vmatprep.subr.mxu0 0.0
  %63 = vmatpush1.msra.mxu0 0.0
  %64 = vmatprep.subr.mxu0 0.0
  %65 = vmatpush1.msra.mxu0 0.0
  %66 = vmatprep.subr.mxu0 0.0
  %67 = vmatpush1.msra.mxu0 0.0
  %68 = vmatprep.subr.mxu0 0.0
  %69 = vmatpush1.msra.mxu0 0.0
  %70 = vmatprep.subr.mxu0 0.0
  %71 = vmatpush1.msra.mxu0 0.0
  %72 = vmatprep.subr.mxu0 0.0
  %73 = vmatpush1.msra.mxu0 0.0
  %74 = vmatprep.subr.mxu0 0.0
  %75 = vmatpush1.msra.mxu0 0.0
  %76 = vmatprep.subr.mxu0 0.0
  %77 = vmatpush1.msra.mxu0 0.0
  %78 = vmatprep.subr.mxu0 0.0
  %79 = vmatpush1.msra.mxu0 0.0
  %80 = vmatprep.subr.mxu0 0.0
  %81 = vmatpush1.msra.mxu0 0.0
  %82 = vmatprep.subr.mxu0 0.0
  %83 = vmatpush1.msra.mxu0 0.0
  %84 = vmatprep.subr.mxu0 0.0
  %85 = vmatpush1.msra.mxu0 0.0
  %86 = vmatprep.subr.mxu0 0.0
  %87 = vmatpush1.msra.mxu0 0.0
  %88 = vmatprep.subr.mxu0 0.0
  %89 = vmatpush1.msra.mxu0 0.0
  %90 = vmatprep.subr.mxu0 0.0
  %91 = vmatpush1.msra.mxu0 0.0
  %92 = vmatprep.subr.mxu0 0.0
  %93 = vmatpush1.msra.mxu0 0.0
  %94 = vmatprep.subr.mxu0 0.0
  %95 = vmatpush1.msra.mxu0 0.0
  %96 = vmatprep.subr.mxu0 0.0
  %97 = vmatpush1.msra.mxu0 0.0
  %98 = vmatprep.subr.mxu0 0.0
  %99 = vmatpush1.msra.mxu0 0.0
  %100 = vmatprep.subr.mxu0 0.0
  %101 = vmatpush1.msra.mxu0 0.0
  %102 = vmatprep.subr.mxu0 0.0
  %103 = vmatpush1.msra.mxu0 0.0
  %104 = vmatprep.subr.mxu0 0.0
  %105 = vmatpush1.msra.mxu0 0.0
  %106 = vmatprep.subr.mxu0 0.0
  %107 = vmatpush1.msra.mxu0 0.0
  %108 = vmatprep.subr.mxu0 0.0
  %109 = vmatpush1.msra.mxu0 0.0
  %110 = vmatprep.subr.mxu0 0.0
  %111 = vmatpush1.msra.mxu0 0.0
  %112 = vmatprep.subr.mxu0 0.0
  %113 = vmatpush1.msra.mxu0 0.0
  %114 = vmatprep.mubr.f32.mxu0 0.0
  %115 = vmatmul.mubr.f32.gmra.mrb[0].mxu0 %v45
  %v116 = vpop.f32.mrb[0].mxu0
  %v117 = vadd.f32 %v41, %v116
  %v118 = vpop.f32.mrb[0].mxu0
  %119 = vmatprep.mubr.f32.mxu0 0.0
  %120 = vmatmul.mubr.f32.gmra.mrb[0].mxu0 %v48
  %v121 = vpop.f32.mrb[0].mxu0
  %v122 = vadd.f32 %v41, %v121
  %v123 = vpop.f32.mrb[0].mxu0
  %124 = vdwg.mxu0
  %v125 = vld [vmem:[%s3 + $0x20] sm:$0xff]
  %v126 = vld [vmem:[%s3 + $0x28] sm:$0xff]
  %v127 = vld [vmem:[%s3 + $0x30] sm:$0xff]
  %v128 = vld [vmem:[%s3 + $0x38] sm:$0xff]
  %v130 = vsel %vm43, 0.0, 0
  %132 = vmatprep.subr.mxu0 0.0
  %133 = vmatpush1.msra.mxu0 %v125
  %134 = vmatprep.subr.mxu0 0.0
  %135 = vmatpush1.msra.mxu0 %v126
  %136 = vmatprep.subr.mxu0 0.0
  %137 = vmatpush1.msra.mxu0 %v127
  %138 = vmatprep.subr.mxu0 0.0
  %139 = vmatpush1.msra.mxu0 %v128
  %140 = vmatprep.subr.mxu0 0.0
  %141 = vmatpush1.msra.mxu0 0.0
  %142 = vmatprep.subr.mxu0 0.0
  %143 = vmatpush1.msra.mxu0 0.0
  %144 = vmatprep.subr.mxu0 0.0
  %145 = vmatpush1.msra.mxu0 0.0
  %146 = vmatprep.subr.mxu0 0.0
  %147 = vmatpush1.msra.mxu0 0.0
  %148 = vmatprep.subr.mxu0 0.0
  %149 = vmatpush1.msra.mxu0 0.0
  %150 = vmatprep.subr.mxu0 0.0
  %151 = vmatpush1.msra.mxu0 0.0
  %152 = vmatprep.subr.mxu0 0.0
  %153 = vmatpush1.msra.mxu0 0.0
  %154 = vmatprep.subr.mxu0 0.0
  %155 = vmatpush1.msra.mxu0 0.0
  %156 = vmatprep.subr.mxu0 0.0
  %157 = vmatpush1.msra.mxu0 0.0
  %158 = vmatprep.subr.mxu0 0.0
  %159 = vmatpush1.msra.mxu0 0.0
  %160 = vmatprep.subr.mxu0 0.0
  %161 = vmatpush1.msra.mxu0 0.0
  %162 = vmatprep.subr.mxu0 0.0
  %163 = vmatpush1.msra.mxu0 0.0
  %164 = vmatprep.subr.mxu0 0.0
  %165 = vmatpush1.msra.mxu0 0.0
  %166 = vmatprep.subr.mxu0 0.0
  %167 = vmatpush1.msra.mxu0 0.0
  %168 = vmatprep.subr.mxu0 0.0
  %169 = vmatpush1.msra.mxu0 0.0
  %170 = vmatprep.subr.mxu0 0.0
  %171 = vmatpush1.msra.mxu0 0.0
  %172 = vmatprep.subr.mxu0 0.0
  %173 = vmatpush1.msra.mxu0 0.0
  %174 = vmatprep.subr.mxu0 0.0
  %175 = vmatpush1.msra.mxu0 0.0
  %176 = vmatprep.subr.mxu0 0.0
  %177 = vmatpush1.msra.mxu0 0.0
  %178 = vmatprep.subr.mxu0 0.0
  %179 = vmatpush1.msra.mxu0 0.0
  %180 = vmatprep.subr.mxu0 0.0
  %181 = vmatpush1.msra.mxu0 0.0
  %182 = vmatprep.subr.mxu0 0.0
  %183 = vmatpush1.msra.mxu0 0.0
  %184 = vmatprep.subr.mxu0 0.0
  %185 = vmatpush1.msra.mxu0 0.0
  %186 = vmatprep.subr.mxu0 0.0
  %187 = vmatpush1.msra.mxu0 0.0
  %188 = vmatprep.subr.mxu0 0.0
  %189 = vmatpush1.msra.mxu0 0.0
  %190 = vmatprep.subr.mxu0 0.0
  %191 = vmatpush1.msra.mxu0 0.0
  %192 = vmatprep.subr.mxu0 0.0
  %193 = vmatpush1.msra.mxu0 0.0
  %194 = vmatprep.subr.mxu0 0.0
  %195 = vmatpush1.msra.mxu0 0.0
  %196 = vmatprep.mubr.f32.mxu0 0.0
  %197 = vmatmul.mubr.f32.gmra.mrb[0].mxu0 %v130
  %v198 = vpop.f32.mrb[0].mxu0
  %v199 = vadd.f32 0.0, %v198
  %v200 = vpop.f32.mrb[0].mxu0
  %201 = vdwg.mxu0
  %v202 = vadd.f32 %v117, %v199
  %v203 = vxor.u32 %v202, 2147483648
  %v204 = vmul.f32 %v203, 1.442695
  %v205 = vpow.pop %v204
  %v206 = vadd.f32 %v205, 1.0
  %v207 = vrcp.pop %v206
  %v208 = vmul.f32 1.0, %v207
  %v209 = vtanh.pop %v202
  %v210 = vmul.f32 %v208, 0.0
  %212 = vrot.lane.b32.xlu0 %v209, 64
  %v213 = vpop.permute.xlu0 %212
  %v215 = vmul.f32 %v208, %v213
  %217 = vrot.lane.b32.xlu0 %v215, 32
  %v218 = vpop.permute.xlu0 %217
  %v220 = vadd.f32 %v210, %v218
  %v221 = vtanh.pop %v220
  %223 = vrot.lane.b32.xlu0 %v221, 64
  %v224 = vpop.permute.xlu0 %223
  %v226 = vmul.f32 %v208, %v224
  %228 = vrot.lane.b32.xlu0 %v226, 32
  %v229 = vpop.permute.xlu0 %228
  %vm231 = vcmask 254976
  %232 = vst.msk [vmem:[#allocation2] sm:$0x3] %vm231, %v229
  %v233 = vsel %vm43, %v229, 0
  %235 = vmatprep.subr.mxu0 0.0
  %236 = vmatpush1.msra.mxu0 %v125
  %237 = vmatprep.subr.mxu0 0.0
  %238 = vmatpush1.msra.mxu0 %v126
  %239 = vmatprep.subr.mxu0 0.0
  %240 = vmatpush1.msra.mxu0 %v127
  %241 = vmatprep.subr.mxu0 0.0
  %242 = vmatpush1.msra.mxu0 %v128
  %243 = vmatprep.subr.mxu0 0.0
  %244 = vmatpush1.msra.mxu0 0.0
  %245 = vmatprep.subr.mxu0 0.0
  %246 = vmatpush1.msra.mxu0 0.0
  %247 = vmatprep.subr.mxu0 0.0
  %248 = vmatpush1.msra.mxu0 0.0
  %249 = vmatprep.subr.mxu0 0.0
  %250 = vmatpush1.msra.mxu0 0.0
  %251 = vmatprep.subr.mxu0 0.0
  %252 = vmatpush1.msra.mxu0 0.0
  %253 = vmatprep.subr.mxu0 0.0
  %254 = vmatpush1.msra.mxu0 0.0
  %255 = vmatprep.subr.mxu0 0.0
  %256 = vmatpush1.msra.mxu0 0.0
  %257 = vmatprep.subr.mxu0 0.0
  %258 = vmatpush1.msra.mxu0 0.0
  %259 = vmatprep.subr.mxu0 0.0
  %260 = vmatpush1.msra.mxu0 0.0
  %261 = vmatprep.subr.mxu0 0.0
  %262 = vmatpush1.msra.mxu0 0.0
  %263 = vmatprep.subr.mxu0 0.0
  %264 = vmatpush1.msra.mxu0 0.0
  %265 = vmatprep.subr.mxu0 0.0
  %266 = vmatpush1.msra.mxu0 0.0
  %267 = vmatprep.subr.mxu0 0.0
  %268 = vmatpush1.msra.mxu0 0.0
  %269 = vmatprep.subr.mxu0 0.0
  %270 = vmatpush1.msra.mxu0 0.0
  %271 = vmatprep.subr.mxu0 0.0
  %272 = vmatpush1.msra.mxu0 0.0
  %273 = vmatprep.subr.mxu0 0.0
  %274 = vmatpush1.msra.mxu0 0.0
  %275 = vmatprep.subr.mxu0 0.0
  %276 = vmatpush1.msra.mxu0 0.0
  %277 = vmatprep.subr.mxu0 0.0
  %278 = vmatpush1.msra.mxu0 0.0
  %279 = vmatprep.subr.mxu0 0.0
  %280 = vmatpush1.msra.mxu0 0.0
  %281 = vmatprep.subr.mxu0 0.0
  %282 = vmatpush1.msra.mxu0 0.0
  %283 = vmatprep.subr.mxu0 0.0
  %284 = vmatpush1.msra.mxu0 0.0
  %285 = vmatprep.subr.mxu0 0.0
  %286 = vmatpush1.msra.mxu0 0.0
  %287 = vmatprep.subr.mxu0 0.0
  %288 = vmatpush1.msra.mxu0 0.0
  %289 = vmatprep.subr.mxu0 0.0
  %290 = vmatpush1.msra.mxu0 0.0
  %291 = vmatprep.subr.mxu0 0.0
  %292 = vmatpush1.msra.mxu0 0.0
  %293 = vmatprep.subr.mxu0 0.0
  %294 = vmatpush1.msra.mxu0 0.0
  %295 = vmatprep.subr.mxu0 0.0
  %296 = vmatpush1.msra.mxu0 0.0
  %297 = vmatprep.subr.mxu0 0.0
  %298 = vmatpush1.msra.mxu0 0.0
  %299 = vmatprep.mubr.f32.mxu0 0.0
  %300 = vmatmul.mubr.f32.gmra.mrb[0].mxu0 %v233
  %v301 = vpop.f32.mrb[0].mxu0
  %v302 = vadd.f32 0.0, %v301
  %v303 = vpop.f32.mrb[0].mxu0
  %304 = vdwg.mxu0
  %v306 = vrot.slane %v302, 6
  %v308 = vadd.f32 %v117, %v306
  %v309 = vxor.u32 %v308, 2147483648
  %v310 = vmul.f32 %v309, 1.442695
  %v311 = vpow.pop %v310
  %v312 = vadd.f32 %v311, 1.0
  %v313 = vrcp.pop %v312
  %v314 = vmul.f32 1.0, %v313
  %v315 = vtanh.pop %v308
  %v317 = vrot.slane %v220, 6
  %v319 = vmul.f32 %v314, %v317
  %321 = vrot.lane.b32.xlu0 %v315, 64
  %v322 = vpop.permute.xlu0 %321
  %v324 = vmul.f32 %v314, %v322
  %326 = vrot.lane.b32.xlu0 %v324, 32
  %v327 = vpop.permute.xlu0 %326
  %v329 = vadd.f32 %v319, %v327
  %v330 = vtanh.pop %v329
  %332 = vrot.lane.b32.xlu0 %v330, 64
  %v333 = vpop.permute.xlu0 %332
  %v335 = vmul.f32 %v314, %v333
  %337 = vrot.lane.b32.xlu0 %v335, 32
  %v338 = vpop.permute.xlu0 %337
  %vm340 = vcmask 257026
  %341 = vst.msk [vmem:[#allocation2] sm:$0xc] %vm340, %v338
  %v342 = vrot.slane %v335, 2
  %343 = vrot.lane.b32.xlu0 %v342, 32
  %v344 = vpop.permute.xlu0 %343
  %v345 = vsel %vm43, %v344, 0
  %347 = vmatprep.subr.mxu0 0.0
  %348 = vmatpush1.msra.mxu0 %v125
  %349 = vmatprep.subr.mxu0 0.0
  %350 = vmatpush1.msra.mxu0 %v126
  %351 = vmatprep.subr.mxu0 0.0
  %352 = vmatpush1.msra.mxu0 %v127
  %353 = vmatprep.subr.mxu0 0.0
  %354 = vmatpush1.msra.mxu0 %v128
  %355 = vmatprep.subr.mxu0 0.0
  %356 = vmatpush1.msra.mxu0 0.0
  %357 = vmatprep.subr.mxu0 0.0
  %358 = vmatpush1.msra.mxu0 0.0
  %359 = vmatprep.subr.mxu0 0.0
  %360 = vmatpush1.msra.mxu0 0.0
  %361 = vmatprep.subr.mxu0 0.0
  %362 = vmatpush1.msra.mxu0 0.0
  %363 = vmatprep.subr.mxu0 0.0
  %364 = vmatpush1.msra.mxu0 0.0
  %365 = vmatprep.subr.mxu0 0.0
  %366 = vmatpush1.msra.mxu0 0.0
  %367 = vmatprep.subr.mxu0 0.0
  %368 = vmatpush1.msra.mxu0 0.0
  %369 = vmatprep.subr.mxu0 0.0
  %370 = vmatpush1.msra.mxu0 0.0
  %371 = vmatprep.subr.mxu0 0.0
  %372 = vmatpush1.msra.mxu0 0.0
  %373 = vmatprep.subr.mxu0 0.0
  %374 = vmatpush1.msra.mxu0 0.0
  %375 = vmatprep.subr.mxu0 0.0
  %376 = vmatpush1.msra.mxu0 0.0
  %377 = vmatprep.subr.mxu0 0.0
  %378 = vmatpush1.msra.mxu0 0.0
  %379 = vmatprep.subr.mxu0 0.0
  %380 = vmatpush1.msra.mxu0 0.0
  %381 = vmatprep.subr.mxu0 0.0
  %382 = vmatpush1.msra.mxu0 0.0
  %383 = vmatprep.subr.mxu0 0.0
  %384 = vmatpush1.msra.mxu0 0.0
  %385 = vmatprep.subr.mxu0 0.0
  %386 = vmatpush1.msra.mxu0 0.0
  %387 = vmatprep.subr.mxu0 0.0
  %388 = vmatpush1.msra.mxu0 0.0
  %389 = vmatprep.subr.mxu0 0.0
  %390 = vmatpush1.msra.mxu0 0.0
  %391 = vmatprep.subr.mxu0 0.0
  %392 = vmatpush1.msra.mxu0 0.0
  %393 = vmatprep.subr.mxu0 0.0
  %394 = vmatpush1.msra.mxu0 0.0
  %395 = vmatprep.subr.mxu0 0.0
  %396 = vmatpush1.msra.mxu0 0.0
  %397 = vmatprep.subr.mxu0 0.0
  %398 = vmatpush1.msra.mxu0 0.0
  %399 = vmatprep.subr.mxu0 0.0
  %400 = vmatpush1.msra.mxu0 0.0
  %401 = vmatprep.subr.mxu0 0.0
  %402 = vmatpush1.msra.mxu0 0.0
  %403 = vmatprep.subr.mxu0 0.0
  %404 = vmatpush1.msra.mxu0 0.0
  %405 = vmatprep.subr.mxu0 0.0
  %406 = vmatpush1.msra.mxu0 0.0
  %407 = vmatprep.subr.mxu0 0.0
  %408 = vmatpush1.msra.mxu0 0.0
  %409 = vmatprep.subr.mxu0 0.0
  %410 = vmatpush1.msra.mxu0 0.0
  %411 = vmatprep.mubr.f32.mxu0 0.0
  %412 = vmatmul.mubr.f32.gmra.mrb[0].mxu0 %v345
  %v413 = vpop.f32.mrb[0].mxu0
  %v414 = vadd.f32 0.0, %v413
  %v415 = vpop.f32.mrb[0].mxu0
  %416 = vdwg.mxu0
  %v418 = vrot.slane %v414, 4
  %v420 = vadd.f32 %v117, %v418
  %v421 = vxor.u32 %v420, 2147483648
  %v422 = vmul.f32 %v421, 1.442695
  %v423 = vpow.pop %v422
  %v424 = vadd.f32 %v423, 1.0
  %v425 = vrcp.pop %v424
  %v426 = vmul.f32 1.0, %v425
  %v427 = vtanh.pop %v420
  %v429 = vrot.slane %v329, 6
  %v431 = vmul.f32 %v426, %v429
  %433 = vrot.lane.b32.xlu0 %v427, 64
  %v434 = vpop.permute.xlu0 %433
  %v436 = vmul.f32 %v426, %v434
  %438 = vrot.lane.b32.xlu0 %v436, 32
  %v439 = vpop.permute.xlu0 %438
  %v441 = vadd.f32 %v431, %v439
  %v442 = vtanh.pop %v441
  %444 = vrot.lane.b32.xlu0 %v442, 64
  %v445 = vpop.permute.xlu0 %444
  %v447 = vmul.f32 %v426, %v445
  %449 = vrot.lane.b32.xlu0 %v447, 32
  %v450 = vpop.permute.xlu0 %449
  %vm452 = vcmask 259076
  %453 = vst.msk [vmem:[#allocation2] sm:$0x30] %vm452, %v450
  %v454 = vrot.slane %v447, 4
  %455 = vrot.lane.b32.xlu0 %v454, 32
  %v456 = vpop.permute.xlu0 %455
  %v457 = vsel %vm43, %v456, 0
  %459 = vmatprep.subr.mxu0 0.0
  %460 = vmatpush1.msra.mxu0 %v125
  %461 = vmatprep.subr.mxu0 0.0
  %462 = vmatpush1.msra.mxu0 %v126
  %463 = vmatprep.subr.mxu0 0.0
  %464 = vmatpush1.msra.mxu0 %v127
  %465 = vmatprep.subr.mxu0 0.0
  %466 = vmatpush1.msra.mxu0 %v128
  %467 = vmatprep.subr.mxu0 0.0
  %468 = vmatpush1.msra.mxu0 0.0
  %469 = vmatprep.subr.mxu0 0.0
  %470 = vmatpush1.msra.mxu0 0.0
  %471 = vmatprep.subr.mxu0 0.0
  %472 = vmatpush1.msra.mxu0 0.0
  %473 = vmatprep.subr.mxu0 0.0
  %474 = vmatpush1.msra.mxu0 0.0
  %475 = vmatprep.subr.mxu0 0.0
  %476 = vmatpush1.msra.mxu0 0.0
  %477 = vmatprep.subr.mxu0 0.0
  %478 = vmatpush1.msra.mxu0 0.0
  %479 = vmatprep.subr.mxu0 0.0
  %480 = vmatpush1.msra.mxu0 0.0
  %481 = vmatprep.subr.mxu0 0.0
  %482 = vmatpush1.msra.mxu0 0.0
  %483 = vmatprep.subr.mxu0 0.0
  %484 = vmatpush1.msra.mxu0 0.0
  %485 = vmatprep.subr.mxu0 0.0
  %486 = vmatpush1.msra.mxu0 0.0
  %487 = vmatprep.subr.mxu0 0.0
  %488 = vmatpush1.msra.mxu0 0.0
  %489 = vmatprep.subr.mxu0 0.0
  %490 = vmatpush1.msra.mxu0 0.0
  %491 = vmatprep.subr.mxu0 0.0
  %492 = vmatpush1.msra.mxu0 0.0
  %493 = vmatprep.subr.mxu0 0.0
  %494 = vmatpush1.msra.mxu0 0.0
  %495 = vmatprep.subr.mxu0 0.0
  %496 = vmatpush1.msra.mxu0 0.0
  %497 = vmatprep.subr.mxu0 0.0
  %498 = vmatpush1.msra.mxu0 0.0
  %499 = vmatprep.subr.mxu0 0.0
  %500 = vmatpush1.msra.mxu0 0.0
  %501 = vmatprep.subr.mxu0 0.0
  %502 = vmatpush1.msra.mxu0 0.0
  %503 = vmatprep.subr.mxu0 0.0
  %504 = vmatpush1.msra.mxu0 0.0
  %505 = vmatprep.subr.mxu0 0.0
  %506 = vmatpush1.msra.mxu0 0.0
  %507 = vmatprep.subr.mxu0 0.0
  %508 = vmatpush1.msra.mxu0 0.0
  %509 = vmatprep.subr.mxu0 0.0
  %510 = vmatpush1.msra.mxu0 0.0
  %511 = vmatprep.subr.mxu0 0.0
  %512 = vmatpush1.msra.mxu0 0.0
  %513 = vmatprep.subr.mxu0 0.0
  %514 = vmatpush1.msra.mxu0 0.0
  %515 = vmatprep.subr.mxu0 0.0
  %516 = vmatpush1.msra.mxu0 0.0
  %517 = vmatprep.subr.mxu0 0.0
  %518 = vmatpush1.msra.mxu0 0.0
  %519 = vmatprep.subr.mxu0 0.0
  %520 = vmatpush1.msra.mxu0 0.0
  %521 = vmatprep.subr.mxu0 0.0
  %522 = vmatpush1.msra.mxu0 0.0
  %523 = vmatprep.mubr.f32.mxu0 0.0
  %524 = vmatmul.mubr.f32.gmra.mrb[0].mxu0 %v457
  %v525 = vpop.f32.mrb[0].mxu0
  %v526 = vadd.f32 0.0, %v525
  %v527 = vpop.f32.mrb[0].mxu0
  %528 = vdwg.mxu0
  %v530 = vrot.slane %v526, 2
  %v532 = vadd.f32 %v117, %v530
  %v533 = vxor.u32 %v532, 2147483648
  %v534 = vmul.f32 %v533, 1.442695
  %v535 = vpow.pop %v534
  %v536 = vadd.f32 %v535, 1.0
  %v537 = vrcp.pop %v536
  %v538 = vmul.f32 1.0, %v537
  %v539 = vtanh.pop %v532
  %v541 = vrot.slane %v441, 6
  %v543 = vmul.f32 %v538, %v541
  %545 = vrot.lane.b32.xlu0 %v539, 64
  %v546 = vpop.permute.xlu0 %545
  %v548 = vmul.f32 %v538, %v546
  %550 = vrot.lane.b32.xlu0 %v548, 32
  %v551 = vpop.permute.xlu0 %550
  %v553 = vadd.f32 %v543, %v551
  %v554 = vtanh.pop %v553
  %556 = vrot.lane.b32.xlu0 %v554, 64
  %v557 = vpop.permute.xlu0 %556
  %v559 = vmul.f32 %v538, %v557
  %561 = vrot.lane.b32.xlu0 %v559, 32
  %v562 = vpop.permute.xlu0 %561
  %vm564 = vcmask 261126
  %565 = vst.msk [vmem:[#allocation2] sm:$0xc0] %vm564, %v562
  %v566 = vrot.slane %v559, 6
  %567 = vrot.lane.b32.xlu0 %v566, 32
  %v568 = vpop.permute.xlu0 %567
  %v569 = vsel %vm43, %v568, 0
  %571 = vmatprep.subr.mxu0 0.0
  %572 = vmatpush1.msra.mxu0 %v125
  %573 = vmatprep.subr.mxu0 0.0
  %574 = vmatpush1.msra.mxu0 %v126
  %575 = vmatprep.subr.mxu0 0.0
  %576 = vmatpush1.msra.mxu0 %v127
  %577 = vmatprep.subr.mxu0 0.0
  %578 = vmatpush1.msra.mxu0 %v128
  %579 = vmatprep.subr.mxu0 0.0
  %580 = vmatpush1.msra.mxu0 0.0
  %581 = vmatprep.subr.mxu0 0.0
  %582 = vmatpush1.msra.mxu0 0.0
  %583 = vmatprep.subr.mxu0 0.0
  %584 = vmatpush1.msra.mxu0 0.0
  %585 = vmatprep.subr.mxu0 0.0
  %586 = vmatpush1.msra.mxu0 0.0
  %587 = vmatprep.subr.mxu0 0.0
  %588 = vmatpush1.msra.mxu0 0.0
  %589 = vmatprep.subr.mxu0 0.0
  %590 = vmatpush1.msra.mxu0 0.0
  %591 = vmatprep.subr.mxu0 0.0
  %592 = vmatpush1.msra.mxu0 0.0
  %593 = vmatprep.subr.mxu0 0.0
  %594 = vmatpush1.msra.mxu0 0.0
  %595 = vmatprep.subr.mxu0 0.0
  %596 = vmatpush1.msra.mxu0 0.0
  %597 = vmatprep.subr.mxu0 0.0
  %598 = vmatpush1.msra.mxu0 0.0
  %599 = vmatprep.subr.mxu0 0.0
  %600 = vmatpush1.msra.mxu0 0.0
  %601 = vmatprep.subr.mxu0 0.0
  %602 = vmatpush1.msra.mxu0 0.0
  %603 = vmatprep.subr.mxu0 0.0
  %604 = vmatpush1.msra.mxu0 0.0
  %605 = vmatprep.subr.mxu0 0.0
  %606 = vmatpush1.msra.mxu0 0.0
  %607 = vmatprep.subr.mxu0 0.0
  %608 = vmatpush1.msra.mxu0 0.0
  %609 = vmatprep.subr.mxu0 0.0
  %610 = vmatpush1.msra.mxu0 0.0
  %611 = vmatprep.subr.mxu0 0.0
  %612 = vmatpush1.msra.mxu0 0.0
  %613 = vmatprep.subr.mxu0 0.0
  %614 = vmatpush1.msra.mxu0 0.0
  %615 = vmatprep.subr.mxu0 0.0
  %616 = vmatpush1.msra.mxu0 0.0
  %617 = vmatprep.subr.mxu0 0.0
  %618 = vmatpush1.msra.mxu0 0.0
  %619 = vmatprep.subr.mxu0 0.0
  %620 = vmatpush1.msra.mxu0 0.0
  %621 = vmatprep.subr.mxu0 0.0
  %622 = vmatpush1.msra.mxu0 0.0
  %623 = vmatprep.subr.mxu0 0.0
  %624 = vmatpush1.msra.mxu0 0.0
  %625 = vmatprep.subr.mxu0 0.0
  %626 = vmatpush1.msra.mxu0 0.0
  %627 = vmatprep.subr.mxu0 0.0
  %628 = vmatpush1.msra.mxu0 0.0
  %629 = vmatprep.subr.mxu0 0.0
  %630 = vmatpush1.msra.mxu0 0.0
  %631 = vmatprep.subr.mxu0 0.0
  %632 = vmatpush1.msra.mxu0 0.0
  %633 = vmatprep.subr.mxu0 0.0
  %634 = vmatpush1.msra.mxu0 0.0
  %635 = vmatprep.mubr.f32.mxu0 0.0
  %636 = vmatmul.mubr.f32.gmra.mrb[0].mxu0 %v569
  %v637 = vpop.f32.mrb[0].mxu0
  %v638 = vadd.f32 0.0, %v637
  %v639 = vpop.f32.mrb[0].mxu0
  %640 = vdwg.mxu0
  %v641 = vadd.f32 %v122, %v638
  %v642 = vxor.u32 %v641, 2147483648
  %v643 = vmul.f32 %v642, 1.442695
  %v644 = vpow.pop %v643
  %v645 = vadd.f32 %v644, 1.0
  %v646 = vrcp.pop %v645
  %v647 = vmul.f32 1.0, %v646
  %v648 = vtanh.pop %v641
  %v650 = vrot.slane %v553, 6
  %v652 = vmul.f32 %v647, %v650
  %654 = vrot.lane.b32.xlu0 %v648, 64
  %v655 = vpop.permute.xlu0 %654
  %v657 = vmul.f32 %v647, %v655
  %659 = vrot.lane.b32.xlu0 %v657, 32
  %v660 = vpop.permute.xlu0 %659
  %v662 = vadd.f32 %v652, %v660
  %v663 = vtanh.pop %v662
  %665 = vrot.lane.b32.xlu0 %v663, 64
  %v666 = vpop.permute.xlu0 %665
  %v668 = vmul.f32 %v647, %v666
  %670 = vrot.lane.b32.xlu0 %v668, 32
  %v671 = vpop.permute.xlu0 %670
  %673 = vst.msk [vmem:[#allocation2 + $0x8] sm:$0x3] %vm231, %v671
  %v674 = vsel %vm43, %v671, 0
  %676 = vmatprep.subr.mxu0 0.0
  %677 = vmatpush1.msra.mxu0 %v125
  %678 = vmatprep.subr.mxu0 0.0
  %679 = vmatpush1.msra.mxu0 %v126
  %680 = vmatprep.subr.mxu0 0.0
  %681 = vmatpush1.msra.mxu0 %v127
  %682 = vmatprep.subr.mxu0 0.0
  %683 = vmatpush1.msra.mxu0 %v128
  %684 = vmatprep.subr.mxu0 0.0
  %685 = vmatpush1.msra.mxu0 0.0
  %686 = vmatprep.subr.mxu0 0.0
  %687 = vmatpush1.msra.mxu0 0.0
  %688 = vmatprep.subr.mxu0 0.0
  %689 = vmatpush1.msra.mxu0 0.0
  %690 = vmatprep.subr.mxu0 0.0
  %691 = vmatpush1.msra.mxu0 0.0
  %692 = vmatprep.subr.mxu0 0.0
  %693 = vmatpush1.msra.mxu0 0.0
  %694 = vmatprep.subr.mxu0 0.0
  %695 = vmatpush1.msra.mxu0 0.0
  %696 = vmatprep.subr.mxu0 0.0
  %697 = vmatpush1.msra.mxu0 0.0
  %698 = vmatprep.subr.mxu0 0.0
  %699 = vmatpush1.msra.mxu0 0.0
  %700 = vmatprep.subr.mxu0 0.0
  %701 = vmatpush1.msra.mxu0 0.0
  %702 = vmatprep.subr.mxu0 0.0
  %703 = vmatpush1.msra.mxu0 0.0
  %704 = vmatprep.subr.mxu0 0.0
  %705 = vmatpush1.msra.mxu0 0.0
  %706 = vmatprep.subr.mxu0 0.0
  %707 = vmatpush1.msra.mxu0 0.0
  %708 = vmatprep.subr.mxu0 0.0
  %709 = vmatpush1.msra.mxu0 0.0
  %710 = vmatprep.subr.mxu0 0.0
  %711 = vmatpush1.msra.mxu0 0.0
  %712 = vmatprep.subr.mxu0 0.0
  %713 = vmatpush1.msra.mxu0 0.0
  %714 = vmatprep.subr.mxu0 0.0
  %715 = vmatpush1.msra.mxu0 0.0
  %716 = vmatprep.subr.mxu0 0.0
  %717 = vmatpush1.msra.mxu0 0.0
  %718 = vmatprep.subr.mxu0 0.0
  %719 = vmatpush1.msra.mxu0 0.0
  %720 = vmatprep.subr.mxu0 0.0
  %721 = vmatpush1.msra.mxu0 0.0
  %722 = vmatprep.subr.mxu0 0.0
  %723 = vmatpush1.msra.mxu0 0.0
  %724 = vmatprep.subr.mxu0 0.0
  %725 = vmatpush1.msra.mxu0 0.0
  %726 = vmatprep.subr.mxu0 0.0
  %727 = vmatpush1.msra.mxu0 0.0
  %728 = vmatprep.subr.mxu0 0.0
  %729 = vmatpush1.msra.mxu0 0.0
  %730 = vmatprep.subr.mxu0 0.0
  %731 = vmatpush1.msra.mxu0 0.0
  %732 = vmatprep.subr.mxu0 0.0
  %733 = vmatpush1.msra.mxu0 0.0
  %734 = vmatprep.subr.mxu0 0.0
  %735 = vmatpush1.msra.mxu0 0.0
  %736 = vmatprep.subr.mxu0 0.0
  %737 = vmatpush1.msra.mxu0 0.0
  %738 = vmatprep.subr.mxu0 0.0
  %739 = vmatpush1.msra.mxu0 0.0
  %740 = vmatprep.mubr.f32.mxu0 0.0
  %741 = vmatmul.mubr.f32.gmra.mrb[0].mxu0 %v674
  %v742 = vpop.f32.mrb[0].mxu0
  %v743 = vadd.f32 0.0, %v742
  %v744 = vpop.f32.mrb[0].mxu0
  %745 = vdwg.mxu0
  %v747 = vrot.slane %v743, 6
  %v749 = vadd.f32 %v122, %v747
  %v750 = vxor.u32 %v749, 2147483648
  %v751 = vmul.f32 %v750, 1.442695
  %v752 = vpow.pop %v751
  %v753 = vadd.f32 %v752, 1.0
  %v754 = vrcp.pop %v753
  %v755 = vmul.f32 1.0, %v754
  %v756 = vtanh.pop %v749
  %v758 = vrot.slane %v662, 6
  %v760 = vmul.f32 %v755, %v758
  %762 = vrot.lane.b32.xlu0 %v756, 64
  %v763 = vpop.permute.xlu0 %762
  %v765 = vmul.f32 %v755, %v763
  %767 = vrot.lane.b32.xlu0 %v765, 32
  %v768 = vpop.permute.xlu0 %767
  %v770 = vadd.f32 %v760, %v768
  %v771 = vtanh.pop %v770
  %773 = vrot.lane.b32.xlu0 %v771, 64
  %v774 = vpop.permute.xlu0 %773
  %v776 = vmul.f32 %v755, %v774
  %778 = vrot.lane.b32.xlu0 %v776, 32
  %v779 = vpop.permute.xlu0 %778
  %781 = vst.msk [vmem:[#allocation2 + $0x8] sm:$0xc] %vm340, %v779
  %v782 = vrot.slane %v776, 2
  %783 = vrot.lane.b32.xlu0 %v782, 32
  %v784 = vpop.permute.xlu0 %783
  %v785 = vsel %vm43, %v784, 0
  %787 = vmatprep.subr.mxu0 0.0
  %788 = vmatpush1.msra.mxu0 %v125
  %789 = vmatprep.subr.mxu0 0.0
  %790 = vmatpush1.msra.mxu0 %v126
  %791 = vmatprep.subr.mxu0 0.0
  %792 = vmatpush1.msra.mxu0 %v127
  %793 = vmatprep.subr.mxu0 0.0
  %794 = vmatpush1.msra.mxu0 %v128
  %795 = vmatprep.subr.mxu0 0.0
  %796 = vmatpush1.msra.mxu0 0.0
  %797 = vmatprep.subr.mxu0 0.0
  %798 = vmatpush1.msra.mxu0 0.0
  %799 = vmatprep.subr.mxu0 0.0
  %800 = vmatpush1.msra.mxu0 0.0
  %801 = vmatprep.subr.mxu0 0.0
  %802 = vmatpush1.msra.mxu0 0.0
  %803 = vmatprep.subr.mxu0 0.0
  %804 = vmatpush1.msra.mxu0 0.0
  %805 = vmatprep.subr.mxu0 0.0
  %806 = vmatpush1.msra.mxu0 0.0
  %807 = vmatprep.subr.mxu0 0.0
  %808 = vmatpush1.msra.mxu0 0.0
  %809 = vmatprep.subr.mxu0 0.0
  %810 = vmatpush1.msra.mxu0 0.0
  %811 = vmatprep.subr.mxu0 0.0
  %812 = vmatpush1.msra.mxu0 0.0
  %813 = vmatprep.subr.mxu0 0.0
  %814 = vmatpush1.msra.mxu0 0.0
  %815 = vmatprep.subr.mxu0 0.0
  %816 = vmatpush1.msra.mxu0 0.0
  %817 = vmatprep.subr.mxu0 0.0
  %818 = vmatpush1.msra.mxu0 0.0
  %819 = vmatprep.subr.mxu0 0.0
  %820 = vmatpush1.msra.mxu0 0.0
  %821 = vmatprep.subr.mxu0 0.0
  %822 = vmatpush1.msra.mxu0 0.0
  %823 = vmatprep.subr.mxu0 0.0
  %824 = vmatpush1.msra.mxu0 0.0
  %825 = vmatprep.subr.mxu0 0.0
  %826 = vmatpush1.msra.mxu0 0.0
  %827 = vmatprep.subr.mxu0 0.0
  %828 = vmatpush1.msra.mxu0 0.0
  %829 = vmatprep.subr.mxu0 0.0
  %830 = vmatpush1.msra.mxu0 0.0
  %831 = vmatprep.subr.mxu0 0.0
  %832 = vmatpush1.msra.mxu0 0.0
  %833 = vmatprep.subr.mxu0 0.0
  %834 = vmatpush1.msra.mxu0 0.0
  %835 = vmatprep.subr.mxu0 0.0
  %836 = vmatpush1.msra.mxu0 0.0
  %837 = vmatprep.subr.mxu0 0.0
  %838 = vmatpush1.msra.mxu0 0.0
  %839 = vmatprep.subr.mxu0 0.0
  %840 = vmatpush1.msra.mxu0 0.0
  %841 = vmatprep.subr.mxu0 0.0
  %842 = vmatpush1.msra.mxu0 0.0
  %843 = vmatprep.subr.mxu0 0.0
  %844 = vmatpush1.msra.mxu0 0.0
  %845 = vmatprep.subr.mxu0 0.0
  %846 = vmatpush1.msra.mxu0 0.0
  %847 = vmatprep.subr.mxu0 0.0
  %848 = vmatpush1.msra.mxu0 0.0
  %849 = vmatprep.subr.mxu0 0.0
  %850 = vmatpush1.msra.mxu0 0.0
  %851 = vmatprep.mubr.f32.mxu0 0.0
  %852 = vmatmul.mubr.f32.gmra.mrb[0].mxu0 %v785
  %v853 = vpop.f32.mrb[0].mxu0
  %v854 = vadd.f32 0.0, %v853
  %v855 = vpop.f32.mrb[0].mxu0
  %856 = vdwg.mxu0
  %v858 = vrot.slane %v854, 4
  %v860 = vadd.f32 %v122, %v858
  %v861 = vxor.u32 %v860, 2147483648
  %v862 = vmul.f32 %v861, 1.442695
  %v863 = vpow.pop %v862
  %v864 = vadd.f32 %v863, 1.0
  %v865 = vrcp.pop %v864
  %v866 = vmul.f32 1.0, %v865
  %v867 = vtanh.pop %v860
  %v869 = vrot.slane %v770, 6
  %v871 = vmul.f32 %v866, %v869
  %873 = vrot.lane.b32.xlu0 %v867, 64
  %v874 = vpop.permute.xlu0 %873
  %v876 = vmul.f32 %v866, %v874
  %878 = vrot.lane.b32.xlu0 %v876, 32
  %v879 = vpop.permute.xlu0 %878
  %v881 = vadd.f32 %v871, %v879
  %v882 = vtanh.pop %v881
  %884 = vrot.lane.b32.xlu0 %v882, 64
  %v885 = vpop.permute.xlu0 %884
  %v887 = vmul.f32 %v866, %v885
  %889 = vrot.lane.b32.xlu0 %v887, 32
  %v890 = vpop.permute.xlu0 %889
  %892 = vst.msk [vmem:[#allocation2 + $0x8] sm:$0x30] %vm452, %v890
  %v893 = vrot.slane %v887, 4
  %894 = vrot.lane.b32.xlu0 %v893, 32
  %v895 = vpop.permute.xlu0 %894
  %v896 = vsel %vm43, %v895, 0
  %898 = vmatprep.subr.mxu0 0.0
  %899 = vmatpush1.msra.mxu0 %v125
  %900 = vmatprep.subr.mxu0 0.0
  %901 = vmatpush1.msra.mxu0 %v126
  %902 = vmatprep.subr.mxu0 0.0
  %903 = vmatpush1.msra.mxu0 %v127
  %904 = vmatprep.subr.mxu0 0.0
  %905 = vmatpush1.msra.mxu0 %v128
  %906 = vmatprep.subr.mxu0 0.0
  %907 = vmatpush1.msra.mxu0 0.0
  %908 = vmatprep.subr.mxu0 0.0
  %909 = vmatpush1.msra.mxu0 0.0
  %910 = vmatprep.subr.mxu0 0.0
  %911 = vmatpush1.msra.mxu0 0.0
  %912 = vmatprep.subr.mxu0 0.0
  %913 = vmatpush1.msra.mxu0 0.0
  %914 = vmatprep.subr.mxu0 0.0
  %915 = vmatpush1.msra.mxu0 0.0
  %916 = vmatprep.subr.mxu0 0.0
  %917 = vmatpush1.msra.mxu0 0.0
  %918 = vmatprep.subr.mxu0 0.0
  %919 = vmatpush1.msra.mxu0 0.0
  %920 = vmatprep.subr.mxu0 0.0
  %921 = vmatpush1.msra.mxu0 0.0
  %922 = vmatprep.subr.mxu0 0.0
  %923 = vmatpush1.msra.mxu0 0.0
  %924 = vmatprep.subr.mxu0 0.0
  %925 = vmatpush1.msra.mxu0 0.0
  %926 = vmatprep.subr.mxu0 0.0
  %927 = vmatpush1.msra.mxu0 0.0
  %928 = vmatprep.subr.mxu0 0.0
  %929 = vmatpush1.msra.mxu0 0.0
  %930 = vmatprep.subr.mxu0 0.0
  %931 = vmatpush1.msra.mxu0 0.0
  %932 = vmatprep.subr.mxu0 0.0
  %933 = vmatpush1.msra.mxu0 0.0
  %934 = vmatprep.subr.mxu0 0.0
  %935 = vmatpush1.msra.mxu0 0.0
  %936 = vmatprep.subr.mxu0 0.0
  %937 = vmatpush1.msra.mxu0 0.0
  %938 = vmatprep.subr.mxu0 0.0
  %939 = vmatpush1.msra.mxu0 0.0
  %940 = vmatprep.subr.mxu0 0.0
  %941 = vmatpush1.msra.mxu0 0.0
  %942 = vmatprep.subr.mxu0 0.0
  %943 = vmatpush1.msra.mxu0 0.0
  %944 = vmatprep.subr.mxu0 0.0
  %945 = vmatpush1.msra.mxu0 0.0
  %946 = vmatprep.subr.mxu0 0.0
  %947 = vmatpush1.msra.mxu0 0.0
  %948 = vmatprep.subr.mxu0 0.0
  %949 = vmatpush1.msra.mxu0 0.0
  %950 = vmatprep.subr.mxu0 0.0
  %951 = vmatpush1.msra.mxu0 0.0
  %952 = vmatprep.subr.mxu0 0.0
  %953 = vmatpush1.msra.mxu0 0.0
  %954 = vmatprep.subr.mxu0 0.0
  %955 = vmatpush1.msra.mxu0 0.0
  %956 = vmatprep.subr.mxu0 0.0
  %957 = vmatpush1.msra.mxu0 0.0
  %958 = vmatprep.subr.mxu0 0.0
  %959 = vmatpush1.msra.mxu0 0.0
  %960 = vmatprep.subr.mxu0 0.0
  %961 = vmatpush1.msra.mxu0 0.0
  %962 = vmatprep.mubr.f32.mxu0 0.0
  %963 = vmatmul.mubr.f32.gmra.mrb[0].mxu0 %v896
  %v964 = vpop.f32.mrb[0].mxu0
  %v965 = vadd.f32 0.0, %v964
  %v966 = vpop.f32.mrb[0].mxu0
  %967 = vdwg.mxu0
  %v969 = vrot.slane %v965, 2
  %v971 = vadd.f32 %v122, %v969
  %v972 = vxor.u32 %v971, 2147483648
  %v973 = vmul.f32 %v972, 1.442695
  %v974 = vpow.pop %v973
  %v975 = vadd.f32 %v974, 1.0
  %v976 = vrcp.pop %v975
  %v977 = vmul.f32 1.0, %v976
  %v978 = vtanh.pop %v971
  %v980 = vrot.slane %v881, 6
  %v982 = vmul.f32 %v977, %v980
  %984 = vrot.lane.b32.xlu0 %v978, 64
  %v985 = vpop.permute.xlu0 %984
  %v987 = vmul.f32 %v977, %v985
  %989 = vrot.lane.b32.xlu0 %v987, 32
  %v990 = vpop.permute.xlu0 %989
  %v992 = vadd.f32 %v982, %v990
  %v993 = vtanh.pop %v992
  %995 = vrot.lane.b32.xlu0 %v993, 64
  %v996 = vpop.permute.xlu0 %995
  %v998 = vmul.f32 %v977, %v996
  %1000 = vrot.lane.b32.xlu0 %v998, 32
  %v1001 = vpop.permute.xlu0 %1000
  %1003 = vst.msk [vmem:[#allocation2 + $0x8] sm:$0xc0] %vm564, %v1001
  %v1004 = vld [vmem:[#allocation2] sm:$0xff]
  %v1005 = vld [vmem:[#allocation2 + $0x8] sm:$0xff]
  %v1006 = vld [vmem:[%s5] sm:$0xff]
  %v1007 = vld [vmem:[%s5 + $0x8] sm:$0xff]
  %v1008 = vld [vmem:[%s5 + $0x10] sm:$0xff]
  %v1009 = vld [vmem:[%s5 + $0x18] sm:$0xff]
  %v1010 = vld [vmem:[%s7 + $0x4] sm:$0x1]
  %v1011 = vlaneseq
  %v1012 = vshrl.u32 %v1011, 7
  %v1013 = vsub.s32 0, %v1012
  %v1014 = vrot.slane %v1010, %v1013
  %v1016 = vsel %vm43, %v1004, 0
  %v1019 = vsel %vm43, %v1005, 0
  %1021 = vmatprep.subr.mxu0 0.0
  %1022 = vmatpush1.msra.mxu0 %v1006
  %1023 = vmatprep.subr.mxu0 0.0
  %1024 = vmatpush1.msra.mxu0 %v1007
  %1025 = vmatprep.subr.mxu0 0.0
  %1026 = vmatpush1.msra.mxu0 %v1008
  %1027 = vmatprep.subr.mxu0 0.0
  %1028 = vmatpush1.msra.mxu0 %v1009
  %1029 = vmatprep.subr.mxu0 0.0
  %1030 = vmatpush1.msra.mxu0 0.0
  %1031 = vmatprep.subr.mxu0 0.0
  %1032 = vmatpush1.msra.mxu0 0.0
  %1033 = vmatprep.subr.mxu0 0.0
  %1034 = vmatpush1.msra.mxu0 0.0
  %1035 = vmatprep.subr.mxu0 0.0
  %1036 = vmatpush1.msra.mxu0 0.0
  %1037 = vmatprep.subr.mxu0 0.0
  %1038 = vmatpush1.msra.mxu0 0.0
  %1039 = vmatprep.subr.mxu0 0.0
  %1040 = vmatpush1.msra.mxu0 0.0
  %1041 = vmatprep.subr.mxu0 0.0
  %1042 = vmatpush1.msra.mxu0 0.0
  %1043 = vmatprep.subr.mxu0 0.0
  %1044 = vmatpush1.msra.mxu0 0.0
  %1045 = vmatprep.subr.mxu0 0.0
  %1046 = vmatpush1.msra.mxu0 0.0
  %1047 = vmatprep.subr.mxu0 0.0
  %1048 = vmatpush1.msra.mxu0 0.0
  %1049 = vmatprep.subr.mxu0 0.0
  %1050 = vmatpush1.msra.mxu0 0.0
  %1051 = vmatprep.subr.mxu0 0.0
  %1052 = vmatpush1.msra.mxu0 0.0
  %1053 = vmatprep.subr.mxu0 0.0
  %1054 = vmatpush1.msra.mxu0 0.0
  %1055 = vmatprep.subr.mxu0 0.0
  %1056 = vmatpush1.msra.mxu0 0.0
  %1057 = vmatprep.subr.mxu0 0.0
  %1058 = vmatpush1.msra.mxu0 0.0
  %1059 = vmatprep.subr.mxu0 0.0
  %1060 = vmatpush1.msra.mxu0 0.0
  %1061 = vmatprep.subr.mxu0 0.0
  %1062 = vmatpush1.msra.mxu0 0.0
  %1063 = vmatprep.subr.mxu0 0.0
  %1064 = vmatpush1.msra.mxu0 0.0
  %1065 = vmatprep.subr.mxu0 0.0
  %1066 = vmatpush1.msra.mxu0 0.0
  %1067 = vmatprep.subr.mxu0 0.0
  %1068 = vmatpush1.msra.mxu0 0.0
  %1069 = vmatprep.subr.mxu0 0.0
  %1070 = vmatpush1.msra.mxu0 0.0
  %1071 = vmatprep.subr.mxu0 0.0
  %1072 = vmatpush1.msra.mxu0 0.0
  %1073 = vmatprep.subr.mxu0 0.0
  %1074 = vmatpush1.msra.mxu0 0.0
  %1075 = vmatprep.subr.mxu0 0.0
  %1076 = vmatpush1.msra.mxu0 0.0
  %1077 = vmatprep.subr.mxu0 0.0
  %1078 = vmatpush1.msra.mxu0 0.0
  %1079 = vmatprep.subr.mxu0 0.0
  %1080 = vmatpush1.msra.mxu0 0.0
  %1081 = vmatprep.subr.mxu0 0.0
  %1082 = vmatpush1.msra.mxu0 0.0
  %1083 = vmatprep.subr.mxu0 0.0
  %1084 = vmatpush1.msra.mxu0 0.0
  %1085 = vmatprep.mubr.f32.mxu0 0.0
  %1086 = vmatmul.mubr.f32.gmra.mrb[0].mxu0 %v1016
  %v1087 = vpop.f32.mrb[0].mxu0
  %v1088 = vadd.f32 %v1014, %v1087
  %v1089 = vpop.f32.mrb[0].mxu0
  %1090 = vmatprep.mubr.f32.mxu0 0.0
  %1091 = vmatmul.mubr.f32.gmra.mrb[0].mxu0 %v1019
  %v1092 = vpop.f32.mrb[0].mxu0
  %v1093 = vadd.f32 %v1014, %v1092
  %v1094 = vpop.f32.mrb[0].mxu0
  %1095 = vdwg.mxu0
  %v1096 = vld [vmem:[%s7] sm:$0x1]
  %v1097 = vld [vmem:[%s7 + $0x1] sm:$0x1]
  %v1098 = vld [vmem:[%s7 + $0x2] sm:$0x1]
  %v1099 = vld [vmem:[%s7 + $0x3] sm:$0x1]
  %1101 = vrot.lane.b32.xlu0 %v1088, 127
  %v1102 = vpop.permute.xlu0 %1101
  %v1104 = vmax.f32 %v1088, %v1102
  %v1105 = vsub.f32 %v1088, %v1102
  %vm1106 = vcmp.ne.f32.partialorder %v1105, %v1105
  %v1107 = vadd.f32 %v1088, %v1102
  %v1108 = vand.u32 2147483647, %v1105
  %v1109 = vsub.f32 0.0, %v1108
  %v1110 = vmul.f32 %v1109, 1.442695
  %v1111 = vpow.pop %v1110
  %v1112 = vadd.f32 %v1111, 1.0
  %v1113 = vlog2.pop %v1112
  %v1114 = vmul.f32 %v1113, 0.6931472
  %v1115 = vmul.f32 -0.5, %v1111
  %v1116 = vadd.f32 %v1115, 1.0
  %v1117 = vmul.f32 %v1116, %v1111
  %v1118 = vand.u32 2147483647, %v1111
  %vm1119 = vcmp.lt.f32.partialorder %v1118, 0.0004427343
  %v1120 = vsel %vm1119, %v1117, %v1114
  %v1121 = vadd.f32 %v1104, %v1120
  %v1122 = vsel %vm1106, %v1107, %v1121
  %vm1123 = vcmp.eq.s32.totalorder %v29, 1
  %v1124 = vsel %vm1123, %v1122, 0.0
  %1125 = vset.pattern.permute.xlu0 0
  %1126 = vperm.xlu0 %1125, %v1088
  %v1127 = vpop.permute.xlu0 %1126
  %v1129 = vlaneseq
  %v1130 = vshrl.u32 %v1129, 7
  %v1131 = vsub.s32 0, %v1130
  %v1132 = vrot.slane %v1096, %v1131
  %v1133 = vadd.f32 %v1127, %v1132
  %1134 = vset.pattern.permute.xlu0 1
  %1135 = vperm.xlu0 %1134, %v1088
  %v1136 = vpop.permute.xlu0 %1135
  %v1138 = vlaneseq
  %v1139 = vshrl.u32 %v1138, 7
  %v1140 = vsub.s32 0, %v1139
  %v1141 = vrot.slane %v1097, %v1140
  %v1142 = vadd.f32 %v1136, %v1141
  %v1143 = vmax.f32 %v1133, %v1142
  %v1144 = vsub.f32 %v1133, %v1142
  %vm1145 = vcmp.ne.f32.partialorder %v1144, %v1144
  %v1146 = vadd.f32 %v1133, %v1142
  %v1147 = vand.u32 2147483647, %v1144
  %v1148 = vsub.f32 0.0, %v1147
  %v1149 = vmul.f32 %v1148, 1.442695
  %v1150 = vpow.pop %v1149
  %v1151 = vadd.f32 %v1150, 1.0
  %v1152 = vlog2.pop %v1151
  %v1153 = vmul.f32 %v1152, 0.6931472
  %v1154 = vmul.f32 -0.5, %v1150
  %v1155 = vadd.f32 %v1154, 1.0
  %v1156 = vmul.f32 %v1155, %v1150
  %v1157 = vand.u32 2147483647, %v1150
  %vm1158 = vcmp.lt.f32.partialorder %v1157, 0.0004427343
  %v1159 = vsel %vm1158, %v1156, %v1153
  %v1160 = vadd.f32 %v1143, %v1159
  %v1161 = vsel %vm1145, %v1146, %v1160
  %v1162 = vrot.slane %v1088, 2
  %v1164 = vadd.f32 %v1161, %v1162
  %1166 = vrot.lane.b32.xlu0 %v1164, 127
  %v1167 = vpop.permute.xlu0 %1166
  %v1169 = vmax.f32 %v1164, %v1167
  %v1170 = vsub.f32 %v1164, %v1167
  %vm1171 = vcmp.ne.f32.partialorder %v1170, %v1170
  %v1172 = vadd.f32 %v1164, %v1167
  %v1173 = vand.u32 2147483647, %v1170
  %v1174 = vsub.f32 0.0, %v1173
  %v1175 = vmul.f32 %v1174, 1.442695
  %v1176 = vpow.pop %v1175
  %v1177 = vadd.f32 %v1176, 1.0
  %v1178 = vlog2.pop %v1177
  %v1179 = vmul.f32 %v1178, 0.6931472
  %v1180 = vmul.f32 -0.5, %v1176
  %v1181 = vadd.f32 %v1180, 1.0
  %v1182 = vmul.f32 %v1181, %v1176
  %v1183 = vand.u32 2147483647, %v1176
  %vm1184 = vcmp.lt.f32.partialorder %v1183, 0.0004427343
  %v1185 = vsel %vm1184, %v1182, %v1179
  %v1186 = vadd.f32 %v1169, %v1185
  %v1187 = vsel %vm1171, %v1172, %v1186
  %vm1188 = vcmp.eq.s32.totalorder %v29, 2
  %v1189 = vsel %vm1188, %v1187, %v1124
  %1190 = vset.pattern.permute.xlu0 0
  %1191 = vperm.xlu0 %1190, %v1164
  %v1192 = vpop.permute.xlu0 %1191
  %v1194 = vadd.f32 %v1192, %v1132
  %1195 = vset.pattern.permute.xlu0 1
  %1196 = vperm.xlu0 %1195, %v1164
  %v1197 = vpop.permute.xlu0 %1196
  %v1199 = vadd.f32 %v1197, %v1141
  %v1200 = vmax.f32 %v1194, %v1199
  %v1201 = vsub.f32 %v1194, %v1199
  %vm1202 = vcmp.ne.f32.partialorder %v1201, %v1201
  %v1203 = vadd.f32 %v1194, %v1199
  %v1204 = vand.u32 2147483647, %v1201
  %v1205 = vsub.f32 0.0, %v1204
  %v1206 = vmul.f32 %v1205, 1.442695
  %v1207 = vpow.pop %v1206
  %v1208 = vadd.f32 %v1207, 1.0
  %v1209 = vlog2.pop %v1208
  %v1210 = vmul.f32 %v1209, 0.6931472
  %v1211 = vmul.f32 -0.5, %v1207
  %v1212 = vadd.f32 %v1211, 1.0
  %v1213 = vmul.f32 %v1212, %v1207
  %v1214 = vand.u32 2147483647, %v1207
  %vm1215 = vcmp.lt.f32.partialorder %v1214, 0.0004427343
  %v1216 = vsel %vm1215, %v1213, %v1210
  %v1217 = vadd.f32 %v1200, %v1216
  %v1218 = vsel %vm1202, %v1203, %v1217
  %v1219 = vrot.slane %v1088, 4
  %v1221 = vadd.f32 %v1218, %v1219
  %1223 = vrot.lane.b32.xlu0 %v1221, 127
  %v1224 = vpop.permute.xlu0 %1223
  %v1226 = vmax.f32 %v1221, %v1224
  %v1227 = vsub.f32 %v1221, %v1224
  %vm1228 = vcmp.ne.f32.partialorder %v1227, %v1227
  %v1229 = vadd.f32 %v1221, %v1224
  %v1230 = vand.u32 2147483647, %v1227
  %v1231 = vsub.f32 0.0, %v1230
  %v1232 = vmul.f32 %v1231, 1.442695
  %v1233 = vpow.pop %v1232
  %v1234 = vadd.f32 %v1233, 1.0
  %v1235 = vlog2.pop %v1234
  %v1236 = vmul.f32 %v1235, 0.6931472
  %v1237 = vmul.f32 -0.5, %v1233
  %v1238 = vadd.f32 %v1237, 1.0
  %v1239 = vmul.f32 %v1238, %v1233
  %v1240 = vand.u32 2147483647, %v1233
  %vm1241 = vcmp.lt.f32.partialorder %v1240, 0.0004427343
  %v1242 = vsel %vm1241, %v1239, %v1236
  %v1243 = vadd.f32 %v1226, %v1242
  %v1244 = vsel %vm1228, %v1229, %v1243
  %vm1245 = vcmp.eq.s32.totalorder %v29, 3
  %v1246 = vsel %vm1245, %v1244, %v1189
  %1247 = vset.pattern.permute.xlu0 0
  %1248 = vperm.xlu0 %1247, %v1221
  %v1249 = vpop.permute.xlu0 %1248
  %v1251 = vadd.f32 %v1249, %v1132
  %1252 = vset.pattern.permute.xlu0 1
  %1253 = vperm.xlu0 %1252, %v1221
  %v1254 = vpop.permute.xlu0 %1253
  %v1256 = vadd.f32 %v1254, %v1141
  %v1257 = vmax.f32 %v1251, %v1256
  %v1258 = vsub.f32 %v1251, %v1256
  %vm1259 = vcmp.ne.f32.partialorder %v1258, %v1258
  %v1260 = vadd.f32 %v1251, %v1256
  %v1261 = vand.u32 2147483647, %v1258
  %v1262 = vsub.f32 0.0, %v1261
  %v1263 = vmul.f32 %v1262, 1.442695
  %v1264 = vpow.pop %v1263
  %v1265 = vadd.f32 %v1264, 1.0
  %v1266 = vlog2.pop %v1265
  %v1267 = vmul.f32 %v1266, 0.6931472
  %v1268 = vmul.f32 -0.5, %v1264
  %v1269 = vadd.f32 %v1268, 1.0
  %v1270 = vmul.f32 %v1269, %v1264
  %v1271 = vand.u32 2147483647, %v1264
  %vm1272 = vcmp.lt.f32.partialorder %v1271, 0.0004427343
  %v1273 = vsel %vm1272, %v1270, %v1267
  %v1274 = vadd.f32 %v1257, %v1273
  %v1275 = vsel %vm1259, %v1260, %v1274
  %v1276 = vrot.slane %v1088, 6
  %v1278 = vadd.f32 %v1275, %v1276
  %1280 = vrot.lane.b32.xlu0 %v1278, 127
  %v1281 = vpop.permute.xlu0 %1280
  %v1283 = vmax.f32 %v1278, %v1281
  %v1284 = vsub.f32 %v1278, %v1281
  %vm1285 = vcmp.ne.f32.partialorder %v1284, %v1284
  %v1286 = vadd.f32 %v1278, %v1281
  %v1287 = vand.u32 2147483647, %v1284
  %v1288 = vsub.f32 0.0, %v1287
  %v1289 = vmul.f32 %v1288, 1.442695
  %v1290 = vpow.pop %v1289
  %v1291 = vadd.f32 %v1290, 1.0
  %v1292 = vlog2.pop %v1291
  %v1293 = vmul.f32 %v1292, 0.6931472
  %v1294 = vmul.f32 -0.5, %v1290
  %v1295 = vadd.f32 %v1294, 1.0
  %v1296 = vmul.f32 %v1295, %v1290
  %v1297 = vand.u32 2147483647, %v1290
  %vm1298 = vcmp.lt.f32.partialorder %v1297, 0.0004427343
  %v1299 = vsel %vm1298, %v1296, %v1293
  %v1300 = vadd.f32 %v1283, %v1299
  %v1301 = vsel %vm1285, %v1286, %v1300
  %vm1302 = vcmp.eq.s32.totalorder %v29, 4
  %v1303 = vsel %vm1302, %v1301, %v1246
  %1304 = vset.pattern.permute.xlu0 0
  %1305 = vperm.xlu0 %1304, %v1278
  %v1306 = vpop.permute.xlu0 %1305
  %v1308 = vadd.f32 %v1306, %v1132
  %1309 = vset.pattern.permute.xlu0 1
  %1310 = vperm.xlu0 %1309, %v1278
  %v1311 = vpop.permute.xlu0 %1310
  %v1313 = vadd.f32 %v1311, %v1141
  %v1314 = vmax.f32 %v1308, %v1313
  %v1315 = vsub.f32 %v1308, %v1313
  %vm1316 = vcmp.ne.f32.partialorder %v1315, %v1315
  %v1317 = vadd.f32 %v1308, %v1313
  %v1318 = vand.u32 2147483647, %v1315
  %v1319 = vsub.f32 0.0, %v1318
  %v1320 = vmul.f32 %v1319, 1.442695
  %v1321 = vpow.pop %v1320
  %v1322 = vadd.f32 %v1321, 1.0
  %v1323 = vlog2.pop %v1322
  %v1324 = vmul.f32 %v1323, 0.6931472
  %v1325 = vmul.f32 -0.5, %v1321
  %v1326 = vadd.f32 %v1325, 1.0
  %v1327 = vmul.f32 %v1326, %v1321
  %v1328 = vand.u32 2147483647, %v1321
  %vm1329 = vcmp.lt.f32.partialorder %v1328, 0.0004427343
  %v1330 = vsel %vm1329, %v1327, %v1324
  %v1331 = vadd.f32 %v1314, %v1330
  %v1332 = vsel %vm1316, %v1317, %v1331
  %v1333 = vadd.f32 %v1332, %v1093
  %1335 = vrot.lane.b32.xlu0 %v1333, 127
  %v1336 = vpop.permute.xlu0 %1335
  %v1338 = vmax.f32 %v1333, %v1336
  %v1339 = vsub.f32 %v1333, %v1336
  %vm1340 = vcmp.ne.f32.partialorder %v1339, %v1339
  %v1341 = vadd.f32 %v1333, %v1336
  %v1342 = vand.u32 2147483647, %v1339
  %v1343 = vsub.f32 0.0, %v1342
  %v1344 = vmul.f32 %v1343, 1.442695
  %v1345 = vpow.pop %v1344
  %v1346 = vadd.f32 %v1345, 1.0
  %v1347 = vlog2.pop %v1346
  %v1348 = vmul.f32 %v1347, 0.6931472
  %v1349 = vmul.f32 -0.5, %v1345
  %v1350 = vadd.f32 %v1349, 1.0
  %v1351 = vmul.f32 %v1350, %v1345
  %v1352 = vand.u32 2147483647, %v1345
  %vm1353 = vcmp.lt.f32.partialorder %v1352, 0.0004427343
  %v1354 = vsel %vm1353, %v1351, %v1348
  %v1355 = vadd.f32 %v1338, %v1354
  %v1356 = vsel %vm1340, %v1341, %v1355
  %vm1357 = vcmp.eq.s32.totalorder %v29, 5
  %v1358 = vsel %vm1357, %v1356, %v1303
  %1359 = vset.pattern.permute.xlu0 0
  %1360 = vperm.xlu0 %1359, %v1333
  %v1361 = vpop.permute.xlu0 %1360
  %v1363 = vadd.f32 %v1361, %v1132
  %1364 = vset.pattern.permute.xlu0 1
  %1365 = vperm.xlu0 %1364, %v1333
  %v1366 = vpop.permute.xlu0 %1365
  %v1368 = vadd.f32 %v1366, %v1141
  %v1369 = vmax.f32 %v1363, %v1368
  %v1370 = vsub.f32 %v1363, %v1368
  %vm1371 = vcmp.ne.f32.partialorder %v1370, %v1370
  %v1372 = vadd.f32 %v1363, %v1368
  %v1373 = vand.u32 2147483647, %v1370
  %v1374 = vsub.f32 0.0, %v1373
  %v1375 = vmul.f32 %v1374, 1.442695
  %v1376 = vpow.pop %v1375
  %v1377 = vadd.f32 %v1376, 1.0
  %v1378 = vlog2.pop %v1377
  %v1379 = vmul.f32 %v1378, 0.6931472
  %v1380 = vmul.f32 -0.5, %v1376
  %v1381 = vadd.f32 %v1380, 1.0
  %v1382 = vmul.f32 %v1381, %v1376
  %v1383 = vand.u32 2147483647, %v1376
  %vm1384 = vcmp.lt.f32.partialorder %v1383, 0.0004427343
  %v1385 = vsel %vm1384, %v1382, %v1379
  %v1386 = vadd.f32 %v1369, %v1385
  %v1387 = vsel %vm1371, %v1372, %v1386
  %v1389 = vrot.slane %v1093, 2
  %v1391 = vadd.f32 %v1387, %v1389
  %1393 = vrot.lane.b32.xlu0 %v1391, 127
  %v1394 = vpop.permute.xlu0 %1393
  %v1396 = vmax.f32 %v1391, %v1394
  %v1397 = vsub.f32 %v1391, %v1394
  %vm1398 = vcmp.ne.f32.partialorder %v1397, %v1397
  %v1399 = vadd.f32 %v1391, %v1394
  %v1400 = vand.u32 2147483647, %v1397
  %v1401 = vsub.f32 0.0, %v1400
  %v1402 = vmul.f32 %v1401, 1.442695
  %v1403 = vpow.pop %v1402
  %v1404 = vadd.f32 %v1403, 1.0
  %v1405 = vlog2.pop %v1404
  %v1406 = vmul.f32 %v1405, 0.6931472
  %v1407 = vmul.f32 -0.5, %v1403
  %v1408 = vadd.f32 %v1407, 1.0
  %v1409 = vmul.f32 %v1408, %v1403
  %v1410 = vand.u32 2147483647, %v1403
  %vm1411 = vcmp.lt.f32.partialorder %v1410, 0.0004427343
  %v1412 = vsel %vm1411, %v1409, %v1406
  %v1413 = vadd.f32 %v1396, %v1412
  %v1414 = vsel %vm1398, %v1399, %v1413
  %vm1415 = vcmp.eq.s32.totalorder %v29, 6
  %v1416 = vsel %vm1415, %v1414, %v1358
  %1417 = vset.pattern.permute.xlu0 0
  %1418 = vperm.xlu0 %1417, %v1391
  %v1419 = vpop.permute.xlu0 %1418
  %v1421 = vadd.f32 %v1419, %v1132
  %1422 = vset.pattern.permute.xlu0 1
  %1423 = vperm.xlu0 %1422, %v1391
  %v1424 = vpop.permute.xlu0 %1423
  %v1426 = vadd.f32 %v1424, %v1141
  %v1427 = vmax.f32 %v1421, %v1426
  %v1428 = vsub.f32 %v1421, %v1426
  %vm1429 = vcmp.ne.f32.partialorder %v1428, %v1428
  %v1430 = vadd.f32 %v1421, %v1426
  %v1431 = vand.u32 2147483647, %v1428
  %v1432 = vsub.f32 0.0, %v1431
  %v1433 = vmul.f32 %v1432, 1.442695
  %v1434 = vpow.pop %v1433
  %v1435 = vadd.f32 %v1434, 1.0
  %v1436 = vlog2.pop %v1435
  %v1437 = vmul.f32 %v1436, 0.6931472
  %v1438 = vmul.f32 -0.5, %v1434
  %v1439 = vadd.f32 %v1438, 1.0
  %v1440 = vmul.f32 %v1439, %v1434
  %v1441 = vand.u32 2147483647, %v1434
  %vm1442 = vcmp.lt.f32.partialorder %v1441, 0.0004427343
  %v1443 = vsel %vm1442, %v1440, %v1437
  %v1444 = vadd.f32 %v1427, %v1443
  %v1445 = vsel %vm1429, %v1430, %v1444
  %v1446 = vrot.slane %v1093, 4
  %v1448 = vadd.f32 %v1445, %v1446
  %1450 = vrot.lane.b32.xlu0 %v1448, 127
  %v1451 = vpop.permute.xlu0 %1450
  %v1453 = vmax.f32 %v1448, %v1451
  %v1454 = vsub.f32 %v1448, %v1451
  %vm1455 = vcmp.ne.f32.partialorder %v1454, %v1454
  %v1456 = vadd.f32 %v1448, %v1451
  %v1457 = vand.u32 2147483647, %v1454
  %v1458 = vsub.f32 0.0, %v1457
  %v1459 = vmul.f32 %v1458, 1.442695
  %v1460 = vpow.pop %v1459
  %v1461 = vadd.f32 %v1460, 1.0
  %v1462 = vlog2.pop %v1461
  %v1463 = vmul.f32 %v1462, 0.6931472
  %v1464 = vmul.f32 -0.5, %v1460
  %v1465 = vadd.f32 %v1464, 1.0
  %v1466 = vmul.f32 %v1465, %v1460
  %v1467 = vand.u32 2147483647, %v1460
  %vm1468 = vcmp.lt.f32.partialorder %v1467, 0.0004427343
  %v1469 = vsel %vm1468, %v1466, %v1463
  %v1470 = vadd.f32 %v1453, %v1469
  %v1471 = vsel %vm1455, %v1456, %v1470
  %vm1472 = vcmp.eq.s32.totalorder %v29, 7
  %v1473 = vsel %vm1472, %v1471, %v1416
  %1474 = vset.pattern.permute.xlu0 0
  %1475 = vperm.xlu0 %1474, %v1448
  %v1476 = vpop.permute.xlu0 %1475
  %v1478 = vadd.f32 %v1476, %v1132
  %1479 = vset.pattern.permute.xlu0 1
  %1480 = vperm.xlu0 %1479, %v1448
  %v1481 = vpop.permute.xlu0 %1480
  %v1483 = vadd.f32 %v1481, %v1141
  %v1484 = vmax.f32 %v1478, %v1483
  %v1485 = vsub.f32 %v1478, %v1483
  %vm1486 = vcmp.ne.f32.partialorder %v1485, %v1485
  %v1487 = vadd.f32 %v1478, %v1483
  %v1488 = vand.u32 2147483647, %v1485
  %v1489 = vsub.f32 0.0, %v1488
  %v1490 = vmul.f32 %v1489, 1.442695
  %v1491 = vpow.pop %v1490
  %v1492 = vadd.f32 %v1491, 1.0
  %v1493 = vlog2.pop %v1492
  %v1494 = vmul.f32 %v1493, 0.6931472
  %v1495 = vmul.f32 -0.5, %v1491
  %v1496 = vadd.f32 %v1495, 1.0
  %v1497 = vmul.f32 %v1496, %v1491
  %v1498 = vand.u32 2147483647, %v1491
  %vm1499 = vcmp.lt.f32.partialorder %v1498, 0.0004427343
  %v1500 = vsel %vm1499, %v1497, %v1494
  %v1501 = vadd.f32 %v1484, %v1500
  %v1502 = vsel %vm1486, %v1487, %v1501
  %v1503 = vrot.slane %v1093, 6
  %v1505 = vadd.f32 %v1502, %v1503
  %1507 = vrot.lane.b32.xlu0 %v1505, 127
  %v1508 = vpop.permute.xlu0 %1507
  %v1510 = vmax.f32 %v1505, %v1508
  %v1511 = vsub.f32 %v1505, %v1508
  %vm1512 = vcmp.ne.f32.partialorder %v1511, %v1511
  %v1513 = vadd.f32 %v1505, %v1508
  %v1514 = vand.u32 2147483647, %v1511
  %v1515 = vsub.f32 0.0, %v1514
  %v1516 = vmul.f32 %v1515, 1.442695
  %v1517 = vpow.pop %v1516
  %v1518 = vadd.f32 %v1517, 1.0
  %v1519 = vlog2.pop %v1518
  %v1520 = vmul.f32 %v1519, 0.6931472
  %v1521 = vmul.f32 -0.5, %v1517
  %v1522 = vadd.f32 %v1521, 1.0
  %v1523 = vmul.f32 %v1522, %v1517
  %v1524 = vand.u32 2147483647, %v1517
  %vm1525 = vcmp.lt.f32.partialorder %v1524, 0.0004427343
  %v1526 = vsel %vm1525, %v1523, %v1520
  %v1527 = vadd.f32 %v1510, %v1526
  %v1528 = vsel %vm1512, %v1513, %v1527
  %vm1529 = vcmp.eq.s32.totalorder %v29, 8
  %v1530 = vsel %vm1529, %v1528, %v1473
  %v1531 = vadd.f32 %v1093, 0.0
  %1533 = vset.pattern.permute.xlu0 0
  %1534 = vperm.xlu0 %1533, %v1531
  %v1535 = vpop.permute.xlu0 %1534
  %v1537 = vlaneseq
  %v1538 = vshrl.u32 %v1537, 7
  %v1539 = vsub.s32 0, %v1538
  %v1540 = vrot.slane %v1098, %v1539
  %v1541 = vadd.f32 %v1535, %v1540
  %1542 = vset.pattern.permute.xlu0 1
  %1543 = vperm.xlu0 %1542, %v1531
  %v1544 = vpop.permute.xlu0 %1543
  %v1546 = vlaneseq
  %v1547 = vshrl.u32 %v1546, 7
  %v1548 = vsub.s32 0, %v1547
  %v1549 = vrot.slane %v1099, %v1548
  %v1550 = vadd.f32 %v1544, %v1549
  %v1551 = vmax.f32 %v1541, %v1550
  %v1552 = vsub.f32 %v1541, %v1550
  %vm1553 = vcmp.ne.f32.partialorder %v1552, %v1552
  %v1554 = vadd.f32 %v1541, %v1550
  %v1555 = vand.u32 2147483647, %v1552
  %v1556 = vsub.f32 0.0, %v1555
  %v1557 = vmul.f32 %v1556, 1.442695
  %v1558 = vpow.pop %v1557
  %v1559 = vadd.f32 %v1558, 1.0
  %v1560 = vlog2.pop %v1559
  %v1561 = vmul.f32 %v1560, 0.6931472
  %v1562 = vmul.f32 -0.5, %v1558
  %v1563 = vadd.f32 %v1562, 1.0
  %v1564 = vmul.f32 %v1563, %v1558
  %v1565 = vand.u32 2147483647, %v1558
  %vm1566 = vcmp.lt.f32.partialorder %v1565, 0.0004427343
  %v1567 = vsel %vm1566, %v1564, %v1561
  %v1568 = vadd.f32 %v1551, %v1567
  %v1569 = vsel %vm1553, %v1554, %v1568
  %v1570 = vsub.s32 %v29, 1
  %vm1571 = vcmp.le.s32.totalorder %v1570, 6
  %v1572 = vsel %vm1571, 1, 0
  %1573 = vset.pattern.permute.xlu0 0
  %1574 = vperm.xlu0 %1573, %v1572
  %v1575 = vpop.permute.xlu0 %1574
  %vm1576 = vcmp.eq.s32.totalorder %v1575, 1
  %v1578 = vrot.slane %v1569, 6
  %v1580 = vsel %vm1576, 0.0, %v1578
  %v1582 = vrot.slane %v1580, 4
  %v1584 = vadd.f32 %v1093, %v1582
  %1586 = vset.pattern.permute.xlu0 0
  %1587 = vperm.xlu0 %1586, %v1584
  %v1588 = vpop.permute.xlu0 %1587
  %v1590 = vadd.f32 %v1588, %v1540
  %1591 = vset.pattern.permute.xlu0 1
  %1592 = vperm.xlu0 %1591, %v1584
  %v1593 = vpop.permute.xlu0 %1592
  %v1595 = vadd.f32 %v1593, %v1549
  %v1596 = vmax.f32 %v1590, %v1595
  %v1597 = vsub.f32 %v1590, %v1595
  %vm1598 = vcmp.ne.f32.partialorder %v1597, %v1597
  %v1599 = vadd.f32 %v1590, %v1595
  %v1600 = vand.u32 2147483647, %v1597
  %v1601 = vsub.f32 0.0, %v1600
  %v1602 = vmul.f32 %v1601, 1.442695
  %v1603 = vpow.pop %v1602
  %v1604 = vadd.f32 %v1603, 1.0
  %v1605 = vlog2.pop %v1604
  %v1606 = vmul.f32 %v1605, 0.6931472
  %v1607 = vmul.f32 -0.5, %v1603
  %v1608 = vadd.f32 %v1607, 1.0
  %v1609 = vmul.f32 %v1608, %v1603
  %v1610 = vand.u32 2147483647, %v1603
  %vm1611 = vcmp.lt.f32.partialorder %v1610, 0.0004427343
  %v1612 = vsel %vm1611, %v1609, %v1606
  %v1613 = vadd.f32 %v1596, %v1612
  %v1614 = vsel %vm1598, %v1599, %v1613
  %vm1615 = vcmp.le.s32.totalorder %v1570, 5
  %v1616 = vsel %vm1615, 1, 0
  %1617 = vset.pattern.permute.xlu0 0
  %1618 = vperm.xlu0 %1617, %v1616
  %v1619 = vpop.permute.xlu0 %1618
  %vm1620 = vcmp.eq.s32.totalorder %v1619, 1
  %v1622 = vrot.slane %v1614, 4
  %v1624 = vsel %vm1620, 0.0, %v1622
  %v1626 = vrot.slane %v1624, 6
  %v1628 = vadd.f32 %v1093, %v1626
  %1630 = vset.pattern.permute.xlu0 0
  %1631 = vperm.xlu0 %1630, %v1628
  %v1632 = vpop.permute.xlu0 %1631
  %v1634 = vadd.f32 %v1632, %v1540
  %1635 = vset.pattern.permute.xlu0 1
  %1636 = vperm.xlu0 %1635, %v1628
  %v1637 = vpop.permute.xlu0 %1636
  %v1639 = vadd.f32 %v1637, %v1549
  %v1640 = vmax.f32 %v1634, %v1639
  %v1641 = vsub.f32 %v1634, %v1639
  %vm1642 = vcmp.ne.f32.partialorder %v1641, %v1641
  %v1643 = vadd.f32 %v1634, %v1639
  %v1644 = vand.u32 2147483647, %v1641
  %v1645 = vsub.f32 0.0, %v1644
  %v1646 = vmul.f32 %v1645, 1.442695
  %v1647 = vpow.pop %v1646
  %v1648 = vadd.f32 %v1647, 1.0
  %v1649 = vlog2.pop %v1648
  %v1650 = vmul.f32 %v1649, 0.6931472
  %v1651 = vmul.f32 -0.5, %v1647
  %v1652 = vadd.f32 %v1651, 1.0
  %v1653 = vmul.f32 %v1652, %v1647
  %v1654 = vand.u32 2147483647, %v1647
  %vm1655 = vcmp.lt.f32.partialorder %v1654, 0.0004427343
  %v1656 = vsel %vm1655, %v1653, %v1650
  %v1657 = vadd.f32 %v1640, %v1656
  %v1658 = vsel %vm1642, %v1643, %v1657
  %vm1659 = vcmp.le.s32.totalorder %v1570, 4
  %v1660 = vsel %vm1659, 1, 0
  %1661 = vset.pattern.permute.xlu0 0
  %1662 = vperm.xlu0 %1661, %v1660
  %v1663 = vpop.permute.xlu0 %1662
  %vm1664 = vcmp.eq.s32.totalorder %v1663, 1
  %v1666 = vrot.slane %v1658, 2
  %v1668 = vsel %vm1664, 0.0, %v1666
  %v1669 = vadd.f32 %v1093, %v1668
  %1671 = vset.pattern.permute.xlu0 0
  %1672 = vperm.xlu0 %1671, %v1669
  %v1673 = vpop.permute.xlu0 %1672
  %v1675 = vadd.f32 %v1673, %v1540
  %1676 = vset.pattern.permute.xlu0 1
  %1677 = vperm.xlu0 %1676, %v1669
  %v1678 = vpop.permute.xlu0 %1677
  %v1680 = vadd.f32 %v1678, %v1549
  %v1681 = vmax.f32 %v1675, %v1680
  %v1682 = vsub.f32 %v1675, %v1680
  %vm1683 = vcmp.ne.f32.partialorder %v1682, %v1682
  %v1684 = vadd.f32 %v1675, %v1680
  %v1685 = vand.u32 2147483647, %v1682
  %v1686 = vsub.f32 0.0, %v1685
  %v1687 = vmul.f32 %v1686, 1.442695
  %v1688 = vpow.pop %v1687
  %v1689 = vadd.f32 %v1688, 1.0
  %v1690 = vlog2.pop %v1689
  %v1691 = vmul.f32 %v1690, 0.6931472
  %v1692 = vmul.f32 -0.5, %v1688
  %v1693 = vadd.f32 %v1692, 1.0
  %v1694 = vmul.f32 %v1693, %v1688
  %v1695 = vand.u32 2147483647, %v1688
  %vm1696 = vcmp.lt.f32.partialorder %v1695, 0.0004427343
  %v1697 = vsel %vm1696, %v1694, %v1691
  %v1698 = vadd.f32 %v1681, %v1697
  %v1699 = vsel %vm1683, %v1684, %v1698
  %vm1700 = vcmp.le.s32.totalorder %v1570, 3
  %v1701 = vsel %vm1700, 1, 0
  %1702 = vset.pattern.permute.xlu0 0
  %1703 = vperm.xlu0 %1702, %v1701
  %v1704 = vpop.permute.xlu0 %1703
  %vm1705 = vcmp.eq.s32.totalorder %v1704, 1
  %v1706 = vsel %vm1705, 0.0, %v1699
  %v1708 = vrot.slane %v1706, 2
  %v1710 = vadd.f32 %v1088, %v1708
  %1712 = vset.pattern.permute.xlu0 0
  %1713 = vperm.xlu0 %1712, %v1710
  %v1714 = vpop.permute.xlu0 %1713
  %v1716 = vadd.f32 %v1714, %v1540
  %1717 = vset.pattern.permute.xlu0 1
  %1718 = vperm.xlu0 %1717, %v1710
  %v1719 = vpop.permute.xlu0 %1718
  %v1721 = vadd.f32 %v1719, %v1549
  %v1722 = vmax.f32 %v1716, %v1721
  %v1723 = vsub.f32 %v1716, %v1721
  %vm1724 = vcmp.ne.f32.partialorder %v1723, %v1723
  %v1725 = vadd.f32 %v1716, %v1721
  %v1726 = vand.u32 2147483647, %v1723
  %v1727 = vsub.f32 0.0, %v1726
  %v1728 = vmul.f32 %v1727, 1.442695
  %v1729 = vpow.pop %v1728
  %v1730 = vadd.f32 %v1729, 1.0
  %v1731 = vlog2.pop %v1730
  %v1732 = vmul.f32 %v1731, 0.6931472
  %v1733 = vmul.f32 -0.5, %v1729
  %v1734 = vadd.f32 %v1733, 1.0
  %v1735 = vmul.f32 %v1734, %v1729
  %v1736 = vand.u32 2147483647, %v1729
  %vm1737 = vcmp.lt.f32.partialorder %v1736, 0.0004427343
  %v1738 = vsel %vm1737, %v1735, %v1732
  %v1739 = vadd.f32 %v1722, %v1738
  %v1740 = vsel %vm1724, %v1725, %v1739
  %vm1741 = vcmp.le.s32.totalorder %v1570, 2
  %v1742 = vsel %vm1741, 1, 0
  %1743 = vset.pattern.permute.xlu0 0
  %1744 = vperm.xlu0 %1743, %v1742
  %v1745 = vpop.permute.xlu0 %1744
  %vm1746 = vcmp.eq.s32.totalorder %v1745, 1
  %v1748 = vrot.slane %v1740, 6
  %v1750 = vsel %vm1746, 0.0, %v1748
  %v1752 = vrot.slane %v1750, 4
  %v1754 = vadd.f32 %v1088, %v1752
  %1756 = vset.pattern.permute.xlu0 0
  %1757 = vperm.xlu0 %1756, %v1754
  %v1758 = vpop.permute.xlu0 %1757
  %v1760 = vadd.f32 %v1758, %v1540
  %1761 = vset.pattern.permute.xlu0 1
  %1762 = vperm.xlu0 %1761, %v1754
  %v1763 = vpop.permute.xlu0 %1762
  %v1765 = vadd.f32 %v1763, %v1549
  %v1766 = vmax.f32 %v1760, %v1765
  %v1767 = vsub.f32 %v1760, %v1765
  %vm1768 = vcmp.ne.f32.partialorder %v1767, %v1767
  %v1769 = vadd.f32 %v1760, %v1765
  %v1770 = vand.u32 2147483647, %v1767
  %v1771 = vsub.f32 0.0, %v1770
  %v1772 = vmul.f32 %v1771, 1.442695
  %v1773 = vpow.pop %v1772
  %v1774 = vadd.f32 %v1773, 1.0
  %v1775 = vlog2.pop %v1774
  %v1776 = vmul.f32 %v1775, 0.6931472
  %v1777 = vmul.f32 -0.5, %v1773
  %v1778 = vadd.f32 %v1777, 1.0
  %v1779 = vmul.f32 %v1778, %v1773
  %v1780 = vand.u32 2147483647, %v1773
  %vm1781 = vcmp.lt.f32.partialorder %v1780, 0.0004427343
  %v1782 = vsel %vm1781, %v1779, %v1776
  %v1783 = vadd.f32 %v1766, %v1782
  %v1784 = vsel %vm1768, %v1769, %v1783
  %vm1785 = vcmp.le.s32.totalorder %v1570, 1
  %v1786 = vsel %vm1785, 1, 0
  %1787 = vset.pattern.permute.xlu0 0
  %1788 = vperm.xlu0 %1787, %v1786
  %v1789 = vpop.permute.xlu0 %1788
  %vm1790 = vcmp.eq.s32.totalorder %v1789, 1
  %v1792 = vrot.slane %v1784, 4
  %v1794 = vsel %vm1790, 0.0, %v1792
  %v1796 = vrot.slane %v1794, 6
  %v1798 = vadd.f32 %v1088, %v1796
  %1800 = vset.pattern.permute.xlu0 0
  %1801 = vperm.xlu0 %1800, %v1798
  %v1802 = vpop.permute.xlu0 %1801
  %v1804 = vadd.f32 %v1802, %v1540
  %1805 = vset.pattern.permute.xlu0 1
  %1806 = vperm.xlu0 %1805, %v1798
  %v1807 = vpop.permute.xlu0 %1806
  %v1809 = vadd.f32 %v1807, %v1549
  %v1810 = vmax.f32 %v1804, %v1809
  %v1811 = vsub.f32 %v1804, %v1809
  %vm1812 = vcmp.ne.f32.partialorder %v1811, %v1811
  %v1813 = vadd.f32 %v1804, %v1809
  %v1814 = vand.u32 2147483647, %v1811
  %v1815 = vsub.f32 0.0, %v1814
  %v1816 = vmul.f32 %v1815, 1.442695
  %v1817 = vpow.pop %v1816
  %v1818 = vadd.f32 %v1817, 1.0
  %v1819 = vlog2.pop %v1818
  %v1820 = vmul.f32 %v1819, 0.6931472
  %v1821 = vmul.f32 -0.5, %v1817
  %v1822 = vadd.f32 %v1821, 1.0
  %v1823 = vmul.f32 %v1822, %v1817
  %v1824 = vand.u32 2147483647, %v1817
  %vm1825 = vcmp.lt.f32.partialorder %v1824, 0.0004427343
  %v1826 = vsel %vm1825, %v1823, %v1820
  %v1827 = vadd.f32 %v1810, %v1826
  %v1828 = vsel %vm1812, %v1813, %v1827
  %vm1829 = vcmp.le.s32.totalorder %v1570, 0
  %v1830 = vsel %vm1829, 1, 0
  %1831 = vset.pattern.permute.xlu0 0
  %1832 = vperm.xlu0 %1831, %v1830
  %v1833 = vpop.permute.xlu0 %1832
  %vm1834 = vcmp.eq.s32.totalorder %v1833, 1
  %v1836 = vrot.slane %v1828, 2
  %v1838 = vsel %vm1834, 0.0, %v1836
  %v1839 = vadd.f32 %v1088, %v1838
  %1841 = vset.pattern.permute.xlu0 0
  %1842 = vperm.xlu0 %1841, %v1530
  %v1843 = vpop.permute.xlu0 %1842
  %v1845 = vsub.f32 %v1839, %v1843
  %v1846 = vmul.f32 %v1845, 1.442695
  %v1847 = vpow.pop %v1846
  %vm1848 = vcmp.gt.s32.totalorder %v29, 0
  %1850 = vrot.lane.b32.xlu0 %v1847, 127
  %v1851 = vpop.permute.xlu0 %1850
  %v1853 = vsel %vm1848, %v1851, 0.0
  %v1854 = vld [vmem:[#allocation2] sm:$0x3]
  %1856 = vset.pattern.permute.xlu0 0
  %1857 = vperm.xlu0 %1856, %v1853
  %v1858 = vpop.permute.xlu0 %1857
  %v1860 = vmul.f32 %v1858, %v1854
  %v1861 = vadd.f32 %v1860, 0.0
  %v1862 = vand.u32 2147483647, %v1853
  %v1863 = vadd.f32 %v1862, 0.0
  %v1864 = vadd.f32 %v1164, %v1794
  %v1865 = vsub.f32 %v1864, %v1843
  %v1866 = vmul.f32 %v1865, 1.442695
  %v1867 = vpow.pop %v1866
  %vm1868 = vcmp.gt.s32.totalorder %v29, 1
  %1870 = vrot.lane.b32.xlu0 %v1867, 127
  %v1871 = vpop.permute.xlu0 %1870
  %v1873 = vsel %vm1868, %v1871, 0.0
  %v1874 = vld [vmem:[#allocation2 + $0x2] sm:$0x3]
  %1876 = vset.pattern.permute.xlu0 0
  %1877 = vperm.xlu0 %1876, %v1873
  %v1878 = vpop.permute.xlu0 %1877
  %v1880 = vmul.f32 %v1878, %v1874
  %v1881 = vadd.f32 %v1861, %v1880
  %v1882 = vand.u32 2147483647, %v1873
  %v1883 = vadd.f32 %v1863, %v1882
  %v1884 = vadd.f32 %v1221, %v1750
  %v1885 = vsub.f32 %v1884, %v1843
  %v1886 = vmul.f32 %v1885, 1.442695
  %v1887 = vpow.pop %v1886
  %vm1888 = vcmp.gt.s32.totalorder %v29, 2
  %1890 = vrot.lane.b32.xlu0 %v1887, 127
  %v1891 = vpop.permute.xlu0 %1890
  %v1893 = vsel %vm1888, %v1891, 0.0
  %v1894 = vld [vmem:[#allocation2 + $0x4] sm:$0x3]
  %1896 = vset.pattern.permute.xlu0 0
  %1897 = vperm.xlu0 %1896, %v1893
  %v1898 = vpop.permute.xlu0 %1897
  %v1900 = vmul.f32 %v1898, %v1894
  %v1901 = vadd.f32 %v1881, %v1900
  %v1902 = vand.u32 2147483647, %v1893
  %v1903 = vadd.f32 %v1883, %v1902
  %v1904 = vadd.f32 %v1278, %v1706
  %v1905 = vsub.f32 %v1904, %v1843
  %v1906 = vmul.f32 %v1905, 1.442695
  %v1907 = vpow.pop %v1906
  %vm1908 = vcmp.gt.s32.totalorder %v29, 3
  %1910 = vrot.lane.b32.xlu0 %v1907, 127
  %v1911 = vpop.permute.xlu0 %1910
  %v1913 = vsel %vm1908, %v1911, 0.0
  %v1914 = vld [vmem:[#allocation2 + $0x6] sm:$0x3]
  %1916 = vset.pattern.permute.xlu0 0
  %1917 = vperm.xlu0 %1916, %v1913
  %v1918 = vpop.permute.xlu0 %1917
  %v1920 = vmul.f32 %v1918, %v1914
  %v1921 = vadd.f32 %v1901, %v1920
  %v1922 = vand.u32 2147483647, %v1913
  %v1923 = vadd.f32 %v1903, %v1922
  %v1924 = vadd.f32 %v1333, %v1668
  %v1925 = vsub.f32 %v1924, %v1843
  %v1926 = vmul.f32 %v1925, 1.442695
  %v1927 = vpow.pop %v1926
  %vm1928 = vcmp.gt.s32.totalorder %v29, 4
  %1930 = vrot.lane.b32.xlu0 %v1927, 127
  %v1931 = vpop.permute.xlu0 %1930
  %v1933 = vsel %vm1928, %v1931, 0.0
  %v1934 = vld [vmem:[#allocation2 + $0x8] sm:$0x3]
  %1936 = vset.pattern.permute.xlu0 0
  %1937 = vperm.xlu0 %1936, %v1933
  %v1938 = vpop.permute.xlu0 %1937
  %v1940 = vmul.f32 %v1938, %v1934
  %v1941 = vadd.f32 %v1921, %v1940
  %v1942 = vand.u32 2147483647, %v1933
  %v1943 = vadd.f32 %v1923, %v1942
  %v1944 = vadd.f32 %v1391, %v1624
  %v1945 = vsub.f32 %v1944, %v1843
  %v1946 = vmul.f32 %v1945, 1.442695
  %v1947 = vpow.pop %v1946
  %vm1948 = vcmp.gt.s32.totalorder %v29, 5
  %1950 = vrot.lane.b32.xlu0 %v1947, 127
  %v1951 = vpop.permute.xlu0 %1950
  %v1953 = vsel %vm1948, %v1951, 0.0
  %v1954 = vld [vmem:[#allocation2 + $0xa] sm:$0x3]
  %1956 = vset.pattern.permute.xlu0 0
  %1957 = vperm.xlu0 %1956, %v1953
  %v1958 = vpop.permute.xlu0 %1957
  %v1960 = vmul.f32 %v1958, %v1954
  %v1961 = vadd.f32 %v1941, %v1960
  %v1962 = vand.u32 2147483647, %v1953
  %v1963 = vadd.f32 %v1943, %v1962
  %v1964 = vadd.f32 %v1448, %v1580
  %v1965 = vsub.f32 %v1964, %v1843
  %v1966 = vmul.f32 %v1965, 1.442695
  %v1967 = vpow.pop %v1966
  %vm1968 = vcmp.gt.s32.totalorder %v29, 6
  %1970 = vrot.lane.b32.xlu0 %v1967, 127
  %v1971 = vpop.permute.xlu0 %1970
  %v1973 = vsel %vm1968, %v1971, 0.0
  %v1974 = vld [vmem:[#allocation2 + $0xc] sm:$0x3]
  %1976 = vset.pattern.permute.xlu0 0
  %1977 = vperm.xlu0 %1976, %v1973
  %v1978 = vpop.permute.xlu0 %1977
  %v1980 = vmul.f32 %v1978, %v1974
  %v1981 = vadd.f32 %v1961, %v1980
  %v1982 = vand.u32 2147483647, %v1973
  %v1983 = vadd.f32 %v1963, %v1982
  %v1984 = vadd.f32 %v1505, 0.0
  %v1985 = vsub.f32 %v1984, %v1843
  %v1986 = vmul.f32 %v1985, 1.442695
  %v1987 = vpow.pop %v1986
  %vm1988 = vcmp.gt.s32.totalorder %v29, 7
  %1990 = vrot.lane.b32.xlu0 %v1987, 127
  %v1991 = vpop.permute.xlu0 %1990
  %v1993 = vsel %vm1988, %v1991, 0.0
  %v1994 = vld [vmem:[#allocation2 + $0xe] sm:$0x3]
  %1996 = vset.pattern.permute.xlu0 0
  %1997 = vperm.xlu0 %1996, %v1993
  %v1998 = vpop.permute.xlu0 %1997
  %v2000 = vmul.f32 %v1998, %v1994
  %v2001 = vadd.f32 %v1981, %v2000
  %v2002 = vand.u32 2147483647, %v1993
  %v2003 = vadd.f32 %v1983, %v2002
  %v2004 = vld [vmem:[%s6] sm:$0xff]
  %v2005 = vld [vmem:[%s6 + $0x8] sm:$0xff]
  %v2006 = vld [vmem:[%s6 + $0x10] sm:$0xff]
  %v2007 = vld [vmem:[%s6 + $0x18] sm:$0xff]
  %v2008 = vld [vmem:[%s7 + $0x5] sm:$0x1]
  %v2009 = vlaneseq
  %v2010 = vshrl.u32 %v2009, 7
  %v2011 = vsub.s32 0, %v2010
  %v2012 = vrot.slane %v2008, %v2011
  %v2014 = vsel %vm43, %v2001, 0
  %2016 = vmatprep.subr.mxu0 0.0
  %2017 = vmatpush1.msra.mxu0 %v2004
  %2018 = vmatprep.subr.mxu0 0.0
  %2019 = vmatpush1.msra.mxu0 %v2005
  %2020 = vmatprep.subr.mxu0 0.0
  %2021 = vmatpush1.msra.mxu0 %v2006
  %2022 = vmatprep.subr.mxu0 0.0
  %2023 = vmatpush1.msra.mxu0 %v2007
  %2024 = vmatprep.subr.mxu0 0.0
  %2025 = vmatpush1.msra.mxu0 0.0
  %2026 = vmatprep.subr.mxu0 0.0
  %2027 = vmatpush1.msra.mxu0 0.0
  %2028 = vmatprep.subr.mxu0 0.0
  %2029 = vmatpush1.msra.mxu0 0.0
  %2030 = vmatprep.subr.mxu0 0.0
  %2031 = vmatpush1.msra.mxu0 0.0
  %2032 = vmatprep.subr.mxu0 0.0
  %2033 = vmatpush1.msra.mxu0 0.0
  %2034 = vmatprep.subr.mxu0 0.0
  %2035 = vmatpush1.msra.mxu0 0.0
  %2036 = vmatprep.subr.mxu0 0.0
  %2037 = vmatpush1.msra.mxu0 0.0
  %2038 = vmatprep.subr.mxu0 0.0
  %2039 = vmatpush1.msra.mxu0 0.0
  %2040 = vmatprep.subr.mxu0 0.0
  %2041 = vmatpush1.msra.mxu0 0.0
  %2042 = vmatprep.subr.mxu0 0.0
  %2043 = vmatpush1.msra.mxu0 0.0
  %2044 = vmatprep.subr.mxu0 0.0
  %2045 = vmatpush1.msra.mxu0 0.0
  %2046 = vmatprep.subr.mxu0 0.0
  %2047 = vmatpush1.msra.mxu0 0.0
  %2048 = vmatprep.subr.mxu0 0.0
  %2049 = vmatpush1.msra.mxu0 0.0
  %2050 = vmatprep.subr.mxu0 0.0
  %2051 = vmatpush1.msra.mxu0 0.0
  %2052 = vmatprep.subr.mxu0 0.0
  %2053 = vmatpush1.msra.mxu0 0.0
  %2054 = vmatprep.subr.mxu0 0.0
  %2055 = vmatpush1.msra.mxu0 0.0
  %2056 = vmatprep.subr.mxu0 0.0
  %2057 = vmatpush1.msra.mxu0 0.0
  %2058 = vmatprep.subr.mxu0 0.0
  %2059 = vmatpush1.msra.mxu0 0.0
  %2060 = vmatprep.subr.mxu0 0.0
  %2061 = vmatpush1.msra.mxu0 0.0
  %2062 = vmatprep.subr.mxu0 0.0
  %2063 = vmatpush1.msra.mxu0 0.0
  %2064 = vmatprep.subr.mxu0 0.0
  %2065 = vmatpush1.msra.mxu0 0.0
  %2066 = vmatprep.subr.mxu0 0.0
  %2067 = vmatpush1.msra.mxu0 0.0
  %2068 = vmatprep.subr.mxu0 0.0
  %2069 = vmatpush1.msra.mxu0 0.0
  %2070 = vmatprep.subr.mxu0 0.0
  %2071 = vmatpush1.msra.mxu0 0.0
  %2072 = vmatprep.subr.mxu0 0.0
  %2073 = vmatpush1.msra.mxu0 0.0
  %2074 = vmatprep.subr.mxu0 0.0
  %2075 = vmatpush1.msra.mxu0 0.0
  %2076 = vmatprep.subr.mxu0 0.0
  %2077 = vmatpush1.msra.mxu0 0.0
  %2078 = vmatprep.subr.mxu0 0.0
  %2079 = vmatpush1.msra.mxu0 0.0
  %2080 = vmatprep.mubr.f32.mxu0 0.0
  %2081 = vmatmul.mubr.f32.gmra.mrb[0].mxu0 %v2014
  %v2082 = vpop.f32.mrb[0].mxu0
  %v2083 = vadd.f32 %v2012, %v2082
  %v2084 = vpop.f32.mrb[0].mxu0
  %2085 = vdwg.mxu0
  %vm2086 = vcmask 17408
  %v2087 = vsel %vm2086, %v2083, -inf
  %2088 = vmax.xlane.f32.xlu0 %v2087
  %v2089 = vpop.xlane.xlu0 %2088
  %v2090 = vsub.f32 %v2083, %v2089
  %v2091 = vmul.f32 %v2090, 1.442695
  %v2092 = vpow.pop %v2091
  %v2093 = vsel %vm2086, %v2092, 0.0
  %2094 = vadd.xlane.f32.xlu0 %v2093
  %v2095 = vpop.xlane.xlu0 %2094
  %v2096 = vlog2.pop %v2095
  %v2097 = vmul.f32 %v2096, 0.6931472
  %v2098 = vadd.f32 %v2089, %v2097
  %v2099 = vsub.f32 %v2083, %v2098
  %v2100 = vld [vmem:[%s1] sm:$0x3]
  %v2101 = vmul.f32 %v2100, %v2099
  %v2102 = vsel %vm2086, %v2101, 0.0
  %2103 = vadd.xlane.f32.xlu0 %v2102
  %v2104 = vpop.xlane.xlu0 %2103
  %vm2105 = vcmask 1041408
  %v2106 = vsel %vm2105, %v2104, 0.0
  %v2107 = vrot.slane %v2106, 4
  %v2108 = vadd.f32 %v2106, %v2107
  %v2109 = vrot.slane %v2108, 2
  %v2110 = vadd.f32 %v2108, %v2109
  %v2111 = vrot.slane %v2110, 1
  %v2112 = vadd.f32 %v2110, %v2111
  %v2113 = vsub.f32 0.0, %v2112
  %v2114 = vrcp.pop 2.0
  %v2115 = vmul.f32 %v2113, %v2114
  %v2116 = vsub.f32 %v1097, %v1096
  %v2117 = vmax.f32 %v2116, 0.0
  %v2118 = vsub.f32 %v1096, %v1097
  %v2119 = vmax.f32 %v2118, 0.0
  %2121 = vrot.lane.b32.xlu0 %v2119, 127
  %v2122 = vpop.permute.xlu0 %2121
  %v2124 = vadd.f32 %v2117, %v2122
  %vm2125 = vcmask 1024
  %v2126 = vsel %vm2125, %v2003, 0.0
  %v2127 = vrot.slane %v2126, 4
  %v2128 = vadd.f32 %v2126, %v2127
  %v2129 = vrot.slane %v2128, 2
  %v2130 = vadd.f32 %v2128, %v2129
  %v2131 = vrot.slane %v2130, 1
  %v2132 = vadd.f32 %v2130, %v2131
  %v2133 = vmul.f32 %v2132, %v2114
  %v2134 = vmul.f32 %v2124, %v2114
  %v2135 = vadd.f32 %v2134, %v2133
  %vm2136 = vcmask 0
  %2137 = vst.msk [vmem:[%s8] sm:$0x1] %vm2136, %v2115
  %2139 = vrot.lane.b32.xlu0 %v2135, 1
  %v2140 = vpop.permute.xlu0 %2139
  %vm2142 = vcmask 8200
  %2143 = vst.msk [vmem:[%s8] sm:$0x1] %vm2142, %v2140
  // Predicated region
  $region34: #{srnn_forward.1} parent=0 // pred_check
    _
  $region35: #{srnn_forward.1} parent=0 // pred_check_branch
    %2145 = sbr.rel (0) target = $region37
  $region36: #{srnn_forward.1} parent=0 // pred_region
    _
  $region37: #{srnn_forward.1} parent=0 // pred_fallthru
    _
  // Predicated region
  $region38: #{srnn_forward.1} parent=0 // pred_check
    _
  $region39: #{srnn_forward.1} parent=0 // pred_check_branch
    %2147 = sbr.rel (0) target = $region41
  $region40: #{srnn_forward.1} parent=0 // pred_region
    _
  $region41: #{srnn_forward.1} parent=0 // pred_fallthru
    _

</llo_original>
